<compile_context>
chip_gen: v6e
topology: v6e:2x2x1
jax: 0.10.0
libtpu: 0.0.40
codegen_flags: <defaults>
</compile_context>

<pallas_src>
import functools

import jax
import jax.numpy as jnp
from jax.experimental import pallas as pl
from jax.experimental.pallas import tpu as pltpu

EPS = 1e-5  # RevIN eps


def _ceil_div(a, b):
    return -(-a // b)


def _round_up(x, m):
    return _ceil_div(x, m) * m


def _vmem_limit_bytes():
    """~3/4 of physical VMEM (128 MiB v5e/v6e, 64 MiB v7x); conservative fallback."""
    try:
        cap = pltpu.get_tpu_info().vmem_capacity_bytes
    except Exception:
        cap = 64 * 1024 * 1024
    return max(32 * 1024 * 1024, min(int(cap * 3 // 4), 100 * 1024 * 1024))


def tsmixer_kernel(x_ref, aw_ref, ab_ref, awi_ref,
                   w1_ref, b1_ref, w2_ref, b2_ref,
                   w3_ref, b3_ref, w4_ref, b4_ref,
                   wf_ref, bf_ref,
                   o_ref, *, n_block):
    """One batch tile (TB elements) per grid step.

    Layouts (time on lanes so temporal mixing and the head need no transposes):
      x_ref : [TB, N, L]          input tile (variables on sublanes, time on lanes)
      aw/ab : [N, 1]              RevIN affine weight / bias;  awi = 1/(aw + eps^2)
      w1    : [n_block, L, ff]    temporal Linear(L->ff) weight^T   b1: [n_block, 1, ff]
      w2    : [n_block, ff, L]    temporal Linear(ff->L) weight^T   b2: [n_block, 1, L]
      w3    : [n_block, N, ff]    channel  Linear(N->ff) weight^T   b3: [n_block, 1, ff]
      w4    : [n_block, ff, N]    channel  Linear(ff->N) weight^T   b4: [n_block, 1, N]
      wf    : [L, P]              head Linear(L->P) weight^T        bf: [1, P]
      o_ref : [TB*N, P]           output tile in natural matmul row order (b, n)
    """
    TB, N, L = x_ref.shape

    x = x_ref[...].astype(jnp.float32)                                 # [TB, N, L]

    # ---- RevIN 'norm': stats over time (lane axis), per (batch, variable) ----
    mean = jnp.mean(x, axis=2, keepdims=True)                          # [TB, N, 1]
    var = jnp.mean((x - mean) ** 2, axis=2, keepdims=True)             # biased variance
    var_eps = var + EPS
    inv_std = jax.lax.rsqrt(var_eps)                                   # EUP
    stdev = var_eps * inv_std                                          # sqrt(var_eps) w/o 2nd sqrt
    aw = aw_ref[...].astype(jnp.float32).reshape(1, N, 1)
    ab = ab_ref[...].astype(jnp.float32).reshape(1, N, 1)
    awi = awi_ref[...].astype(jnp.float32).reshape(1, N, 1)            # 1/(aw + eps^2)
    x = (x - mean) * inv_std * aw + ab

    # ---- n_block residual mixer blocks (weights pre-transposed; no weight .T) ----
    for i in range(n_block):
        # temporal mixing: contract over L, rows = batch*variables (free reshape)
        x2 = x.reshape(TB * N, L)
        h = jnp.maximum(
            jnp.dot(x2.astype(jnp.bfloat16), w1_ref[i],
                    preferred_element_type=jnp.float32) + b1_ref[i], 0.0)
        t = jnp.dot(h.astype(jnp.bfloat16), w2_ref[i],
                    preferred_element_type=jnp.float32) + b2_ref[i]    # [TB*N, L]
        x = x + t.reshape(TB, N, L)                                    # residual

        # channel mixing: contract over N. The two minor-dim swaps below are the
        # architecturally required time<->variable layout change (2 per block).
        xc = jnp.swapaxes(x, 1, 2)                                     # [TB, L, N]
        xc2 = xc.reshape(TB * L, N)                                    # free reshape
        h2 = jnp.maximum(
            jnp.dot(xc2.astype(jnp.bfloat16), w3_ref[i],
                    preferred_element_type=jnp.float32) + b3_ref[i], 0.0)
        c = jnp.dot(h2.astype(jnp.bfloat16), w4_ref[i],
                    preferred_element_type=jnp.float32) + b4_ref[i]    # [TB*L, N]
        x = jnp.swapaxes(xc + c.reshape(TB, L, N), 1, 2)               # residual -> [TB, N, L]

    # ---- head Linear(L -> P) + fused RevIN denorm, all in (b, n)-row order ----
    y = jnp.dot(x.reshape(TB * N, L).astype(jnp.bfloat16), wf_ref[...],
                preferred_element_type=jnp.float32) + bf_ref[...]      # [TB*N, P]
    s = awi * stdev                                                    # [TB, N, 1]
    scale = s.reshape(TB * N, 1)                                       # free reshapes
    offset = (mean - ab * s).reshape(TB * N, 1)
    o_ref[...] = (y * scale + offset).astype(o_ref.dtype)              # dense, no relayout


def tsmixer_forward(history_data, params, *, pred_len, n_block, batch_tile=128):
    """history_data: [B, L, N, C] float32 -> returns [B, pred_len, N, 1]."""
    B, L, N, _ = history_data.shape
    # time-on-lanes layout for the kernel: [B, N, L]
    x = jnp.transpose(history_data[:, :, :, 0].astype(jnp.float32), (0, 2, 1))

    # ---- batch tile selection: multiple of 8, >=2 grid steps when B allows ----
    half = _ceil_div(B, 2)
    tb = min(_round_up(batch_tile, 8), max(8, (half // 8) * 8))
    n_steps = _ceil_div(B, tb)
    Bp = n_steps * tb
    if Bp != B:
        x = jnp.pad(x, ((0, Bp - B), (0, 0), (0, 0)))

    # denorm reciprocal recomputed from the *current* aw (never stale)
    awi = 1.0 / (params["aw"].astype(jnp.float32) + EPS * EPS)         # [N, 1]

    def rep(arr):
        nd = arr.ndim
        return pl.BlockSpec(arr.shape, lambda b, nd=nd: (0,) * nd)

    kernel = functools.partial(tsmixer_kernel, n_block=n_block)

    out = pl.pallas_call(
        kernel,
        out_shape=jax.ShapeDtypeStruct((Bp * N, pred_len), jnp.float32),
        grid=(n_steps,),
        in_specs=[
            pl.BlockSpec((tb, N, L), lambda b: (b, 0, 0)),             # x tile
            rep(params["aw"]), rep(params["ab"]), rep(awi),
            rep(params["w1t"]), rep(params["b1"]),
            rep(params["w2t"]), rep(params["b2"]),
            rep(params["w3t"]), rep(params["b3"]),
            rep(params["w4t"]), rep(params["b4"]),
            rep(params["wft"]), rep(params["bf"]),
        ],
        out_specs=pl.BlockSpec((tb * N, pred_len), lambda b: (b, 0)),
        compiler_params=pltpu.CompilerParams(
            dimension_semantics=("parallel",),
            vmem_limit_bytes=_vmem_limit_bytes(),
        ),
    )(x,
      params["aw"], params["ab"], awi,
      params["w1t"], params["b1"], params["w2t"], params["b2"],
      params["w3t"], params["b3"], params["w4t"], params["b4"],
      params["wft"], params["bf"])

    # [Bp*N, P] -> [B, N, P] -> [B, P, N, 1]  (cheap XLA reshuffle outside the kernel)
    y = out.reshape(Bp, N, pred_len)[:B]
    return jnp.transpose(y, (0, 2, 1))[..., None]


def tsmixer_reference(history_data, params, *, pred_len, n_block):
    """Pure-JAX (f32) reference of the PyTorch forward, consuming the same params."""
    x = history_data[..., 0].astype(jnp.float32)                       # [B, L, N]
    mean = jnp.mean(x, axis=1, keepdims=True)
    var = jnp.mean((x - mean) ** 2, axis=1, keepdims=True)
    stdev = jnp.sqrt(var + EPS)
    aw = params["aw"].astype(jnp.float32).reshape(1, 1, -1)
    ab = params["ab"].astype(jnp.float32).reshape(1, 1, -1)
    x = (x - mean) / stdev * aw + ab
    for i in range(n_block):
        w1t = params["w1t"][i].astype(jnp.float32)                     # [L, ff]
        w2t = params["w2t"][i].astype(jnp.float32)                     # [ff, L]
        w3t = params["w3t"][i].astype(jnp.float32)                     # [N, ff]
        w4t = params["w4t"][i].astype(jnp.float32)                     # [ff, N]
        xt = jnp.swapaxes(x, 1, 2)                                     # [B, N, L]
        h = jax.nn.relu(jnp.einsum("bnl,lf->bnf", xt, w1t) + params["b1"][i])
        t = jnp.einsum("bnf,fl->bnl", h, w2t) + params["b2"][i]
        x = x + jnp.swapaxes(t, 1, 2)
        h2 = jax.nn.relu(jnp.einsum("bln,nf->blf", x, w3t) + params["b3"][i])
        c = jnp.einsum("blf,fn->bln", h2, w4t) + params["b4"][i]
        x = x + c
    wft = params["wft"].astype(jnp.float32)                            # [L, P]
    y = jnp.einsum("bnl,lp->bnp", jnp.swapaxes(x, 1, 2), wft) + params["bf"]
    y = jnp.swapaxes(y, 1, 2)                                          # [B, P, N]
    y = (y - ab) / (aw + EPS * EPS)
    y = y * stdev + mean
    return y[..., None]


def init_params(key, *, input_len, vare_num, pred_len, n_block, ff_dim):
    ks = jax.random.split(key, 10)
    s = 0.1
    wdt = jnp.bfloat16  # MXU-native weight storage
    return {
        # RevIN affine params, stored [N, 1] so the kernel needs no relayout
        "aw": jnp.ones((vare_num, 1), jnp.float32),
        "ab": jnp.zeros((vare_num, 1), jnp.float32),
        # temporal MLP, stored as W^T so the kernel never transposes weights
        "w1t": (s * jax.random.normal(ks[0], (n_block, input_len, ff_dim))).astype(wdt),
        "b1":  s * jax.random.normal(ks[1], (n_block, 1, ff_dim), jnp.float32),
        "w2t": (s * jax.random.normal(ks[2], (n_block, ff_dim, input_len))).astype(wdt),
        "b2":  s * jax.random.normal(ks[3], (n_block, 1, input_len), jnp.float32),
        # channel MLP
        "w3t": (s * jax.random.normal(ks[4], (n_block, vare_num, ff_dim))).astype(wdt),
        "b3":  s * jax.random.normal(ks[5], (n_block, 1, ff_dim), jnp.float32),
        "w4t": (s * jax.random.normal(ks[6], (n_block, ff_dim, vare_num))).astype(wdt),
        "b4":  s * jax.random.normal(ks[7], (n_block, 1, vare_num), jnp.float32),
        # head Linear(input_len -> pred_len), stored as W^T
        "wft": (s * jax.random.normal(ks[8], (input_len, pred_len))).astype(wdt),
        "bf":  s * jax.random.normal(ks[9], (1, pred_len), jnp.float32),
    }


if __name__ == "__main__":
    # Small, module-consistent shapes; B=13 exercises batch padding + a 2-step grid.
    B, input_len, vare_num, C = 13, 16, 8, 1
    pred_len, n_block, ff_dim = 12, 2, 32

    key = jax.random.PRNGKey(0)
    k_data, k_param = jax.random.split(key)

    history_data = jax.random.normal(k_data, (B, input_len, vare_num, C), jnp.float32)
    params = init_params(k_param, input_len=input_len, vare_num=vare_num,
                         pred_len=pred_len, n_block=n_block, ff_dim=ff_dim)

    fwd = jax.jit(functools.partial(tsmixer_forward, pred_len=pred_len, n_block=n_block))
    out = fwd(history_data, params)
    jax.block_until_ready(out)

    assert out.shape == (B, pred_len, vare_num, 1), out.shape
    assert bool(jnp.all(jnp.isfinite(out)))

    # validate bf16-matmul kernel against the f32 reference
    ref = tsmixer_reference(history_data, params, pred_len=pred_len, n_block=n_block)
    max_err = float(jnp.max(jnp.abs(out - ref)))
    assert jnp.allclose(out, ref, atol=5e-2, rtol=5e-2), max_err

    print("KERNEL_OK")
</pallas_src>

<mosaic_0001>
module attributes {stable_mosaic.version = 11 : i64} {
  func.func @tsmixer_kernel(%arg0: i32, %arg1: memref<8x8x16xf32, #tpu.memory_space<vmem>>, %arg2: memref<8x1xf32, #tpu.memory_space<vmem>>, %arg3: memref<8x1xf32, #tpu.memory_space<vmem>>, %arg4: memref<8x1xf32, #tpu.memory_space<vmem>>, %arg5: memref<2x16x32xbf16, #tpu.memory_space<vmem>>, %arg6: memref<2x1x32xf32, #tpu.memory_space<vmem>>, %arg7: memref<2x32x16xbf16, #tpu.memory_space<vmem>>, %arg8: memref<2x1x16xf32, #tpu.memory_space<vmem>>, %arg9: memref<2x8x32xbf16, #tpu.memory_space<vmem>>, %arg10: memref<2x1x32xf32, #tpu.memory_space<vmem>>, %arg11: memref<2x32x8xbf16, #tpu.memory_space<vmem>>, %arg12: memref<2x1x8xf32, #tpu.memory_space<vmem>>, %arg13: memref<16x12xbf16, #tpu.memory_space<vmem>>, %arg14: memref<1x12xf32, #tpu.memory_space<vmem>>, %arg15: memref<64x12xf32, #tpu.memory_space<vmem>>) attributes {dimension_semantics = [#tpu.dimension_semantics<parallel>], iteration_bounds = array<i64: 2>, scalar_prefetch = 0 : i64, scratch_operands = 0 : i64, tpu.core_type = #tpu.core_type<tc>, window_params = [{transform_indices = @transform_0, window_bounds = array<i64: 8, 8, 16>}, {pipeline_mode = #tpu.pipeline_mode<synchronous>, transform_indices = @transform_1, window_bounds = array<i64: 8, 1>}, {pipeline_mode = #tpu.pipeline_mode<synchronous>, transform_indices = @transform_2, window_bounds = array<i64: 8, 1>}, {pipeline_mode = #tpu.pipeline_mode<synchronous>, transform_indices = @transform_3, window_bounds = array<i64: 8, 1>}, {pipeline_mode = #tpu.pipeline_mode<synchronous>, transform_indices = @transform_4, window_bounds = array<i64: 2, 16, 32>}, {pipeline_mode = #tpu.pipeline_mode<synchronous>, transform_indices = @transform_5, window_bounds = array<i64: 2, 1, 32>}, {pipeline_mode = #tpu.pipeline_mode<synchronous>, transform_indices = @transform_6, window_bounds = array<i64: 2, 32, 16>}, {pipeline_mode = #tpu.pipeline_mode<synchronous>, transform_indices = @transform_7, window_bounds = array<i64: 2, 1, 16>}, {pipeline_mode = #tpu.pipeline_mode<synchronous>, transform_indices = @transform_8, window_bounds = array<i64: 2, 8, 32>}, {pipeline_mode = #tpu.pipeline_mode<synchronous>, transform_indices = @transform_9, window_bounds = array<i64: 2, 1, 32>}, {pipeline_mode = #tpu.pipeline_mode<synchronous>, transform_indices = @transform_10, window_bounds = array<i64: 2, 32, 8>}, {pipeline_mode = #tpu.pipeline_mode<synchronous>, transform_indices = @transform_11, window_bounds = array<i64: 2, 1, 8>}, {pipeline_mode = #tpu.pipeline_mode<synchronous>, transform_indices = @transform_12, window_bounds = array<i64: 16, 12>}, {pipeline_mode = #tpu.pipeline_mode<synchronous>, transform_indices = @transform_13, window_bounds = array<i64: 1, 12>}, {transform_indices = @transform_14, window_bounds = array<i64: 64, 12>}]} {
    %c0 = arith.constant 0 : index
    %c0_0 = arith.constant 0 : index
    %c0_1 = arith.constant 0 : index
    %0 = vector.load %arg1[%c0, %c0_0, %c0_1] : memref<8x8x16xf32, #tpu.memory_space<vmem>>, vector<8x8x16xf32>
    %cst = arith.constant dense<0.000000e+00> : vector<8x8xf32>
    %1 = vector.multi_reduction <add>, %0, %cst [2] : vector<8x8x16xf32> to vector<8x8xf32>
    %2 = vector.shape_cast %1 : vector<8x8xf32> to vector<8x8x1xf32>
    %cst_2 = arith.constant 1.600000e+01 : f32
    %3 = vector.broadcast %cst_2 : f32 to vector<8x8x1xf32>
    %4 = arith.divf %2, %3 : vector<8x8x1xf32>
    %5 = vector.broadcast %4 : vector<8x8x1xf32> to vector<8x8x16xf32>
    %6 = arith.subf %0, %5 : vector<8x8x16xf32>
    %7 = arith.mulf %6, %6 : vector<8x8x16xf32>
    %cst_3 = arith.constant dense<0.000000e+00> : vector<8x8xf32>
    %8 = vector.multi_reduction <add>, %7, %cst_3 [2] : vector<8x8x16xf32> to vector<8x8xf32>
    %9 = vector.shape_cast %8 : vector<8x8xf32> to vector<8x8x1xf32>
    %cst_4 = arith.constant 1.600000e+01 : f32
    %10 = vector.broadcast %cst_4 : f32 to vector<8x8x1xf32>
    %11 = arith.divf %9, %10 : vector<8x8x1xf32>
    %cst_5 = arith.constant 9.99999974E-6 : f32
    %12 = vector.broadcast %cst_5 : f32 to vector<8x8x1xf32>
    %13 = arith.addf %11, %12 : vector<8x8x1xf32>
    %14 = math.rsqrt %13 : vector<8x8x1xf32>
    %15 = arith.mulf %13, %14 : vector<8x8x1xf32>
    %c0_6 = arith.constant 0 : index
    %c0_7 = arith.constant 0 : index
    %16 = vector.load %arg2[%c0_6, %c0_7] : memref<8x1xf32, #tpu.memory_space<vmem>>, vector<8x1xf32>
    %17 = vector.shape_cast %16 : vector<8x1xf32> to vector<1x8x1xf32>
    %c0_8 = arith.constant 0 : index
    %c0_9 = arith.constant 0 : index
    %18 = vector.load %arg3[%c0_8, %c0_9] : memref<8x1xf32, #tpu.memory_space<vmem>>, vector<8x1xf32>
    %19 = vector.shape_cast %18 : vector<8x1xf32> to vector<1x8x1xf32>
    %c0_10 = arith.constant 0 : index
    %c0_11 = arith.constant 0 : index
    %20 = vector.load %arg4[%c0_10, %c0_11] : memref<8x1xf32, #tpu.memory_space<vmem>>, vector<8x1xf32>
    %21 = vector.shape_cast %20 : vector<8x1xf32> to vector<1x8x1xf32>
    %22 = vector.broadcast %4 : vector<8x8x1xf32> to vector<8x8x16xf32>
    %23 = arith.subf %0, %22 : vector<8x8x16xf32>
    %24 = vector.broadcast %14 : vector<8x8x1xf32> to vector<8x8x16xf32>
    %25 = arith.mulf %23, %24 : vector<8x8x16xf32>
    %26 = vector.broadcast %17 : vector<1x8x1xf32> to vector<8x8x16xf32>
    %27 = arith.mulf %25, %26 : vector<8x8x16xf32>
    %28 = vector.broadcast %19 : vector<1x8x1xf32> to vector<8x8x16xf32>
    %29 = arith.addf %27, %28 : vector<8x8x16xf32>
    %30 = vector.shape_cast %29 : vector<8x8x16xf32> to vector<64x16xf32>
    %31 = arith.truncf %30 : vector<64x16xf32> to vector<64x16xbf16>
    %c0_12 = arith.constant 0 : index
    %c0_13 = arith.constant 0 : index
    %c0_14 = arith.constant 0 : index
    %32 = vector.load %arg5[%c0_12, %c0_13, %c0_14] : memref<2x16x32xbf16, #tpu.memory_space<vmem>>, vector<1x16x32xbf16>
    %33 = vector.shape_cast %32 : vector<1x16x32xbf16> to vector<16x32xbf16>
    %cst_15 = arith.constant dense<0.000000e+00> : vector<64x32xf32>
    %34 = tpu.matmul %31, %33, %cst_15 {dimension_numbers = #tpu.dot_dimension_numbers<[1], [0], [0], [1], [0, 0, 1, 1], [], []>} : vector<64x16xbf16>, vector<16x32xbf16>, vector<64x32xf32> -> vector<64x32xf32>
    %c0_16 = arith.constant 0 : index
    %c0_17 = arith.constant 0 : index
    %c0_18 = arith.constant 0 : index
    %35 = vector.load %arg6[%c0_16, %c0_17, %c0_18] : memref<2x1x32xf32, #tpu.memory_space<vmem>>, vector<1x1x32xf32>
    %36 = vector.shape_cast %35 : vector<1x1x32xf32> to vector<1x32xf32>
    %37 = vector.broadcast %36 : vector<1x32xf32> to vector<64x32xf32>
    %38 = arith.addf %34, %37 : vector<64x32xf32>
    %cst_19 = arith.constant 0.000000e+00 : f32
    %39 = vector.broadcast %cst_19 : f32 to vector<64x32xf32>
    %40 = arith.maximumf %38, %39 : vector<64x32xf32>
    %41 = arith.truncf %40 : vector<64x32xf32> to vector<64x32xbf16>
    %c0_20 = arith.constant 0 : index
    %c0_21 = arith.constant 0 : index
    %c0_22 = arith.constant 0 : index
    %42 = vector.load %arg7[%c0_20, %c0_21, %c0_22] : memref<2x32x16xbf16, #tpu.memory_space<vmem>>, vector<1x32x16xbf16>
    %43 = vector.shape_cast %42 : vector<1x32x16xbf16> to vector<32x16xbf16>
    %cst_23 = arith.constant dense<0.000000e+00> : vector<64x16xf32>
    %44 = tpu.matmul %41, %43, %cst_23 {dimension_numbers = #tpu.dot_dimension_numbers<[1], [0], [0], [1], [0, 0, 1, 1], [], []>} : vector<64x32xbf16>, vector<32x16xbf16>, vector<64x16xf32> -> vector<64x16xf32>
    %c0_24 = arith.constant 0 : index
    %c0_25 = arith.constant 0 : index
    %c0_26 = arith.constant 0 : index
    %45 = vector.load %arg8[%c0_24, %c0_25, %c0_26] : memref<2x1x16xf32, #tpu.memory_space<vmem>>, vector<1x1x16xf32>
    %46 = vector.shape_cast %45 : vector<1x1x16xf32> to vector<1x16xf32>
    %47 = vector.broadcast %46 : vector<1x16xf32> to vector<64x16xf32>
    %48 = arith.addf %44, %47 : vector<64x16xf32>
    %49 = vector.shape_cast %48 : vector<64x16xf32> to vector<8x8x16xf32>
    %50 = arith.addf %29, %49 : vector<8x8x16xf32>
    %51 = tpu.transpose %50, [0, 2, 1] : vector<8x8x16xf32> -> vector<8x16x8xf32>
    %52 = vector.shape_cast %51 : vector<8x16x8xf32> to vector<128x8xf32>
    %53 = arith.truncf %52 : vector<128x8xf32> to vector<128x8xbf16>
    %c0_27 = arith.constant 0 : index
    %c0_28 = arith.constant 0 : index
    %c0_29 = arith.constant 0 : index
    %54 = vector.load %arg9[%c0_27, %c0_28, %c0_29] : memref<2x8x32xbf16, #tpu.memory_space<vmem>>, vector<1x8x32xbf16>
    %55 = vector.shape_cast %54 : vector<1x8x32xbf16> to vector<8x32xbf16>
    %cst_30 = arith.constant dense<0.000000e+00> : vector<128x32xf32>
    %56 = tpu.matmul %53, %55, %cst_30 {dimension_numbers = #tpu.dot_dimension_numbers<[1], [0], [0], [1], [0, 0, 1, 1], [], []>} : vector<128x8xbf16>, vector<8x32xbf16>, vector<128x32xf32> -> vector<128x32xf32>
    %c0_31 = arith.constant 0 : index
    %c0_32 = arith.constant 0 : index
    %c0_33 = arith.constant 0 : index
    %57 = vector.load %arg10[%c0_31, %c0_32, %c0_33] : memref<2x1x32xf32, #tpu.memory_space<vmem>>, vector<1x1x32xf32>
    %58 = vector.shape_cast %57 : vector<1x1x32xf32> to vector<1x32xf32>
    %59 = vector.broadcast %58 : vector<1x32xf32> to vector<128x32xf32>
    %60 = arith.addf %56, %59 : vector<128x32xf32>
    %cst_34 = arith.constant 0.000000e+00 : f32
    %61 = vector.broadcast %cst_34 : f32 to vector<128x32xf32>
    %62 = arith.maximumf %60, %61 : vector<128x32xf32>
    %63 = arith.truncf %62 : vector<128x32xf32> to vector<128x32xbf16>
    %c0_35 = arith.constant 0 : index
    %c0_36 = arith.constant 0 : index
    %c0_37 = arith.constant 0 : index
    %64 = vector.load %arg11[%c0_35, %c0_36, %c0_37] : memref<2x32x8xbf16, #tpu.memory_space<vmem>>, vector<1x32x8xbf16>
    %65 = vector.shape_cast %64 : vector<1x32x8xbf16> to vector<32x8xbf16>
    %cst_38 = arith.constant dense<0.000000e+00> : vector<128x8xf32>
    %66 = tpu.matmul %63, %65, %cst_38 {dimension_numbers = #tpu.dot_dimension_numbers<[1], [0], [0], [1], [0, 0, 1, 1], [], []>} : vector<128x32xbf16>, vector<32x8xbf16>, vector<128x8xf32> -> vector<128x8xf32>
    %c0_39 = arith.constant 0 : index
    %c0_40 = arith.constant 0 : index
    %c0_41 = arith.constant 0 : index
    %67 = vector.load %arg12[%c0_39, %c0_40, %c0_41] : memref<2x1x8xf32, #tpu.memory_space<vmem>>, vector<1x1x8xf32>
    %68 = vector.shape_cast %67 : vector<1x1x8xf32> to vector<1x8xf32>
    %69 = vector.broadcast %68 : vector<1x8xf32> to vector<128x8xf32>
    %70 = arith.addf %66, %69 : vector<128x8xf32>
    %71 = vector.shape_cast %70 : vector<128x8xf32> to vector<8x16x8xf32>
    %72 = arith.addf %51, %71 : vector<8x16x8xf32>
    %73 = tpu.transpose %72, [0, 2, 1] : vector<8x16x8xf32> -> vector<8x8x16xf32>
    %74 = vector.shape_cast %73 : vector<8x8x16xf32> to vector<64x16xf32>
    %75 = arith.truncf %74 : vector<64x16xf32> to vector<64x16xbf16>
    %c1 = arith.constant 1 : index
    %c0_42 = arith.constant 0 : index
    %c0_43 = arith.constant 0 : index
    %76 = vector.load %arg5[%c1, %c0_42, %c0_43] : memref<2x16x32xbf16, #tpu.memory_space<vmem>>, vector<1x16x32xbf16>
    %77 = vector.shape_cast %76 : vector<1x16x32xbf16> to vector<16x32xbf16>
    %cst_44 = arith.constant dense<0.000000e+00> : vector<64x32xf32>
    %78 = tpu.matmul %75, %77, %cst_44 {dimension_numbers = #tpu.dot_dimension_numbers<[1], [0], [0], [1], [0, 0, 1, 1], [], []>} : vector<64x16xbf16>, vector<16x32xbf16>, vector<64x32xf32> -> vector<64x32xf32>
    %c1_45 = arith.constant 1 : index
    %c0_46 = arith.constant 0 : index
    %c0_47 = arith.constant 0 : index
    %79 = vector.load %arg6[%c1_45, %c0_46, %c0_47] : memref<2x1x32xf32, #tpu.memory_space<vmem>>, vector<1x1x32xf32>
    %80 = vector.shape_cast %79 : vector<1x1x32xf32> to vector<1x32xf32>
    %81 = vector.broadcast %80 : vector<1x32xf32> to vector<64x32xf32>
    %82 = arith.addf %78, %81 : vector<64x32xf32>
    %cst_48 = arith.constant 0.000000e+00 : f32
    %83 = vector.broadcast %cst_48 : f32 to vector<64x32xf32>
    %84 = arith.maximumf %82, %83 : vector<64x32xf32>
    %85 = arith.truncf %84 : vector<64x32xf32> to vector<64x32xbf16>
    %c1_49 = arith.constant 1 : index
    %c0_50 = arith.constant 0 : index
    %c0_51 = arith.constant 0 : index
    %86 = vector.load %arg7[%c1_49, %c0_50, %c0_51] : memref<2x32x16xbf16, #tpu.memory_space<vmem>>, vector<1x32x16xbf16>
    %87 = vector.shape_cast %86 : vector<1x32x16xbf16> to vector<32x16xbf16>
    %cst_52 = arith.constant dense<0.000000e+00> : vector<64x16xf32>
    %88 = tpu.matmul %85, %87, %cst_52 {dimension_numbers = #tpu.dot_dimension_numbers<[1], [0], [0], [1], [0, 0, 1, 1], [], []>} : vector<64x32xbf16>, vector<32x16xbf16>, vector<64x16xf32> -> vector<64x16xf32>
    %c1_53 = arith.constant 1 : index
    %c0_54 = arith.constant 0 : index
    %c0_55 = arith.constant 0 : index
    %89 = vector.load %arg8[%c1_53, %c0_54, %c0_55] : memref<2x1x16xf32, #tpu.memory_space<vmem>>, vector<1x1x16xf32>
    %90 = vector.shape_cast %89 : vector<1x1x16xf32> to vector<1x16xf32>
    %91 = vector.broadcast %90 : vector<1x16xf32> to vector<64x16xf32>
    %92 = arith.addf %88, %91 : vector<64x16xf32>
    %93 = vector.shape_cast %92 : vector<64x16xf32> to vector<8x8x16xf32>
    %94 = arith.addf %73, %93 : vector<8x8x16xf32>
    %95 = tpu.transpose %94, [0, 2, 1] : vector<8x8x16xf32> -> vector<8x16x8xf32>
    %96 = vector.shape_cast %95 : vector<8x16x8xf32> to vector<128x8xf32>
    %97 = arith.truncf %96 : vector<128x8xf32> to vector<128x8xbf16>
    %c1_56 = arith.constant 1 : index
    %c0_57 = arith.constant 0 : index
    %c0_58 = arith.constant 0 : index
    %98 = vector.load %arg9[%c1_56, %c0_57, %c0_58] : memref<2x8x32xbf16, #tpu.memory_space<vmem>>, vector<1x8x32xbf16>
    %99 = vector.shape_cast %98 : vector<1x8x32xbf16> to vector<8x32xbf16>
    %cst_59 = arith.constant dense<0.000000e+00> : vector<128x32xf32>
    %100 = tpu.matmul %97, %99, %cst_59 {dimension_numbers = #tpu.dot_dimension_numbers<[1], [0], [0], [1], [0, 0, 1, 1], [], []>} : vector<128x8xbf16>, vector<8x32xbf16>, vector<128x32xf32> -> vector<128x32xf32>
    %c1_60 = arith.constant 1 : index
    %c0_61 = arith.constant 0 : index
    %c0_62 = arith.constant 0 : index
    %101 = vector.load %arg10[%c1_60, %c0_61, %c0_62] : memref<2x1x32xf32, #tpu.memory_space<vmem>>, vector<1x1x32xf32>
    %102 = vector.shape_cast %101 : vector<1x1x32xf32> to vector<1x32xf32>
    %103 = vector.broadcast %102 : vector<1x32xf32> to vector<128x32xf32>
    %104 = arith.addf %100, %103 : vector<128x32xf32>
    %cst_63 = arith.constant 0.000000e+00 : f32
    %105 = vector.broadcast %cst_63 : f32 to vector<128x32xf32>
    %106 = arith.maximumf %104, %105 : vector<128x32xf32>
    %107 = arith.truncf %106 : vector<128x32xf32> to vector<128x32xbf16>
    %c1_64 = arith.constant 1 : index
    %c0_65 = arith.constant 0 : index
    %c0_66 = arith.constant 0 : index
    %108 = vector.load %arg11[%c1_64, %c0_65, %c0_66] : memref<2x32x8xbf16, #tpu.memory_space<vmem>>, vector<1x32x8xbf16>
    %109 = vector.shape_cast %108 : vector<1x32x8xbf16> to vector<32x8xbf16>
    %cst_67 = arith.constant dense<0.000000e+00> : vector<128x8xf32>
    %110 = tpu.matmul %107, %109, %cst_67 {dimension_numbers = #tpu.dot_dimension_numbers<[1], [0], [0], [1], [0, 0, 1, 1], [], []>} : vector<128x32xbf16>, vector<32x8xbf16>, vector<128x8xf32> -> vector<128x8xf32>
    %c1_68 = arith.constant 1 : index
    %c0_69 = arith.constant 0 : index
    %c0_70 = arith.constant 0 : index
    %111 = vector.load %arg12[%c1_68, %c0_69, %c0_70] : memref<2x1x8xf32, #tpu.memory_space<vmem>>, vector<1x1x8xf32>
    %112 = vector.shape_cast %111 : vector<1x1x8xf32> to vector<1x8xf32>
    %113 = vector.broadcast %112 : vector<1x8xf32> to vector<128x8xf32>
    %114 = arith.addf %110, %113 : vector<128x8xf32>
    %115 = vector.shape_cast %114 : vector<128x8xf32> to vector<8x16x8xf32>
    %116 = arith.addf %95, %115 : vector<8x16x8xf32>
    %117 = tpu.transpose %116, [0, 2, 1] : vector<8x16x8xf32> -> vector<8x8x16xf32>
    %118 = vector.shape_cast %117 : vector<8x8x16xf32> to vector<64x16xf32>
    %119 = arith.truncf %118 : vector<64x16xf32> to vector<64x16xbf16>
    %c0_71 = arith.constant 0 : index
    %c0_72 = arith.constant 0 : index
    %120 = vector.load %arg13[%c0_71, %c0_72] : memref<16x12xbf16, #tpu.memory_space<vmem>>, vector<16x12xbf16>
    %cst_73 = arith.constant dense<0.000000e+00> : vector<64x12xf32>
    %121 = tpu.matmul %119, %120, %cst_73 {dimension_numbers = #tpu.dot_dimension_numbers<[1], [0], [0], [1], [0, 0, 1, 1], [], []>} : vector<64x16xbf16>, vector<16x12xbf16>, vector<64x12xf32> -> vector<64x12xf32>
    %c0_74 = arith.constant 0 : index
    %c0_75 = arith.constant 0 : index
    %122 = vector.load %arg14[%c0_74, %c0_75] : memref<1x12xf32, #tpu.memory_space<vmem>>, vector<1x12xf32>
    %123 = vector.broadcast %122 : vector<1x12xf32> to vector<64x12xf32>
    %124 = arith.addf %121, %123 : vector<64x12xf32>
    %125 = vector.broadcast %21 : vector<1x8x1xf32> to vector<8x8x1xf32>
    %126 = arith.mulf %125, %15 : vector<8x8x1xf32>
    %127 = vector.shape_cast %126 : vector<8x8x1xf32> to vector<64x1xf32>
    %128 = vector.broadcast %19 : vector<1x8x1xf32> to vector<8x8x1xf32>
    %129 = arith.mulf %128, %126 : vector<8x8x1xf32>
    %130 = arith.subf %4, %129 : vector<8x8x1xf32>
    %131 = vector.shape_cast %130 : vector<8x8x1xf32> to vector<64x1xf32>
    %132 = vector.broadcast %127 : vector<64x1xf32> to vector<64x12xf32>
    %133 = arith.mulf %124, %132 : vector<64x12xf32>
    %134 = vector.broadcast %131 : vector<64x1xf32> to vector<64x12xf32>
    %135 = arith.addf %133, %134 : vector<64x12xf32>
    %c0_76 = arith.constant 0 : index
    %c0_77 = arith.constant 0 : index
    %136 = vector.load %arg15[%c0_76, %c0_77] : memref<64x12xf32, #tpu.memory_space<vmem>>, vector<64x12xf32>
    tpu.vector_store %arg15[%c0_76, %c0_77], %135 {strides = array<i32>} : memref<64x12xf32, #tpu.memory_space<vmem>>, vector<64x12xf32>,
    return
  }
  func.func @transform_0(%arg0: i32) -> (i32, i32, i32) {
    %c0_i32 = arith.constant 0 : i32
    %c0_i32_0 = arith.constant 0 : i32
    %c0_i32_1 = arith.constant 0 : i32
    return %arg0, %c0_i32, %c0_i32_0 : i32, i32, i32
  }
  func.func @transform_1(%arg0: i32) -> (i32, i32) {
    %c0_i32 = arith.constant 0 : i32
    %c0_i32_0 = arith.constant 0 : i32
    %c0_i32_1 = arith.constant 0 : i32
    return %c0_i32, %c0_i32_0 : i32, i32
  }
  func.func @transform_2(%arg0: i32) -> (i32, i32) {
    %c0_i32 = arith.constant 0 : i32
    %c0_i32_0 = arith.constant 0 : i32
    %c0_i32_1 = arith.constant 0 : i32
    return %c0_i32, %c0_i32_0 : i32, i32
  }
  func.func @transform_3(%arg0: i32) -> (i32, i32) {
    %c0_i32 = arith.constant 0 : i32
    %c0_i32_0 = arith.constant 0 : i32
    %c0_i32_1 = arith.constant 0 : i32
    return %c0_i32, %c0_i32_0 : i32, i32
  }
  func.func @transform_4(%arg0: i32) -> (i32, i32, i32) {
    %c0_i32 = arith.constant 0 : i32
    %c0_i32_0 = arith.constant 0 : i32
    %c0_i32_1 = arith.constant 0 : i32
    %c0_i32_2 = arith.constant 0 : i32
    return %c0_i32, %c0_i32_0, %c0_i32_1 : i32, i32, i32
  }
  func.func @transform_5(%arg0: i32) -> (i32, i32, i32) {
    %c0_i32 = arith.constant 0 : i32
    %c0_i32_0 = arith.constant 0 : i32
    %c0_i32_1 = arith.constant 0 : i32
    %c0_i32_2 = arith.constant 0 : i32
    return %c0_i32, %c0_i32_0, %c0_i32_1 : i32, i32, i32
  }
  func.func @transform_6(%arg0: i32) -> (i32, i32, i32) {
    %c0_i32 = arith.constant 0 : i32
    %c0_i32_0 = arith.constant 0 : i32
    %c0_i32_1 = arith.constant 0 : i32
    %c0_i32_2 = arith.constant 0 : i32
    return %c0_i32, %c0_i32_0, %c0_i32_1 : i32, i32, i32
  }
  func.func @transform_7(%arg0: i32) -> (i32, i32, i32) {
    %c0_i32 = arith.constant 0 : i32
    %c0_i32_0 = arith.constant 0 : i32
    %c0_i32_1 = arith.constant 0 : i32
    %c0_i32_2 = arith.constant 0 : i32
    return %c0_i32, %c0_i32_0, %c0_i32_1 : i32, i32, i32
  }
  func.func @transform_8(%arg0: i32) -> (i32, i32, i32) {
    %c0_i32 = arith.constant 0 : i32
    %c0_i32_0 = arith.constant 0 : i32
    %c0_i32_1 = arith.constant 0 : i32
    %c0_i32_2 = arith.constant 0 : i32
    return %c0_i32, %c0_i32_0, %c0_i32_1 : i32, i32, i32
  }
  func.func @transform_9(%arg0: i32) -> (i32, i32, i32) {
    %c0_i32 = arith.constant 0 : i32
    %c0_i32_0 = arith.constant 0 : i32
    %c0_i32_1 = arith.constant 0 : i32
    %c0_i32_2 = arith.constant 0 : i32
    return %c0_i32, %c0_i32_0, %c0_i32_1 : i32, i32, i32
  }
  func.func @transform_10(%arg0: i32) -> (i32, i32, i32) {
    %c0_i32 = arith.constant 0 : i32
    %c0_i32_0 = arith.constant 0 : i32
    %c0_i32_1 = arith.constant 0 : i32
    %c0_i32_2 = arith.constant 0 : i32
    return %c0_i32, %c0_i32_0, %c0_i32_1 : i32, i32, i32
  }
  func.func @transform_11(%arg0: i32) -> (i32, i32, i32) {
    %c0_i32 = arith.constant 0 : i32
    %c0_i32_0 = arith.constant 0 : i32
    %c0_i32_1 = arith.constant 0 : i32
    %c0_i32_2 = arith.constant 0 : i32
    return %c0_i32, %c0_i32_0, %c0_i32_1 : i32, i32, i32
  }
  func.func @transform_12(%arg0: i32) -> (i32, i32) {
    %c0_i32 = arith.constant 0 : i32
    %c0_i32_0 = arith.constant 0 : i32
    %c0_i32_1 = arith.constant 0 : i32
    return %c0_i32, %c0_i32_0 : i32, i32
  }
  func.func @transform_13(%arg0: i32) -> (i32, i32) {
    %c0_i32 = arith.constant 0 : i32
    %c0_i32_0 = arith.constant 0 : i32
    %c0_i32_1 = arith.constant 0 : i32
    return %c0_i32, %c0_i32_0 : i32, i32
  }
  func.func @transform_14(%arg0: i32) -> (i32, i32) {
    %c0_i32 = arith.constant 0 : i32
    %c0_i32_0 = arith.constant 0 : i32
    return %arg0, %c0_i32 : i32, i32
  }
}

</mosaic_0001>

<llo_original>
// kernel: tsmixer_forward.1
$region0: #{tsmixer_forward.1}
  #allocation0 [shape = 'u32[]', space=smem, size = 0x4, offset = 0x4, fixed_abs, tag = 'smem constant byte address 0x4 - core index']
  #allocation1 [shape = 'u32[144,128]{1,0:T(1,128)}', space=vmem, size = 0x12000, scoped, tag = 'internal scratch']
  %s0 = inlined_call_operand.vmem [shape: f32[16,8,16], index: 0, kind: input, shape index: {}]
  %s1 = inlined_call_operand.vmem [shape: f32[8,1], index: 1, kind: input, shape index: {}]
  %s2 = inlined_call_operand.vmem [shape: f32[8,1], index: 2, kind: input, shape index: {}]
  %s3 = inlined_call_operand.vmem [shape: f32[8,1], index: 3, kind: input, shape index: {}]
  %s4 = inlined_call_operand.vmem [shape: bf16[2,16,32], index: 4, kind: input, shape index: {}]
  %s5 = inlined_call_operand.vmem [shape: f32[2,1,32], index: 5, kind: input, shape index: {}]
  %s6 = inlined_call_operand.vmem [shape: bf16[2,32,16], index: 6, kind: input, shape index: {}]
  %s7 = inlined_call_operand.vmem [shape: f32[2,1,16], index: 7, kind: input, shape index: {}]
  %s8 = inlined_call_operand.vmem [shape: bf16[2,8,32], index: 8, kind: input, shape index: {}]
  %s9 = inlined_call_operand.vmem [shape: f32[2,1,32], index: 9, kind: input, shape index: {}]
  %s10 = inlined_call_operand.vmem [shape: bf16[2,32,8], index: 10, kind: input, shape index: {}]
  %s11 = inlined_call_operand.vmem [shape: f32[2,1,8], index: 11, kind: input, shape index: {}]
  %s12 = inlined_call_operand.vmem [shape: bf16[16,12], index: 12, kind: input, shape index: {}]
  %s13 = inlined_call_operand.vmem [shape: f32[1,12], index: 13, kind: input, shape index: {}]
  %s14 = inlined_call_operand.vmem [shape: f32[128,12], index: 14, kind: output, shape index: {}]
  %s15 = sld [smem:[#allocation0]]
  $region89: #{tsmixer_forward.1} parent=0
    _
  %s17 = ssub.s32 1, %s15
  %s18 = scalar_select 0, %s17, %s15
  loop: start=0, step=1, limit=4
  $region2: #{tsmixer_forward.1} parent=0 // loop_pre_header
    _
  $region3: #{tsmixer_forward.1} parent=0 // loop_header
    %s20 = sphi 0, %s24
    %p21 = scmp.ge.s32.totalorder %s20, 4
    %s30 = sphi 0, %s32
    %s33 = sphi 0, %s30
    %s34 = sphi 0, %s33
    %s50 = sphi 0, %s34
    %s54 = sphi 0, %s54
    %s56 = sphi 0, %s54
    %s57 = sphi 0, %s56
    %s71 = sphi 0, %s57
    %s75 = sphi 0, %s75
    %s77 = sphi 0, %s75
    %s78 = sphi 0, %s77
    %s92 = sphi 0, %s78
    %s96 = sphi 0, %s96
    %s98 = sphi 0, %s96
    %s99 = sphi 0, %s98
    %s113 = sphi 0, %s99
    %s117 = sphi 0, %s117
    %s119 = sphi 0, %s117
    %s120 = sphi 0, %s119
    %s134 = sphi 0, %s120
    %s138 = sphi 0, %s138
    %s140 = sphi 0, %s138
    %s141 = sphi 0, %s140
    %s155 = sphi 0, %s141
    %s159 = sphi 0, %s159
    %s161 = sphi 0, %s159
    %s162 = sphi 0, %s161
    %s176 = sphi 0, %s162
    %s180 = sphi 0, %s180
    %s182 = sphi 0, %s180
    %s183 = sphi 0, %s182
    %s197 = sphi 0, %s183
    %s201 = sphi 0, %s201
    %s203 = sphi 0, %s201
    %s204 = sphi 0, %s203
    %s218 = sphi 0, %s204
    %s222 = sphi 0, %s222
    %s224 = sphi 0, %s222
    %s225 = sphi 0, %s224
    %s239 = sphi 0, %s225
    %s243 = sphi 0, %s243
    %s245 = sphi 0, %s243
    %s246 = sphi 0, %s245
    %s260 = sphi 0, %s246
    %s264 = sphi 0, %s264
    %s266 = sphi 0, %s264
    %s267 = sphi 0, %s266
    %s281 = sphi 0, %s267
    %s285 = sphi 0, %s285
    %s287 = sphi 0, %s285
    %s288 = sphi 0, %s287
    %s302 = sphi 0, %s288
    %s306 = sphi 0, %s306
    %s308 = sphi 0, %s306
    %s309 = sphi 0, %s308
    %s323 = sphi 0, %s309
    %s329 = sphi 0, %s331
    %s332 = sphi 0, %s329
    %s333 = sphi 0, %s332
    %s349 = sphi 0, %s333
  $region4: #{tsmixer_forward.1} parent=0 // loop_header_branch
    %23 = sbr.rel (%p21) target = $region8
  $region5: #{tsmixer_forward.1} parent=0 // loop_body
    %s25 = ssub.s32 %s20, 1
    %s26 = ssub.s32 %s20, 2
    %s27 = sadd.s32 %s20, 1
    %s28 = ssub.s32 %s20, %s27
    %p29 = scmp.eq.s32.totalorder %s28, 0
    %s31 = sadd.s32 %s30, 1
    %s32 = scalar_select %p29, %s30, %s31
    %p35 = pneg %p29
    %p36 = scmp.eq.s32.totalorder %s20, 1
    %p37 = por %p35, %p36
    %p38 = scmp.ne.s32.totalorder %s30, %s33
    %p39 = scmp.eq.s32.totalorder %s20, 0
    %p40 = por %p38, %p39
    %p41 = scmp.ne.s32.totalorder %s30, %s33
    %p42 = scmp.eq.s32.totalorder %s25, 1
    %p43 = por %p41, %p42
    %p44 = scmp.ne.s32.totalorder %s33, %s34
    %p45 = scmp.eq.s32.totalorder %s25, 0
    %p46 = por %p44, %p45
    %p47 = scmp.ne.s32.totalorder %s33, %s34
    %p48 = scmp.eq.s32.totalorder %s26, 1
    %p49 = por %p47, %p48
    %p51 = scmp.ne.s32.totalorder %s34, %s50
    %p52 = scmp.eq.s32.totalorder %s26, 0
    %p53 = por %p51, %p52
    %s55 = sadd.s32 %s54, 1
    %p58 = scmp.eq.s32.totalorder %s20, 1
    %p59 = scmp.ne.s32.totalorder %s54, %s56
    %p60 = scmp.eq.s32.totalorder %s20, 0
    %p61 = por %p59, %p60
    %p62 = scmp.ne.s32.totalorder %s54, %s56
    %p63 = scmp.eq.s32.totalorder %s25, 1
    %p64 = por %p62, %p63
    %p65 = scmp.ne.s32.totalorder %s56, %s57
    %p66 = scmp.eq.s32.totalorder %s25, 0
    %p67 = por %p65, %p66
    %p68 = scmp.ne.s32.totalorder %s56, %s57
    %p69 = scmp.eq.s32.totalorder %s26, 1
    %p70 = por %p68, %p69
    %p72 = scmp.ne.s32.totalorder %s57, %s71
    %p73 = scmp.eq.s32.totalorder %s26, 0
    %p74 = por %p72, %p73
    %s76 = sadd.s32 %s75, 1
    %p79 = scmp.eq.s32.totalorder %s20, 1
    %p80 = scmp.ne.s32.totalorder %s75, %s77
    %p81 = scmp.eq.s32.totalorder %s20, 0
    %p82 = por %p80, %p81
    %p83 = scmp.ne.s32.totalorder %s75, %s77
    %p84 = scmp.eq.s32.totalorder %s25, 1
    %p85 = por %p83, %p84
    %p86 = scmp.ne.s32.totalorder %s77, %s78
    %p87 = scmp.eq.s32.totalorder %s25, 0
    %p88 = por %p86, %p87
    %p89 = scmp.ne.s32.totalorder %s77, %s78
    %p90 = scmp.eq.s32.totalorder %s26, 1
    %p91 = por %p89, %p90
    %p93 = scmp.ne.s32.totalorder %s78, %s92
    %p94 = scmp.eq.s32.totalorder %s26, 0
    %p95 = por %p93, %p94
    %s97 = sadd.s32 %s96, 1
    %p100 = scmp.eq.s32.totalorder %s20, 1
    %p101 = scmp.ne.s32.totalorder %s96, %s98
    %p102 = scmp.eq.s32.totalorder %s20, 0
    %p103 = por %p101, %p102
    %p104 = scmp.ne.s32.totalorder %s96, %s98
    %p105 = scmp.eq.s32.totalorder %s25, 1
    %p106 = por %p104, %p105
    %p107 = scmp.ne.s32.totalorder %s98, %s99
    %p108 = scmp.eq.s32.totalorder %s25, 0
    %p109 = por %p107, %p108
    %p110 = scmp.ne.s32.totalorder %s98, %s99
    %p111 = scmp.eq.s32.totalorder %s26, 1
    %p112 = por %p110, %p111
    %p114 = scmp.ne.s32.totalorder %s99, %s113
    %p115 = scmp.eq.s32.totalorder %s26, 0
    %p116 = por %p114, %p115
    %s118 = sadd.s32 %s117, 1
    %p121 = scmp.eq.s32.totalorder %s20, 1
    %p122 = scmp.ne.s32.totalorder %s117, %s119
    %p123 = scmp.eq.s32.totalorder %s20, 0
    %p124 = por %p122, %p123
    %p125 = scmp.ne.s32.totalorder %s117, %s119
    %p126 = scmp.eq.s32.totalorder %s25, 1
    %p127 = por %p125, %p126
    %p128 = scmp.ne.s32.totalorder %s119, %s120
    %p129 = scmp.eq.s32.totalorder %s25, 0
    %p130 = por %p128, %p129
    %p131 = scmp.ne.s32.totalorder %s119, %s120
    %p132 = scmp.eq.s32.totalorder %s26, 1
    %p133 = por %p131, %p132
    %p135 = scmp.ne.s32.totalorder %s120, %s134
    %p136 = scmp.eq.s32.totalorder %s26, 0
    %p137 = por %p135, %p136
    %s139 = sadd.s32 %s138, 1
    %p142 = scmp.eq.s32.totalorder %s20, 1
    %p143 = scmp.ne.s32.totalorder %s138, %s140
    %p144 = scmp.eq.s32.totalorder %s20, 0
    %p145 = por %p143, %p144
    %p146 = scmp.ne.s32.totalorder %s138, %s140
    %p147 = scmp.eq.s32.totalorder %s25, 1
    %p148 = por %p146, %p147
    %p149 = scmp.ne.s32.totalorder %s140, %s141
    %p150 = scmp.eq.s32.totalorder %s25, 0
    %p151 = por %p149, %p150
    %p152 = scmp.ne.s32.totalorder %s140, %s141
    %p153 = scmp.eq.s32.totalorder %s26, 1
    %p154 = por %p152, %p153
    %p156 = scmp.ne.s32.totalorder %s141, %s155
    %p157 = scmp.eq.s32.totalorder %s26, 0
    %p158 = por %p156, %p157
    %s160 = sadd.s32 %s159, 1
    %p163 = scmp.eq.s32.totalorder %s20, 1
    %p164 = scmp.ne.s32.totalorder %s159, %s161
    %p165 = scmp.eq.s32.totalorder %s20, 0
    %p166 = por %p164, %p165
    %p167 = scmp.ne.s32.totalorder %s159, %s161
    %p168 = scmp.eq.s32.totalorder %s25, 1
    %p169 = por %p167, %p168
    %p170 = scmp.ne.s32.totalorder %s161, %s162
    %p171 = scmp.eq.s32.totalorder %s25, 0
    %p172 = por %p170, %p171
    %p173 = scmp.ne.s32.totalorder %s161, %s162
    %p174 = scmp.eq.s32.totalorder %s26, 1
    %p175 = por %p173, %p174
    %p177 = scmp.ne.s32.totalorder %s162, %s176
    %p178 = scmp.eq.s32.totalorder %s26, 0
    %p179 = por %p177, %p178
    %s181 = sadd.s32 %s180, 1
    %p184 = scmp.eq.s32.totalorder %s20, 1
    %p185 = scmp.ne.s32.totalorder %s180, %s182
    %p186 = scmp.eq.s32.totalorder %s20, 0
    %p187 = por %p185, %p186
    %p188 = scmp.ne.s32.totalorder %s180, %s182
    %p189 = scmp.eq.s32.totalorder %s25, 1
    %p190 = por %p188, %p189
    %p191 = scmp.ne.s32.totalorder %s182, %s183
    %p192 = scmp.eq.s32.totalorder %s25, 0
    %p193 = por %p191, %p192
    %p194 = scmp.ne.s32.totalorder %s182, %s183
    %p195 = scmp.eq.s32.totalorder %s26, 1
    %p196 = por %p194, %p195
    %p198 = scmp.ne.s32.totalorder %s183, %s197
    %p199 = scmp.eq.s32.totalorder %s26, 0
    %p200 = por %p198, %p199
    %s202 = sadd.s32 %s201, 1
    %p205 = scmp.eq.s32.totalorder %s20, 1
    %p206 = scmp.ne.s32.totalorder %s201, %s203
    %p207 = scmp.eq.s32.totalorder %s20, 0
    %p208 = por %p206, %p207
    %p209 = scmp.ne.s32.totalorder %s201, %s203
    %p210 = scmp.eq.s32.totalorder %s25, 1
    %p211 = por %p209, %p210
    %p212 = scmp.ne.s32.totalorder %s203, %s204
    %p213 = scmp.eq.s32.totalorder %s25, 0
    %p214 = por %p212, %p213
    %p215 = scmp.ne.s32.totalorder %s203, %s204
    %p216 = scmp.eq.s32.totalorder %s26, 1
    %p217 = por %p215, %p216
    %p219 = scmp.ne.s32.totalorder %s204, %s218
    %p220 = scmp.eq.s32.totalorder %s26, 0
    %p221 = por %p219, %p220
    %s223 = sadd.s32 %s222, 1
    %p226 = scmp.eq.s32.totalorder %s20, 1
    %p227 = scmp.ne.s32.totalorder %s222, %s224
    %p228 = scmp.eq.s32.totalorder %s20, 0
    %p229 = por %p227, %p228
    %p230 = scmp.ne.s32.totalorder %s222, %s224
    %p231 = scmp.eq.s32.totalorder %s25, 1
    %p232 = por %p230, %p231
    %p233 = scmp.ne.s32.totalorder %s224, %s225
    %p234 = scmp.eq.s32.totalorder %s25, 0
    %p235 = por %p233, %p234
    %p236 = scmp.ne.s32.totalorder %s224, %s225
    %p237 = scmp.eq.s32.totalorder %s26, 1
    %p238 = por %p236, %p237
    %p240 = scmp.ne.s32.totalorder %s225, %s239
    %p241 = scmp.eq.s32.totalorder %s26, 0
    %p242 = por %p240, %p241
    %s244 = sadd.s32 %s243, 1
    %p247 = scmp.eq.s32.totalorder %s20, 1
    %p248 = scmp.ne.s32.totalorder %s243, %s245
    %p249 = scmp.eq.s32.totalorder %s20, 0
    %p250 = por %p248, %p249
    %p251 = scmp.ne.s32.totalorder %s243, %s245
    %p252 = scmp.eq.s32.totalorder %s25, 1
    %p253 = por %p251, %p252
    %p254 = scmp.ne.s32.totalorder %s245, %s246
    %p255 = scmp.eq.s32.totalorder %s25, 0
    %p256 = por %p254, %p255
    %p257 = scmp.ne.s32.totalorder %s245, %s246
    %p258 = scmp.eq.s32.totalorder %s26, 1
    %p259 = por %p257, %p258
    %p261 = scmp.ne.s32.totalorder %s246, %s260
    %p262 = scmp.eq.s32.totalorder %s26, 0
    %p263 = por %p261, %p262
    %s265 = sadd.s32 %s264, 1
    %p268 = scmp.eq.s32.totalorder %s20, 1
    %p269 = scmp.ne.s32.totalorder %s264, %s266
    %p270 = scmp.eq.s32.totalorder %s20, 0
    %p271 = por %p269, %p270
    %p272 = scmp.ne.s32.totalorder %s264, %s266
    %p273 = scmp.eq.s32.totalorder %s25, 1
    %p274 = por %p272, %p273
    %p275 = scmp.ne.s32.totalorder %s266, %s267
    %p276 = scmp.eq.s32.totalorder %s25, 0
    %p277 = por %p275, %p276
    %p278 = scmp.ne.s32.totalorder %s266, %s267
    %p279 = scmp.eq.s32.totalorder %s26, 1
    %p280 = por %p278, %p279
    %p282 = scmp.ne.s32.totalorder %s267, %s281
    %p283 = scmp.eq.s32.totalorder %s26, 0
    %p284 = por %p282, %p283
    %s286 = sadd.s32 %s285, 1
    %p289 = scmp.eq.s32.totalorder %s20, 1
    %p290 = scmp.ne.s32.totalorder %s285, %s287
    %p291 = scmp.eq.s32.totalorder %s20, 0
    %p292 = por %p290, %p291
    %p293 = scmp.ne.s32.totalorder %s285, %s287
    %p294 = scmp.eq.s32.totalorder %s25, 1
    %p295 = por %p293, %p294
    %p296 = scmp.ne.s32.totalorder %s287, %s288
    %p297 = scmp.eq.s32.totalorder %s25, 0
    %p298 = por %p296, %p297
    %p299 = scmp.ne.s32.totalorder %s287, %s288
    %p300 = scmp.eq.s32.totalorder %s26, 1
    %p301 = por %p299, %p300
    %p303 = scmp.ne.s32.totalorder %s288, %s302
    %p304 = scmp.eq.s32.totalorder %s26, 0
    %p305 = por %p303, %p304
    %s307 = sadd.s32 %s306, 1
    %p310 = scmp.eq.s32.totalorder %s20, 1
    %p311 = scmp.ne.s32.totalorder %s306, %s308
    %p312 = scmp.eq.s32.totalorder %s20, 0
    %p313 = por %p311, %p312
    %p314 = scmp.ne.s32.totalorder %s306, %s308
    %p315 = scmp.eq.s32.totalorder %s25, 1
    %p316 = por %p314, %p315
    %p317 = scmp.ne.s32.totalorder %s308, %s309
    %p318 = scmp.eq.s32.totalorder %s25, 0
    %p319 = por %p317, %p318
    %p320 = scmp.ne.s32.totalorder %s308, %s309
    %p321 = scmp.eq.s32.totalorder %s26, 1
    %p322 = por %p320, %p321
    %p324 = scmp.ne.s32.totalorder %s309, %s323
    %p325 = scmp.eq.s32.totalorder %s26, 0
    %p326 = por %p324, %p325
    %s327 = ssub.s32 %s20, %s27
    %p328 = scmp.eq.s32.totalorder %s327, 0
    %s330 = sadd.s32 %s329, 1
    %s331 = scalar_select %p328, %s329, %s330
    %p334 = pneg %p328
    %p335 = scmp.eq.s32.totalorder %s20, 1
    %p336 = por %p334, %p335
    %p337 = scmp.ne.s32.totalorder %s329, %s332
    %p338 = scmp.eq.s32.totalorder %s20, 0
    %p339 = por %p337, %p338
    %p340 = scmp.ne.s32.totalorder %s329, %s332
    %p341 = scmp.eq.s32.totalorder %s25, 1
    %p342 = por %p340, %p341
    %p343 = scmp.ne.s32.totalorder %s332, %s333
    %p344 = scmp.eq.s32.totalorder %s25, 0
    %p345 = por %p343, %p344
    %p346 = scmp.ne.s32.totalorder %s332, %s333
    %p347 = scmp.eq.s32.totalorder %s26, 1
    %p348 = por %p346, %p347
    %p350 = scmp.ne.s32.totalorder %s333, %s349
    %p351 = scmp.eq.s32.totalorder %s26, 0
    %p352 = por %p350, %p351
    %p353 = scmp.le.s32.totalorder 1, %s20
    %p354 = scmp.lt.s32.totalorder %s20, 3
    %p355 = pnand %p353, %p354
    %p356 = pneg %p355
    // Predicated region
    $region9: #{tsmixer_forward.1} parent=5 // pred_check
      _
    $region10: #{tsmixer_forward.1} parent=5 // pred_check_branch
      %358 = sbr.rel (%p355) target = $region12
    $region11: #{tsmixer_forward.1} parent=5 // pred_region
      %s359 = ssub.s32 %s20, 1
      // Predicated region
      $region13: #{tsmixer_forward.1} parent=11 // pred_check
        %p360 = pneg %p67
      $region14: #{tsmixer_forward.1} parent=11 // pred_check_branch
        %362 = sbr.rel (%p360) target = $region16
      $region15: #{tsmixer_forward.1} parent=11 // pred_region
        _
      $region16: #{tsmixer_forward.1} parent=11 // pred_fallthru
        _
      // Predicated region
      $region17: #{tsmixer_forward.1} parent=11 // pred_check
        %p363 = pneg %p88
      $region18: #{tsmixer_forward.1} parent=11 // pred_check_branch
        %365 = sbr.rel (%p363) target = $region20
      $region19: #{tsmixer_forward.1} parent=11 // pred_region
        _
      $region20: #{tsmixer_forward.1} parent=11 // pred_fallthru
        _
      // Predicated region
      $region21: #{tsmixer_forward.1} parent=11 // pred_check
        %p366 = pneg %p109
      $region22: #{tsmixer_forward.1} parent=11 // pred_check_branch
        %368 = sbr.rel (%p366) target = $region24
      $region23: #{tsmixer_forward.1} parent=11 // pred_region
        _
      $region24: #{tsmixer_forward.1} parent=11 // pred_fallthru
        _
      // Predicated region
      $region25: #{tsmixer_forward.1} parent=11 // pred_check
        %p369 = pneg %p130
      $region26: #{tsmixer_forward.1} parent=11 // pred_check_branch
        %371 = sbr.rel (%p369) target = $region28
      $region27: #{tsmixer_forward.1} parent=11 // pred_region
        _
      $region28: #{tsmixer_forward.1} parent=11 // pred_fallthru
        _
      // Predicated region
      $region29: #{tsmixer_forward.1} parent=11 // pred_check
        %p372 = pneg %p151
      $region30: #{tsmixer_forward.1} parent=11 // pred_check_branch
        %374 = sbr.rel (%p372) target = $region32
      $region31: #{tsmixer_forward.1} parent=11 // pred_region
        _
      $region32: #{tsmixer_forward.1} parent=11 // pred_fallthru
        _
      // Predicated region
      $region33: #{tsmixer_forward.1} parent=11 // pred_check
        %p375 = pneg %p172
      $region34: #{tsmixer_forward.1} parent=11 // pred_check_branch
        %377 = sbr.rel (%p375) target = $region36
      $region35: #{tsmixer_forward.1} parent=11 // pred_region
        _
      $region36: #{tsmixer_forward.1} parent=11 // pred_fallthru
        _
      // Predicated region
      $region37: #{tsmixer_forward.1} parent=11 // pred_check
        %p378 = pneg %p193
      $region38: #{tsmixer_forward.1} parent=11 // pred_check_branch
        %380 = sbr.rel (%p378) target = $region40
      $region39: #{tsmixer_forward.1} parent=11 // pred_region
        _
      $region40: #{tsmixer_forward.1} parent=11 // pred_fallthru
        _
      // Predicated region
      $region41: #{tsmixer_forward.1} parent=11 // pred_check
        %p381 = pneg %p214
      $region42: #{tsmixer_forward.1} parent=11 // pred_check_branch
        %383 = sbr.rel (%p381) target = $region44
      $region43: #{tsmixer_forward.1} parent=11 // pred_region
        _
      $region44: #{tsmixer_forward.1} parent=11 // pred_fallthru
        _
      // Predicated region
      $region45: #{tsmixer_forward.1} parent=11 // pred_check
        %p384 = pneg %p235
      $region46: #{tsmixer_forward.1} parent=11 // pred_check_branch
        %386 = sbr.rel (%p384) target = $region48
      $region47: #{tsmixer_forward.1} parent=11 // pred_region
        _
      $region48: #{tsmixer_forward.1} parent=11 // pred_fallthru
        _
      // Predicated region
      $region49: #{tsmixer_forward.1} parent=11 // pred_check
        %p387 = pneg %p256
      $region50: #{tsmixer_forward.1} parent=11 // pred_check_branch
        %389 = sbr.rel (%p387) target = $region52
      $region51: #{tsmixer_forward.1} parent=11 // pred_region
        _
      $region52: #{tsmixer_forward.1} parent=11 // pred_fallthru
        _
      // Predicated region
      $region53: #{tsmixer_forward.1} parent=11 // pred_check
        %p390 = pneg %p277
      $region54: #{tsmixer_forward.1} parent=11 // pred_check_branch
        %392 = sbr.rel (%p390) target = $region56
      $region55: #{tsmixer_forward.1} parent=11 // pred_region
        _
      $region56: #{tsmixer_forward.1} parent=11 // pred_fallthru
        _
      // Predicated region
      $region57: #{tsmixer_forward.1} parent=11 // pred_check
        %p393 = pneg %p298
      $region58: #{tsmixer_forward.1} parent=11 // pred_check_branch
        %395 = sbr.rel (%p393) target = $region60
      $region59: #{tsmixer_forward.1} parent=11 // pred_region
        _
      $region60: #{tsmixer_forward.1} parent=11 // pred_fallthru
        _
      // Predicated region
      $region61: #{tsmixer_forward.1} parent=11 // pred_check
        %p396 = pneg %p319
      $region62: #{tsmixer_forward.1} parent=11 // pred_check_branch
        %398 = sbr.rel (%p396) target = $region64
      $region63: #{tsmixer_forward.1} parent=11 // pred_region
        _
      $region64: #{tsmixer_forward.1} parent=11 // pred_fallthru
        _
    $region12: #{tsmixer_forward.1} parent=5 // pred_fallthru
      _
    %p399 = scmp.lt.s32.totalorder %s20, 2
    // Predicated region
    $region65: #{tsmixer_forward.1} parent=5 // pred_check
      %p400 = pneg %p399
    $region66: #{tsmixer_forward.1} parent=5 // pred_check_branch
      %402 = sbr.rel (%p400) target = $region68
    $region67: #{tsmixer_forward.1} parent=5 // pred_region
      // Predicated region
      $region69: #{tsmixer_forward.1} parent=67 // pred_check
        %p403 = pneg %p40
      $region70: #{tsmixer_forward.1} parent=67 // pred_check_branch
        %405 = sbr.rel (%p403) target = $region72
      $region71: #{tsmixer_forward.1} parent=67 // pred_region
        %s406 = smul.u32 8, %s20
        %p407 = scmp.lt.s32.totalorder %s406, 15
        %s408 = scalar_select %p407, %s406, 15
        %s409 = smul.addr %s408, 8
        %s410 = scalar_lea.vmem %s0, %s409
        %s411 = smul.u32 8, %s20
      $region72: #{tsmixer_forward.1} parent=67 // pred_fallthru
        _
    $region68: #{tsmixer_forward.1} parent=5 // pred_fallthru
      _
    %p412 = scmp.le.s32.totalorder 1, %s20
    %p413 = scmp.lt.s32.totalorder %s20, 3
    %p414 = pnand %p412, %p413
    %p415 = pneg %p414
    // Predicated region
    $region73: #{tsmixer_forward.1} parent=5 // pred_check
      _
    $region74: #{tsmixer_forward.1} parent=5 // pred_check_branch
      %417 = sbr.rel (%p414) target = $region76
    $region75: #{tsmixer_forward.1} parent=5 // pred_region
      %s418 = ssub.s32 %s20, 1
      %s419 = smul.u32 8, %s25
      %p420 = scmp.lt.s32.totalorder %s419, 15
      %s421 = scalar_select %p420, %s419, 15
      %s422 = smul.addr %s421, 8
      %s423 = scalar_lea.vmem %s0, %s422
      %p424 = pneg %p46
      %p425 = pneg %p43
      %p426 = pneg %p67
      %p427 = pneg %p64
      %p428 = pneg %p88
      %p429 = pneg %p85
      %p430 = pneg %p109
      %p431 = pneg %p106
      %p432 = pneg %p130
      %p433 = pneg %p127
      %p434 = pneg %p151
      %p435 = pneg %p148
      %p436 = pneg %p172
      %p437 = pneg %p169
      %p438 = pneg %p193
      %p439 = pneg %p190
      %p440 = pneg %p214
      %p441 = pneg %p211
      %p442 = pneg %p235
      %p443 = pneg %p232
      %p444 = pneg %p256
      %p445 = pneg %p253
      %p446 = pneg %p277
      %p447 = pneg %p274
      %p448 = pneg %p298
      %p449 = pneg %p295
      %p450 = pneg %p319
      %p451 = pneg %p316
      %p452 = pneg %p345
      %p453 = pneg %p342
      %s454 = smul.u32 8, %s25
      %p455 = scmp.lt.s32.totalorder %s454, 15
      %s456 = scalar_select %p455, %s454, 15
      %s457 = smul.addr %s456, 8
      %s458 = scalar_lea.vmem %s14, %s457
      %s459 = smul.u32 8, %s25
      %p460 = scmp.lt.s32.totalorder %s459, 15
      %s461 = scalar_select %p460, %s459, 15
      %s462 = smul.addr %s461, 8
      %s463 = scalar_lea.vmem %s0, %s462
      %s464 = smul.u32 8, %s25
      %s465 = smul.u32 8, %s25
      %p466 = scmp.lt.s32.totalorder %s465, 15
      %s467 = scalar_select %p466, %s465, 15
      %s468 = smul.addr %s467, 8
      %s469 = scalar_lea.vmem %s14, %s468
      %s470 = smul.u32 8, %s25
      %v472 = vld [vmem:[%s463] sm:$0xff]
      %v473 = vld [vmem:[%s463 + $0x8] sm:$0xff]
      %v474 = vld [vmem:[%s463 + $0x10] sm:$0xff]
      %v475 = vld [vmem:[%s463 + $0x18] sm:$0xff]
      %v476 = vld [vmem:[%s463 + $0x20] sm:$0xff]
      %v477 = vld [vmem:[%s463 + $0x28] sm:$0xff]
      %v478 = vld [vmem:[%s463 + $0x30] sm:$0xff]
      %v479 = vld [vmem:[%s463 + $0x38] sm:$0xff]
      %vm480 = vcmask 130048
      %v481 = vsel %vm480, %v472, 0.0
      %482 = vadd.xlane.f32.xlu0 %v481
      %v483 = vpop.xlane.xlu0 %482
      %v484 = vsel %vm480, %v473, 0.0
      %485 = vadd.xlane.f32.xlu0 %v484
      %v486 = vpop.xlane.xlu0 %485
      %v487 = vsel %vm480, %v474, 0.0
      %488 = vadd.xlane.f32.xlu0 %v487
      %v489 = vpop.xlane.xlu0 %488
      %v490 = vsel %vm480, %v475, 0.0
      %491 = vadd.xlane.f32.xlu0 %v490
      %v492 = vpop.xlane.xlu0 %491
      %v493 = vsel %vm480, %v476, 0.0
      %494 = vadd.xlane.f32.xlu0 %v493
      %v495 = vpop.xlane.xlu0 %494
      %v496 = vsel %vm480, %v477, 0.0
      %497 = vadd.xlane.f32.xlu0 %v496
      %v498 = vpop.xlane.xlu0 %497
      %v499 = vsel %vm480, %v478, 0.0
      %500 = vadd.xlane.f32.xlu0 %v499
      %v501 = vpop.xlane.xlu0 %500
      %v502 = vsel %vm480, %v479, 0.0
      %503 = vadd.xlane.f32.xlu0 %v502
      %v504 = vpop.xlane.xlu0 %503
      %v505 = vrcp.pop 16.0
      %v506 = vmul.f32 %v483, %v505
      %v507 = vmul.f32 %v486, %v505
      %v508 = vmul.f32 %v489, %v505
      %v509 = vmul.f32 %v492, %v505
      %v510 = vmul.f32 %v495, %v505
      %v511 = vmul.f32 %v498, %v505
      %v512 = vmul.f32 %v501, %v505
      %v513 = vmul.f32 %v504, %v505
      %v514 = vsub.f32 %v472, %v506
      %v515 = vsub.f32 %v473, %v507
      %v516 = vsub.f32 %v474, %v508
      %v517 = vsub.f32 %v475, %v509
      %v518 = vsub.f32 %v476, %v510
      %v519 = vsub.f32 %v477, %v511
      %v520 = vsub.f32 %v478, %v512
      %v521 = vsub.f32 %v479, %v513
      %v522 = vmul.f32 %v514, %v514
      %v523 = vmul.f32 %v515, %v515
      %v524 = vmul.f32 %v516, %v516
      %v525 = vmul.f32 %v517, %v517
      %v526 = vmul.f32 %v518, %v518
      %v527 = vmul.f32 %v519, %v519
      %v528 = vmul.f32 %v520, %v520
      %v529 = vmul.f32 %v521, %v521
      %v530 = vsel %vm480, %v522, 0.0
      %531 = vadd.xlane.f32.xlu0 %v530
      %v532 = vpop.xlane.xlu0 %531
      %v533 = vsel %vm480, %v523, 0.0
      %534 = vadd.xlane.f32.xlu0 %v533
      %v535 = vpop.xlane.xlu0 %534
      %v536 = vsel %vm480, %v524, 0.0
      %537 = vadd.xlane.f32.xlu0 %v536
      %v538 = vpop.xlane.xlu0 %537
      %v539 = vsel %vm480, %v525, 0.0
      %540 = vadd.xlane.f32.xlu0 %v539
      %v541 = vpop.xlane.xlu0 %540
      %v542 = vsel %vm480, %v526, 0.0
      %543 = vadd.xlane.f32.xlu0 %v542
      %v544 = vpop.xlane.xlu0 %543
      %v545 = vsel %vm480, %v527, 0.0
      %546 = vadd.xlane.f32.xlu0 %v545
      %v547 = vpop.xlane.xlu0 %546
      %v548 = vsel %vm480, %v528, 0.0
      %549 = vadd.xlane.f32.xlu0 %v548
      %v550 = vpop.xlane.xlu0 %549
      %v551 = vsel %vm480, %v529, 0.0
      %552 = vadd.xlane.f32.xlu0 %v551
      %v553 = vpop.xlane.xlu0 %552
      %v554 = vmul.f32 %v532, %v505
      %v555 = vmul.f32 %v535, %v505
      %v556 = vmul.f32 %v538, %v505
      %v557 = vmul.f32 %v541, %v505
      %v558 = vmul.f32 %v544, %v505
      %v559 = vmul.f32 %v547, %v505
      %v560 = vmul.f32 %v550, %v505
      %v561 = vmul.f32 %v553, %v505
      %v562 = vadd.f32 %v554, 1e-05
      %v563 = vadd.f32 %v555, 1e-05
      %v564 = vadd.f32 %v556, 1e-05
      %v565 = vadd.f32 %v557, 1e-05
      %v566 = vadd.f32 %v558, 1e-05
      %v567 = vadd.f32 %v559, 1e-05
      %v568 = vadd.f32 %v560, 1e-05
      %v569 = vadd.f32 %v561, 1e-05
      %v570 = vrsqrt.pop %v562
      %v571 = vrsqrt.pop %v563
      %v572 = vrsqrt.pop %v564
      %v573 = vrsqrt.pop %v565
      %v574 = vrsqrt.pop %v566
      %v575 = vrsqrt.pop %v567
      %v576 = vrsqrt.pop %v568
      %v577 = vrsqrt.pop %v569
      %v578 = vmul.f32 %v562, %v570
      %v579 = vmul.f32 %v563, %v571
      %v580 = vmul.f32 %v564, %v572
      %v581 = vmul.f32 %v565, %v573
      %v582 = vmul.f32 %v566, %v574
      %v583 = vmul.f32 %v567, %v575
      %v584 = vmul.f32 %v568, %v576
      %v585 = vmul.f32 %v569, %v577
      %v586 = vld [vmem:[%s1] sm:$0xff]
      %v587 = vld [vmem:[%s2] sm:$0xff]
      %v588 = vld [vmem:[%s3] sm:$0xff]
      %v589 = vmul.f32 %v514, %v570
      %v590 = vmul.f32 %v515, %v571
      %v591 = vmul.f32 %v516, %v572
      %v592 = vmul.f32 %v517, %v573
      %v593 = vmul.f32 %v518, %v574
      %v594 = vmul.f32 %v519, %v575
      %v595 = vmul.f32 %v520, %v576
      %v596 = vmul.f32 %v521, %v577
      %598 = vset.pattern.permute.xlu0 0
      %599 = vperm.xlu0 %598, %v586
      %v600 = vpop.permute.xlu0 %599
      %v602 = vmul.f32 %v589, %v600
      %v603 = vmul.f32 %v590, %v600
      %v604 = vmul.f32 %v591, %v600
      %v605 = vmul.f32 %v592, %v600
      %v606 = vmul.f32 %v593, %v600
      %v607 = vmul.f32 %v594, %v600
      %v608 = vmul.f32 %v595, %v600
      %v609 = vmul.f32 %v596, %v600
      %611 = vset.pattern.permute.xlu0 0
      %612 = vperm.xlu0 %611, %v587
      %v613 = vpop.permute.xlu0 %612
      %v615 = vadd.f32 %v602, %v613
      %v616 = vadd.f32 %v603, %v613
      %v617 = vadd.f32 %v604, %v613
      %v618 = vadd.f32 %v605, %v613
      %v619 = vadd.f32 %v606, %v613
      %v620 = vadd.f32 %v607, %v613
      %v621 = vadd.f32 %v608, %v613
      %v622 = vadd.f32 %v609, %v613
      %v623 = vpack.c.bf16 %v616, %v615
      %v624 = vpack.c.bf16 %v618, %v617
      %v625 = vpack.c.bf16 %v620, %v619
      %v626 = vpack.c.bf16 %v622, %v621
      %v627 = vld [vmem:[%s4] sm:$0xf]
      %v628 = vld [vmem:[%s4 + $0x4] sm:$0xf]
      %v629 = vld [vmem:[%s5] sm:$0x1]
      %v631 = vlaneseq
      %v632 = vshrl.u32 %v631, 7
      %v633 = vsub.s32 0, %v632
      %v634 = vrot.slane %v629, %v633
      %v638 = vunpack.c.l.b16 %v627
      %v639 = vunpack.c.l.b16 %v628
      %v640 = vpack.c.b16 %v639, %v638
      %v643 = vsel %vm480, %v623, 0
      %v646 = vsel %vm480, %v624, 0
      %v649 = vsel %vm480, %v625, 0
      %v652 = vsel %vm480, %v626, 0
      %654 = vmatprep.subr.bf16.mxu0 0
      %655 = vmatpush1.bf16.msra.mxu0 0
      %656 = vmatprep.subr.bf16.mxu0 0
      %657 = vmatpush1.bf16.msra.mxu0 0
      %658 = vmatprep.subr.bf16.mxu0 0
      %659 = vmatpush1.bf16.msra.mxu0 0
      %660 = vmatprep.subr.bf16.mxu0 0
      %661 = vmatpush1.bf16.msra.mxu0 0
      %662 = vmatprep.subr.bf16.mxu0 0
      %663 = vmatpush1.bf16.msra.mxu0 0
      %664 = vmatprep.subr.bf16.mxu0 0
      %665 = vmatpush1.bf16.msra.mxu0 0
      %666 = vmatprep.subr.bf16.mxu0 0
      %667 = vmatpush1.bf16.msra.mxu0 0
      %668 = vmatprep.subr.bf16.mxu0 0
      %669 = vmatpush1.bf16.msra.mxu0 %v640
      %670 = vmatprep.subr.bf16.mxu0 0
      %671 = vmatpush2.bf16.msra.mxu0 0
      %672 = vmatprep.subr.bf16.mxu0 0
      %673 = vmatpush2.bf16.msra.mxu0 0
      %674 = vmatprep.subr.bf16.mxu0 0
      %675 = vmatpush2.bf16.msra.mxu0 0
      %676 = vmatprep.subr.bf16.mxu0 0
      %677 = vmatpush2.bf16.msra.mxu0 0
      %678 = vmatprep.subr.bf16.mxu0 0
      %679 = vmatpush2.bf16.msra.mxu0 0
      %680 = vmatprep.subr.bf16.mxu0 0
      %681 = vmatpush2.bf16.msra.mxu0 0
      %682 = vmatprep.subr.bf16.mxu0 0
      %683 = vmatpush2.bf16.msra.mxu0 0
      %684 = vmatprep.subr.bf16.mxu0 0
      %685 = vmatpush2.bf16.msra.mxu0 0
      %686 = vmatprep.mubr.bf16.mxu0 0
      %687 = vmatmul.mubr.bf16.gmra.mxu0 %v643
      %v688 = vpop.f32.mrf.mxu0
      %v689 = vadd.f32 %v634, %v688
      %v690 = vpop.f32.mrf.mxu0
      %v691 = vpop.f32.mrf.mxu0
      %v692 = vadd.f32 %v634, %v691
      %v693 = vpop.f32.mrf.mxu0
      %694 = vmatprep.mubr.bf16.mxu0 0
      %695 = vmatmul.mubr.bf16.gmra.mxu0 %v646
      %v696 = vpop.f32.mrf.mxu0
      %v697 = vadd.f32 %v634, %v696
      %v698 = vpop.f32.mrf.mxu0
      %v699 = vpop.f32.mrf.mxu0
      %v700 = vadd.f32 %v634, %v699
      %v701 = vpop.f32.mrf.mxu0
      %702 = vmatprep.mubr.bf16.mxu0 0
      %703 = vmatmul.mubr.bf16.gmra.mxu0 %v649
      %v704 = vpop.f32.mrf.mxu0
      %v705 = vadd.f32 %v634, %v704
      %v706 = vpop.f32.mrf.mxu0
      %v707 = vpop.f32.mrf.mxu0
      %v708 = vadd.f32 %v634, %v707
      %v709 = vpop.f32.mrf.mxu0
      %710 = vmatprep.mubr.bf16.mxu0 0
      %711 = vmatmul.mubr.bf16.gmra.mxu0 %v652
      %v712 = vpop.f32.mrf.mxu0
      %v713 = vadd.f32 %v634, %v712
      %v714 = vpop.f32.mrf.mxu0
      %v715 = vpop.f32.mrf.mxu0
      %v716 = vadd.f32 %v634, %v715
      %v717 = vpop.f32.mrf.mxu0
      %718 = vdwg.mxu0
      %v719 = vmax.f32 %v689, 0.0
      %v720 = vmax.f32 %v692, 0.0
      %v721 = vmax.f32 %v697, 0.0
      %v722 = vmax.f32 %v700, 0.0
      %v723 = vmax.f32 %v705, 0.0
      %v724 = vmax.f32 %v708, 0.0
      %v725 = vmax.f32 %v713, 0.0
      %v726 = vmax.f32 %v716, 0.0
      %v727 = vpack.c.bf16 %v720, %v719
      %v728 = vpack.c.bf16 %v722, %v721
      %v729 = vpack.c.bf16 %v724, %v723
      %v730 = vpack.c.bf16 %v726, %v725
      %v731 = vld [vmem:[%s6] sm:$0xf]
      %v732 = vld [vmem:[%s6 + $0x4] sm:$0xf]
      %v733 = vld [vmem:[%s6 + $0x8] sm:$0xf]
      %v734 = vld [vmem:[%s6 + $0xc] sm:$0xf]
      %v735 = vld [vmem:[%s7] sm:$0x1]
      %v737 = vlaneseq
      %v738 = vshrl.u32 %v737, 7
      %v739 = vsub.s32 0, %v738
      %v740 = vrot.slane %v735, %v739
      %v746 = vunpack.c.l.b16 %v731
      %v747 = vunpack.c.l.b16 %v732
      %v748 = vunpack.c.l.b16 %v733
      %v749 = vunpack.c.l.b16 %v734
      %v750 = vpack.c.b16 %v747, %v746
      %v751 = vpack.c.b16 %v749, %v748
      %vm754 = vcmask 261120
      %v756 = vsel %vm754, %v727, 0
      %v759 = vsel %vm754, %v728, 0
      %v762 = vsel %vm754, %v729, 0
      %v765 = vsel %vm754, %v730, 0
      %767 = vmatprep.subr.bf16.mxu0 0
      %768 = vmatpush1.bf16.msra.mxu0 0
      %769 = vmatprep.subr.bf16.mxu0 0
      %770 = vmatpush1.bf16.msra.mxu0 0
      %771 = vmatprep.subr.bf16.mxu0 0
      %772 = vmatpush1.bf16.msra.mxu0 0
      %773 = vmatprep.subr.bf16.mxu0 0
      %774 = vmatpush1.bf16.msra.mxu0 0
      %775 = vmatprep.subr.bf16.mxu0 0
      %776 = vmatpush1.bf16.msra.mxu0 0
      %777 = vmatprep.subr.bf16.mxu0 0
      %778 = vmatpush1.bf16.msra.mxu0 0
      %779 = vmatprep.subr.bf16.mxu0 0
      %780 = vmatpush1.bf16.msra.mxu0 %v751
      %781 = vmatprep.subr.bf16.mxu0 0
      %782 = vmatpush1.bf16.msra.mxu0 %v750
      %783 = vmatprep.subr.bf16.mxu0 0
      %784 = vmatpush2.bf16.msra.mxu0 0
      %785 = vmatprep.subr.bf16.mxu0 0
      %786 = vmatpush2.bf16.msra.mxu0 0
      %787 = vmatprep.subr.bf16.mxu0 0
      %788 = vmatpush2.bf16.msra.mxu0 0
      %789 = vmatprep.subr.bf16.mxu0 0
      %790 = vmatpush2.bf16.msra.mxu0 0
      %791 = vmatprep.subr.bf16.mxu0 0
      %792 = vmatpush2.bf16.msra.mxu0 0
      %793 = vmatprep.subr.bf16.mxu0 0
      %794 = vmatpush2.bf16.msra.mxu0 0
      %795 = vmatprep.subr.bf16.mxu0 0
      %796 = vmatpush2.bf16.msra.mxu0 0
      %797 = vmatprep.subr.bf16.mxu0 0
      %798 = vmatpush2.bf16.msra.mxu0 0
      %799 = vmatprep.mubr.bf16.mxu0 0
      %800 = vmatmul.mubr.bf16.gmra.mxu0 %v756
      %v801 = vpop.f32.mrf.mxu0
      %v802 = vadd.f32 %v740, %v801
      %v803 = vpop.f32.mrf.mxu0
      %v804 = vpop.f32.mrf.mxu0
      %v805 = vadd.f32 %v740, %v804
      %v806 = vpop.f32.mrf.mxu0
      %807 = vmatprep.mubr.bf16.mxu0 0
      %808 = vmatmul.mubr.bf16.gmra.mxu0 %v759
      %v809 = vpop.f32.mrf.mxu0
      %v810 = vadd.f32 %v740, %v809
      %v811 = vpop.f32.mrf.mxu0
      %v812 = vpop.f32.mrf.mxu0
      %v813 = vadd.f32 %v740, %v812
      %v814 = vpop.f32.mrf.mxu0
      %815 = vmatprep.mubr.bf16.mxu0 0
      %816 = vmatmul.mubr.bf16.gmra.mxu0 %v762
      %v817 = vpop.f32.mrf.mxu0
      %v818 = vadd.f32 %v740, %v817
      %v819 = vpop.f32.mrf.mxu0
      %v820 = vpop.f32.mrf.mxu0
      %v821 = vadd.f32 %v740, %v820
      %v822 = vpop.f32.mrf.mxu0
      %823 = vmatprep.mubr.bf16.mxu0 0
      %824 = vmatmul.mubr.bf16.gmra.mxu0 %v765
      %v825 = vpop.f32.mrf.mxu0
      %v826 = vadd.f32 %v740, %v825
      %v827 = vpop.f32.mrf.mxu0
      %v828 = vpop.f32.mrf.mxu0
      %v829 = vadd.f32 %v740, %v828
      %v830 = vpop.f32.mrf.mxu0
      %831 = vdwg.mxu0
      %v832 = vadd.f32 %v615, %v802
      %v833 = vadd.f32 %v616, %v805
      %v834 = vadd.f32 %v617, %v810
      %v835 = vadd.f32 %v618, %v813
      %v836 = vadd.f32 %v619, %v818
      %v837 = vadd.f32 %v620, %v821
      %v838 = vadd.f32 %v621, %v826
      %v839 = vadd.f32 %v622, %v829
      %840 = vxpose.xlu0.b32.start [1/16] %v832, 128
      %841 = vxpose.xlu0.b32.cont [2/16] 0.0, 128
      %842 = vxpose.xlu0.b32.cont [3/16] 0.0, 128
      %843 = vxpose.xlu0.b32.cont [4/16] 0.0, 128
      %844 = vxpose.xlu0.b32.cont [5/16] 0.0, 128
      %845 = vxpose.xlu0.b32.cont [6/16] 0.0, 128
      %846 = vxpose.xlu0.b32.cont [7/16] 0.0, 128
      %847 = vxpose.xlu0.b32.cont [8/16] 0.0, 128
      %848 = vxpose.xlu0.b32.cont [9/16] 0.0, 128
      %849 = vxpose.xlu0.b32.cont [10/16] 0.0, 128
      %850 = vxpose.xlu0.b32.cont [11/16] 0.0, 128
      %851 = vxpose.xlu0.b32.cont [12/16] 0.0, 128
      %852 = vxpose.xlu0.b32.cont [13/16] 0.0, 128
      %853 = vxpose.xlu0.b32.cont [14/16] 0.0, 128
      %854 = vxpose.xlu0.b32.cont [15/16] 0.0, 128
      %855 = vxpose.xlu0.b32.end [16/16] 0.0, 128
      %v856 = vpop.trf.xlu0
      %v857 = vpop.trf.xlu0
      %v858 = vpop.trf.xlu0
      %v859 = vpop.trf.xlu0
      %v860 = vpop.trf.xlu0
      %v861 = vpop.trf.xlu0
      %v862 = vpop.trf.xlu0
      %v863 = vpop.trf.xlu0
      %v864 = vpop.trf.xlu0
      %v865 = vpop.trf.xlu0
      %v866 = vpop.trf.xlu0
      %v867 = vpop.trf.xlu0
      %v868 = vpop.trf.xlu0
      %v869 = vpop.trf.xlu0
      %v870 = vpop.trf.xlu0
      %v871 = vpop.trf.xlu0
      %872 = vxpose.xlu0.b32.start [1/16] %v833, 128
      %873 = vxpose.xlu0.b32.cont [2/16] 0.0, 128
      %874 = vxpose.xlu0.b32.cont [3/16] 0.0, 128
      %875 = vxpose.xlu0.b32.cont [4/16] 0.0, 128
      %876 = vxpose.xlu0.b32.cont [5/16] 0.0, 128
      %877 = vxpose.xlu0.b32.cont [6/16] 0.0, 128
      %878 = vxpose.xlu0.b32.cont [7/16] 0.0, 128
      %879 = vxpose.xlu0.b32.cont [8/16] 0.0, 128
      %880 = vxpose.xlu0.b32.cont [9/16] 0.0, 128
      %881 = vxpose.xlu0.b32.cont [10/16] 0.0, 128
      %882 = vxpose.xlu0.b32.cont [11/16] 0.0, 128
      %883 = vxpose.xlu0.b32.cont [12/16] 0.0, 128
      %884 = vxpose.xlu0.b32.cont [13/16] 0.0, 128
      %885 = vxpose.xlu0.b32.cont [14/16] 0.0, 128
      %886 = vxpose.xlu0.b32.cont [15/16] 0.0, 128
      %887 = vxpose.xlu0.b32.end [16/16] 0.0, 128
      %v888 = vpop.trf.xlu0
      %v889 = vpop.trf.xlu0
      %v890 = vpop.trf.xlu0
      %v891 = vpop.trf.xlu0
      %v892 = vpop.trf.xlu0
      %v893 = vpop.trf.xlu0
      %v894 = vpop.trf.xlu0
      %v895 = vpop.trf.xlu0
      %v896 = vpop.trf.xlu0
      %v897 = vpop.trf.xlu0
      %v898 = vpop.trf.xlu0
      %v899 = vpop.trf.xlu0
      %v900 = vpop.trf.xlu0
      %v901 = vpop.trf.xlu0
      %v902 = vpop.trf.xlu0
      %v903 = vpop.trf.xlu0
      %904 = vxpose.xlu0.b32.start [1/16] %v834, 128
      %905 = vxpose.xlu0.b32.cont [2/16] 0.0, 128
      %906 = vxpose.xlu0.b32.cont [3/16] 0.0, 128
      %907 = vxpose.xlu0.b32.cont [4/16] 0.0, 128
      %908 = vxpose.xlu0.b32.cont [5/16] 0.0, 128
      %909 = vxpose.xlu0.b32.cont [6/16] 0.0, 128
      %910 = vxpose.xlu0.b32.cont [7/16] 0.0, 128
      %911 = vxpose.xlu0.b32.cont [8/16] 0.0, 128
      %912 = vxpose.xlu0.b32.cont [9/16] 0.0, 128
      %913 = vxpose.xlu0.b32.cont [10/16] 0.0, 128
      %914 = vxpose.xlu0.b32.cont [11/16] 0.0, 128
      %915 = vxpose.xlu0.b32.cont [12/16] 0.0, 128
      %916 = vxpose.xlu0.b32.cont [13/16] 0.0, 128
      %917 = vxpose.xlu0.b32.cont [14/16] 0.0, 128
      %918 = vxpose.xlu0.b32.cont [15/16] 0.0, 128
      %919 = vxpose.xlu0.b32.end [16/16] 0.0, 128
      %v920 = vpop.trf.xlu0
      %v921 = vpop.trf.xlu0
      %v922 = vpop.trf.xlu0
      %v923 = vpop.trf.xlu0
      %v924 = vpop.trf.xlu0
      %v925 = vpop.trf.xlu0
      %v926 = vpop.trf.xlu0
      %v927 = vpop.trf.xlu0
      %v928 = vpop.trf.xlu0
      %v929 = vpop.trf.xlu0
      %v930 = vpop.trf.xlu0
      %v931 = vpop.trf.xlu0
      %v932 = vpop.trf.xlu0
      %v933 = vpop.trf.xlu0
      %v934 = vpop.trf.xlu0
      %v935 = vpop.trf.xlu0
      %936 = vxpose.xlu0.b32.start [1/16] %v835, 128
      %937 = vxpose.xlu0.b32.cont [2/16] 0.0, 128
      %938 = vxpose.xlu0.b32.cont [3/16] 0.0, 128
      %939 = vxpose.xlu0.b32.cont [4/16] 0.0, 128
      %940 = vxpose.xlu0.b32.cont [5/16] 0.0, 128
      %941 = vxpose.xlu0.b32.cont [6/16] 0.0, 128
      %942 = vxpose.xlu0.b32.cont [7/16] 0.0, 128
      %943 = vxpose.xlu0.b32.cont [8/16] 0.0, 128
      %944 = vxpose.xlu0.b32.cont [9/16] 0.0, 128
      %945 = vxpose.xlu0.b32.cont [10/16] 0.0, 128
      %946 = vxpose.xlu0.b32.cont [11/16] 0.0, 128
      %947 = vxpose.xlu0.b32.cont [12/16] 0.0, 128
      %948 = vxpose.xlu0.b32.cont [13/16] 0.0, 128
      %949 = vxpose.xlu0.b32.cont [14/16] 0.0, 128
      %950 = vxpose.xlu0.b32.cont [15/16] 0.0, 128
      %951 = vxpose.xlu0.b32.end [16/16] 0.0, 128
      %v952 = vpop.trf.xlu0
      %v953 = vpop.trf.xlu0
      %v954 = vpop.trf.xlu0
      %v955 = vpop.trf.xlu0
      %v956 = vpop.trf.xlu0
      %v957 = vpop.trf.xlu0
      %v958 = vpop.trf.xlu0
      %v959 = vpop.trf.xlu0
      %v960 = vpop.trf.xlu0
      %v961 = vpop.trf.xlu0
      %v962 = vpop.trf.xlu0
      %v963 = vpop.trf.xlu0
      %v964 = vpop.trf.xlu0
      %v965 = vpop.trf.xlu0
      %v966 = vpop.trf.xlu0
      %v967 = vpop.trf.xlu0
      %968 = vxpose.xlu0.b32.start [1/16] %v836, 128
      %969 = vxpose.xlu0.b32.cont [2/16] 0.0, 128
      %970 = vxpose.xlu0.b32.cont [3/16] 0.0, 128
      %971 = vxpose.xlu0.b32.cont [4/16] 0.0, 128
      %972 = vxpose.xlu0.b32.cont [5/16] 0.0, 128
      %973 = vxpose.xlu0.b32.cont [6/16] 0.0, 128
      %974 = vxpose.xlu0.b32.cont [7/16] 0.0, 128
      %975 = vxpose.xlu0.b32.cont [8/16] 0.0, 128
      %976 = vxpose.xlu0.b32.cont [9/16] 0.0, 128
      %977 = vxpose.xlu0.b32.cont [10/16] 0.0, 128
      %978 = vxpose.xlu0.b32.cont [11/16] 0.0, 128
      %979 = vxpose.xlu0.b32.cont [12/16] 0.0, 128
      %980 = vxpose.xlu0.b32.cont [13/16] 0.0, 128
      %981 = vxpose.xlu0.b32.cont [14/16] 0.0, 128
      %982 = vxpose.xlu0.b32.cont [15/16] 0.0, 128
      %983 = vxpose.xlu0.b32.end [16/16] 0.0, 128
      %v984 = vpop.trf.xlu0
      %v985 = vpop.trf.xlu0
      %v986 = vpop.trf.xlu0
      %v987 = vpop.trf.xlu0
      %v988 = vpop.trf.xlu0
      %v989 = vpop.trf.xlu0
      %v990 = vpop.trf.xlu0
      %v991 = vpop.trf.xlu0
      %v992 = vpop.trf.xlu0
      %v993 = vpop.trf.xlu0
      %v994 = vpop.trf.xlu0
      %v995 = vpop.trf.xlu0
      %v996 = vpop.trf.xlu0
      %v997 = vpop.trf.xlu0
      %v998 = vpop.trf.xlu0
      %v999 = vpop.trf.xlu0
      %1000 = vxpose.xlu0.b32.start [1/16] %v837, 128
      %1001 = vxpose.xlu0.b32.cont [2/16] 0.0, 128
      %1002 = vxpose.xlu0.b32.cont [3/16] 0.0, 128
      %1003 = vxpose.xlu0.b32.cont [4/16] 0.0, 128
      %1004 = vxpose.xlu0.b32.cont [5/16] 0.0, 128
      %1005 = vxpose.xlu0.b32.cont [6/16] 0.0, 128
      %1006 = vxpose.xlu0.b32.cont [7/16] 0.0, 128
      %1007 = vxpose.xlu0.b32.cont [8/16] 0.0, 128
      %1008 = vxpose.xlu0.b32.cont [9/16] 0.0, 128
      %1009 = vxpose.xlu0.b32.cont [10/16] 0.0, 128
      %1010 = vxpose.xlu0.b32.cont [11/16] 0.0, 128
      %1011 = vxpose.xlu0.b32.cont [12/16] 0.0, 128
      %1012 = vxpose.xlu0.b32.cont [13/16] 0.0, 128
      %1013 = vxpose.xlu0.b32.cont [14/16] 0.0, 128
      %1014 = vxpose.xlu0.b32.cont [15/16] 0.0, 128
      %1015 = vxpose.xlu0.b32.end [16/16] 0.0, 128
      %v1016 = vpop.trf.xlu0
      %v1017 = vpop.trf.xlu0
      %v1018 = vpop.trf.xlu0
      %v1019 = vpop.trf.xlu0
      %v1020 = vpop.trf.xlu0
      %v1021 = vpop.trf.xlu0
      %v1022 = vpop.trf.xlu0
      %v1023 = vpop.trf.xlu0
      %v1024 = vpop.trf.xlu0
      %v1025 = vpop.trf.xlu0
      %v1026 = vpop.trf.xlu0
      %v1027 = vpop.trf.xlu0
      %v1028 = vpop.trf.xlu0
      %v1029 = vpop.trf.xlu0
      %v1030 = vpop.trf.xlu0
      %v1031 = vpop.trf.xlu0
      %1032 = vxpose.xlu0.b32.start [1/16] %v838, 128
      %1033 = vxpose.xlu0.b32.cont [2/16] 0.0, 128
      %1034 = vxpose.xlu0.b32.cont [3/16] 0.0, 128
      %1035 = vxpose.xlu0.b32.cont [4/16] 0.0, 128
      %1036 = vxpose.xlu0.b32.cont [5/16] 0.0, 128
      %1037 = vxpose.xlu0.b32.cont [6/16] 0.0, 128
      %1038 = vxpose.xlu0.b32.cont [7/16] 0.0, 128
      %1039 = vxpose.xlu0.b32.cont [8/16] 0.0, 128
      %1040 = vxpose.xlu0.b32.cont [9/16] 0.0, 128
      %1041 = vxpose.xlu0.b32.cont [10/16] 0.0, 128
      %1042 = vxpose.xlu0.b32.cont [11/16] 0.0, 128
      %1043 = vxpose.xlu0.b32.cont [12/16] 0.0, 128
      %1044 = vxpose.xlu0.b32.cont [13/16] 0.0, 128
      %1045 = vxpose.xlu0.b32.cont [14/16] 0.0, 128
      %1046 = vxpose.xlu0.b32.cont [15/16] 0.0, 128
      %1047 = vxpose.xlu0.b32.end [16/16] 0.0, 128
      %v1048 = vpop.trf.xlu0
      %v1049 = vpop.trf.xlu0
      %v1050 = vpop.trf.xlu0
      %v1051 = vpop.trf.xlu0
      %v1052 = vpop.trf.xlu0
      %v1053 = vpop.trf.xlu0
      %v1054 = vpop.trf.xlu0
      %v1055 = vpop.trf.xlu0
      %v1056 = vpop.trf.xlu0
      %v1057 = vpop.trf.xlu0
      %v1058 = vpop.trf.xlu0
      %v1059 = vpop.trf.xlu0
      %v1060 = vpop.trf.xlu0
      %v1061 = vpop.trf.xlu0
      %v1062 = vpop.trf.xlu0
      %v1063 = vpop.trf.xlu0
      %1064 = vxpose.xlu0.b32.start [1/16] %v839, 128
      %1065 = vxpose.xlu0.b32.cont [2/16] 0.0, 128
      %1066 = vxpose.xlu0.b32.cont [3/16] 0.0, 128
      %1067 = vxpose.xlu0.b32.cont [4/16] 0.0, 128
      %1068 = vxpose.xlu0.b32.cont [5/16] 0.0, 128
      %1069 = vxpose.xlu0.b32.cont [6/16] 0.0, 128
      %1070 = vxpose.xlu0.b32.cont [7/16] 0.0, 128
      %1071 = vxpose.xlu0.b32.cont [8/16] 0.0, 128
      %1072 = vxpose.xlu0.b32.cont [9/16] 0.0, 128
      %1073 = vxpose.xlu0.b32.cont [10/16] 0.0, 128
      %1074 = vxpose.xlu0.b32.cont [11/16] 0.0, 128
      %1075 = vxpose.xlu0.b32.cont [12/16] 0.0, 128
      %1076 = vxpose.xlu0.b32.cont [13/16] 0.0, 128
      %1077 = vxpose.xlu0.b32.cont [14/16] 0.0, 128
      %1078 = vxpose.xlu0.b32.cont [15/16] 0.0, 128
      %1079 = vxpose.xlu0.b32.end [16/16] 0.0, 128
      %v1080 = vpop.trf.xlu0
      %v1081 = vpop.trf.xlu0
      %v1082 = vpop.trf.xlu0
      %v1083 = vpop.trf.xlu0
      %v1084 = vpop.trf.xlu0
      %v1085 = vpop.trf.xlu0
      %v1086 = vpop.trf.xlu0
      %v1087 = vpop.trf.xlu0
      %v1088 = vpop.trf.xlu0
      %v1089 = vpop.trf.xlu0
      %v1090 = vpop.trf.xlu0
      %v1091 = vpop.trf.xlu0
      %v1092 = vpop.trf.xlu0
      %v1093 = vpop.trf.xlu0
      %v1094 = vpop.trf.xlu0
      %v1095 = vpop.trf.xlu0
      %v1096 = vpack.c.bf16 %v857, %v856
      %v1097 = vpack.c.bf16 %v889, %v888
      %v1098 = vpack.c.bf16 %v921, %v920
      %v1099 = vpack.c.bf16 %v953, %v952
      %v1100 = vpack.c.bf16 %v985, %v984
      %v1101 = vpack.c.bf16 %v1017, %v1016
      %v1102 = vpack.c.bf16 %v1049, %v1048
      %v1103 = vpack.c.bf16 %v1081, %v1080
      %v1104 = vld [vmem:[%s8] sm:$0xf]
      %v1105 = vld [vmem:[%s9] sm:$0x1]
      %v1107 = vlaneseq
      %v1108 = vshrl.u32 %v1107, 7
      %v1109 = vsub.s32 0, %v1108
      %v1110 = vrot.slane %v1105, %v1109
      %vm1112 = vcmask 64512
      %v1114 = vsel %vm1112, %v1096, 0
      %v1117 = vsel %vm1112, %v1097, 0
      %v1120 = vsel %vm1112, %v1098, 0
      %v1123 = vsel %vm1112, %v1099, 0
      %v1126 = vsel %vm1112, %v1100, 0
      %v1129 = vsel %vm1112, %v1101, 0
      %v1132 = vsel %vm1112, %v1102, 0
      %v1135 = vsel %vm1112, %v1103, 0
      %vm1137 = vcmask 1043456
      %v1139 = vsel %vm1137, %v1104, 0
      %1141 = vmatprep.subr.bf16.mxu0 0
      %1142 = vmatpush1.bf16.msra.mxu0 0
      %1143 = vmatprep.subr.bf16.mxu0 0
      %1144 = vmatpush1.bf16.msra.mxu0 0
      %1145 = vmatprep.subr.bf16.mxu0 0
      %1146 = vmatpush1.bf16.msra.mxu0 0
      %1147 = vmatprep.subr.bf16.mxu0 0
      %1148 = vmatpush1.bf16.msra.mxu0 0
      %1149 = vmatprep.subr.bf16.mxu0 0
      %1150 = vmatpush1.bf16.msra.mxu0 0
      %1151 = vmatprep.subr.bf16.mxu0 0
      %1152 = vmatpush1.bf16.msra.mxu0 0
      %1153 = vmatprep.subr.bf16.mxu0 0
      %1154 = vmatpush1.bf16.msra.mxu0 0
      %1155 = vmatprep.subr.bf16.mxu0 0
      %1156 = vmatpush1.bf16.msra.mxu0 %v1139
      %1157 = vmatprep.subr.bf16.mxu0 0
      %1158 = vmatpush2.bf16.msra.mxu0 0
      %1159 = vmatprep.subr.bf16.mxu0 0
      %1160 = vmatpush2.bf16.msra.mxu0 0
      %1161 = vmatprep.subr.bf16.mxu0 0
      %1162 = vmatpush2.bf16.msra.mxu0 0
      %1163 = vmatprep.subr.bf16.mxu0 0
      %1164 = vmatpush2.bf16.msra.mxu0 0
      %1165 = vmatprep.subr.bf16.mxu0 0
      %1166 = vmatpush2.bf16.msra.mxu0 0
      %1167 = vmatprep.subr.bf16.mxu0 0
      %1168 = vmatpush2.bf16.msra.mxu0 0
      %1169 = vmatprep.subr.bf16.mxu0 0
      %1170 = vmatpush2.bf16.msra.mxu0 0
      %1171 = vmatprep.subr.bf16.mxu0 0
      %1172 = vmatpush2.bf16.msra.mxu0 0
      %1173 = vmatprep.mubr.bf16.mxu0 0
      %1174 = vmatmul.mubr.bf16.gmra.mxu0 %v1114
      %v1175 = vpop.f32.mrf.mxu0
      %v1176 = vadd.f32 %v1110, %v1175
      %v1177 = vpop.f32.mrf.mxu0
      %v1178 = vpop.f32.mrf.mxu0
      %v1179 = vadd.f32 %v1110, %v1178
      %v1180 = vpop.f32.mrf.mxu0
      %1181 = vmatprep.mubr.bf16.mxu0 0
      %1182 = vmatmul.mubr.bf16.gmra.mxu0 %v1117
      %v1183 = vpop.f32.mrf.mxu0
      %v1184 = vadd.f32 %v1110, %v1183
      %v1185 = vpop.f32.mrf.mxu0
      %v1186 = vpop.f32.mrf.mxu0
      %v1187 = vadd.f32 %v1110, %v1186
      %v1188 = vpop.f32.mrf.mxu0
      %1189 = vmatprep.mubr.bf16.mxu0 0
      %1190 = vmatmul.mubr.bf16.gmra.mxu0 %v1120
      %v1191 = vpop.f32.mrf.mxu0
      %v1192 = vadd.f32 %v1110, %v1191
      %v1193 = vpop.f32.mrf.mxu0
      %v1194 = vpop.f32.mrf.mxu0
      %v1195 = vadd.f32 %v1110, %v1194
      %v1196 = vpop.f32.mrf.mxu0
      %1197 = vmatprep.mubr.bf16.mxu0 0
      %1198 = vmatmul.mubr.bf16.gmra.mxu0 %v1123
      %v1199 = vpop.f32.mrf.mxu0
      %v1200 = vadd.f32 %v1110, %v1199
      %v1201 = vpop.f32.mrf.mxu0
      %v1202 = vpop.f32.mrf.mxu0
      %v1203 = vadd.f32 %v1110, %v1202
      %v1204 = vpop.f32.mrf.mxu0
      %1205 = vmatprep.mubr.bf16.mxu0 0
      %1206 = vmatmul.mubr.bf16.gmra.mxu0 %v1126
      %v1207 = vpop.f32.mrf.mxu0
      %v1208 = vadd.f32 %v1110, %v1207
      %v1209 = vpop.f32.mrf.mxu0
      %v1210 = vpop.f32.mrf.mxu0
      %v1211 = vadd.f32 %v1110, %v1210
      %v1212 = vpop.f32.mrf.mxu0
      %1213 = vmatprep.mubr.bf16.mxu0 0
      %1214 = vmatmul.mubr.bf16.gmra.mxu0 %v1129
      %v1215 = vpop.f32.mrf.mxu0
      %v1216 = vadd.f32 %v1110, %v1215
      %v1217 = vpop.f32.mrf.mxu0
      %v1218 = vpop.f32.mrf.mxu0
      %v1219 = vadd.f32 %v1110, %v1218
      %v1220 = vpop.f32.mrf.mxu0
      %1221 = vmatprep.mubr.bf16.mxu0 0
      %1222 = vmatmul.mubr.bf16.gmra.mxu0 %v1132
      %v1223 = vpop.f32.mrf.mxu0
      %v1224 = vadd.f32 %v1110, %v1223
      %v1225 = vpop.f32.mrf.mxu0
      %v1226 = vpop.f32.mrf.mxu0
      %v1227 = vadd.f32 %v1110, %v1226
      %v1228 = vpop.f32.mrf.mxu0
      %1229 = vmatprep.mubr.bf16.mxu0 0
      %1230 = vmatmul.mubr.bf16.gmra.mxu0 %v1135
      %v1231 = vpop.f32.mrf.mxu0
      %v1232 = vadd.f32 %v1110, %v1231
      %v1233 = vpop.f32.mrf.mxu0
      %v1234 = vpop.f32.mrf.mxu0
      %v1235 = vadd.f32 %v1110, %v1234
      %v1236 = vpop.f32.mrf.mxu0
      %1237 = vdwg.mxu0
      %v1238 = vmax.f32 %v1176, 0.0
      %v1239 = vmax.f32 %v1179, 0.0
      %v1240 = vmax.f32 %v1184, 0.0
      %v1241 = vmax.f32 %v1187, 0.0
      %v1242 = vmax.f32 %v1192, 0.0
      %v1243 = vmax.f32 %v1195, 0.0
      %v1244 = vmax.f32 %v1200, 0.0
      %v1245 = vmax.f32 %v1203, 0.0
      %v1246 = vmax.f32 %v1208, 0.0
      %v1247 = vmax.f32 %v1211, 0.0
      %v1248 = vmax.f32 %v1216, 0.0
      %v1249 = vmax.f32 %v1219, 0.0
      %v1250 = vmax.f32 %v1224, 0.0
      %v1251 = vmax.f32 %v1227, 0.0
      %v1252 = vmax.f32 %v1232, 0.0
      %v1253 = vmax.f32 %v1235, 0.0
      %v1254 = vpack.c.bf16 %v1239, %v1238
      %v1255 = vpack.c.bf16 %v1241, %v1240
      %v1256 = vpack.c.bf16 %v1243, %v1242
      %v1257 = vpack.c.bf16 %v1245, %v1244
      %v1258 = vpack.c.bf16 %v1247, %v1246
      %v1259 = vpack.c.bf16 %v1249, %v1248
      %v1260 = vpack.c.bf16 %v1251, %v1250
      %v1261 = vpack.c.bf16 %v1253, %v1252
      %v1262 = vld [vmem:[%s10] sm:$0xf]
      %v1263 = vld [vmem:[%s10 + $0x4] sm:$0xf]
      %v1264 = vld [vmem:[%s10 + $0x8] sm:$0xf]
      %v1265 = vld [vmem:[%s10 + $0xc] sm:$0xf]
      %v1266 = vld [vmem:[%s11] sm:$0x1]
      %v1268 = vlaneseq
      %v1269 = vshrl.u32 %v1268, 7
      %v1270 = vsub.s32 0, %v1269
      %v1271 = vrot.slane %v1266, %v1270
      %v1277 = vunpack.c.l.b16 %v1262
      %v1278 = vunpack.c.l.b16 %v1263
      %v1279 = vunpack.c.l.b16 %v1264
      %v1280 = vunpack.c.l.b16 %v1265
      %v1281 = vpack.c.b16 %v1278, %v1277
      %v1282 = vpack.c.b16 %v1280, %v1279
      %v1286 = vsel %vm754, %v1254, 0
      %v1289 = vsel %vm754, %v1255, 0
      %v1292 = vsel %vm754, %v1256, 0
      %v1295 = vsel %vm754, %v1257, 0
      %v1298 = vsel %vm754, %v1258, 0
      %v1301 = vsel %vm754, %v1259, 0
      %v1304 = vsel %vm754, %v1260, 0
      %v1307 = vsel %vm754, %v1261, 0
      %1309 = vmatprep.subr.bf16.mxu0 0
      %1310 = vmatpush1.bf16.msra.mxu0 0
      %1311 = vmatprep.subr.bf16.mxu0 0
      %1312 = vmatpush1.bf16.msra.mxu0 0
      %1313 = vmatprep.subr.bf16.mxu0 0
      %1314 = vmatpush1.bf16.msra.mxu0 0
      %1315 = vmatprep.subr.bf16.mxu0 0
      %1316 = vmatpush1.bf16.msra.mxu0 0
      %1317 = vmatprep.subr.bf16.mxu0 0
      %1318 = vmatpush1.bf16.msra.mxu0 0
      %1319 = vmatprep.subr.bf16.mxu0 0
      %1320 = vmatpush1.bf16.msra.mxu0 0
      %1321 = vmatprep.subr.bf16.mxu0 0
      %1322 = vmatpush1.bf16.msra.mxu0 %v1282
      %1323 = vmatprep.subr.bf16.mxu0 0
      %1324 = vmatpush1.bf16.msra.mxu0 %v1281
      %1325 = vmatprep.subr.bf16.mxu0 0
      %1326 = vmatpush2.bf16.msra.mxu0 0
      %1327 = vmatprep.subr.bf16.mxu0 0
      %1328 = vmatpush2.bf16.msra.mxu0 0
      %1329 = vmatprep.subr.bf16.mxu0 0
      %1330 = vmatpush2.bf16.msra.mxu0 0
      %1331 = vmatprep.subr.bf16.mxu0 0
      %1332 = vmatpush2.bf16.msra.mxu0 0
      %1333 = vmatprep.subr.bf16.mxu0 0
      %1334 = vmatpush2.bf16.msra.mxu0 0
      %1335 = vmatprep.subr.bf16.mxu0 0
      %1336 = vmatpush2.bf16.msra.mxu0 0
      %1337 = vmatprep.subr.bf16.mxu0 0
      %1338 = vmatpush2.bf16.msra.mxu0 0
      %1339 = vmatprep.subr.bf16.mxu0 0
      %1340 = vmatpush2.bf16.msra.mxu0 0
      %1341 = vmatprep.mubr.bf16.mxu0 0
      %1342 = vmatmul.mubr.bf16.gmra.mxu0 %v1286
      %v1343 = vpop.f32.mrf.mxu0
      %v1344 = vadd.f32 %v1271, %v1343
      %v1345 = vpop.f32.mrf.mxu0
      %v1346 = vpop.f32.mrf.mxu0
      %v1347 = vadd.f32 %v1271, %v1346
      %v1348 = vpop.f32.mrf.mxu0
      %1349 = vmatprep.mubr.bf16.mxu0 0
      %1350 = vmatmul.mubr.bf16.gmra.mxu0 %v1289
      %v1351 = vpop.f32.mrf.mxu0
      %v1352 = vadd.f32 %v1271, %v1351
      %v1353 = vpop.f32.mrf.mxu0
      %v1354 = vpop.f32.mrf.mxu0
      %v1355 = vadd.f32 %v1271, %v1354
      %v1356 = vpop.f32.mrf.mxu0
      %1357 = vmatprep.mubr.bf16.mxu0 0
      %1358 = vmatmul.mubr.bf16.gmra.mxu0 %v1292
      %v1359 = vpop.f32.mrf.mxu0
      %v1360 = vadd.f32 %v1271, %v1359
      %v1361 = vpop.f32.mrf.mxu0
      %v1362 = vpop.f32.mrf.mxu0
      %v1363 = vadd.f32 %v1271, %v1362
      %v1364 = vpop.f32.mrf.mxu0
      %1365 = vmatprep.mubr.bf16.mxu0 0
      %1366 = vmatmul.mubr.bf16.gmra.mxu0 %v1295
      %v1367 = vpop.f32.mrf.mxu0
      %v1368 = vadd.f32 %v1271, %v1367
      %v1369 = vpop.f32.mrf.mxu0
      %v1370 = vpop.f32.mrf.mxu0
      %v1371 = vadd.f32 %v1271, %v1370
      %v1372 = vpop.f32.mrf.mxu0
      %1373 = vmatprep.mubr.bf16.mxu0 0
      %1374 = vmatmul.mubr.bf16.gmra.mxu0 %v1298
      %v1375 = vpop.f32.mrf.mxu0
      %v1376 = vadd.f32 %v1271, %v1375
      %v1377 = vpop.f32.mrf.mxu0
      %v1378 = vpop.f32.mrf.mxu0
      %v1379 = vadd.f32 %v1271, %v1378
      %v1380 = vpop.f32.mrf.mxu0
      %1381 = vmatprep.mubr.bf16.mxu0 0
      %1382 = vmatmul.mubr.bf16.gmra.mxu0 %v1301
      %v1383 = vpop.f32.mrf.mxu0
      %v1384 = vadd.f32 %v1271, %v1383
      %v1385 = vpop.f32.mrf.mxu0
      %v1386 = vpop.f32.mrf.mxu0
      %v1387 = vadd.f32 %v1271, %v1386
      %v1388 = vpop.f32.mrf.mxu0
      %1389 = vmatprep.mubr.bf16.mxu0 0
      %1390 = vmatmul.mubr.bf16.gmra.mxu0 %v1304
      %v1391 = vpop.f32.mrf.mxu0
      %v1392 = vadd.f32 %v1271, %v1391
      %v1393 = vpop.f32.mrf.mxu0
      %v1394 = vpop.f32.mrf.mxu0
      %v1395 = vadd.f32 %v1271, %v1394
      %v1396 = vpop.f32.mrf.mxu0
      %1397 = vmatprep.mubr.bf16.mxu0 0
      %1398 = vmatmul.mubr.bf16.gmra.mxu0 %v1307
      %v1399 = vpop.f32.mrf.mxu0
      %v1400 = vadd.f32 %v1271, %v1399
      %v1401 = vpop.f32.mrf.mxu0
      %v1402 = vpop.f32.mrf.mxu0
      %v1403 = vadd.f32 %v1271, %v1402
      %v1404 = vpop.f32.mrf.mxu0
      %1405 = vdwg.mxu0
      %v1406 = vadd.f32 %v856, %v1344
      %v1407 = vadd.f32 %v857, %v1347
      %v1408 = vadd.f32 %v888, %v1352
      %v1409 = vadd.f32 %v889, %v1355
      %v1410 = vadd.f32 %v920, %v1360
      %v1411 = vadd.f32 %v921, %v1363
      %v1412 = vadd.f32 %v952, %v1368
      %v1413 = vadd.f32 %v953, %v1371
      %v1414 = vadd.f32 %v984, %v1376
      %v1415 = vadd.f32 %v985, %v1379
      %v1416 = vadd.f32 %v1016, %v1384
      %v1417 = vadd.f32 %v1017, %v1387
      %v1418 = vadd.f32 %v1048, %v1392
      %v1419 = vadd.f32 %v1049, %v1395
      %v1420 = vadd.f32 %v1080, %v1400
      %v1421 = vadd.f32 %v1081, %v1403
      %1422 = vxpose.xlu0.b32.start [1/16] %v1406, 128
      %1423 = vxpose.xlu0.b32.cont [2/16] %v1407, 128
      %1424 = vxpose.xlu0.b32.cont [3/16] 0.0, 128
      %1425 = vxpose.xlu0.b32.cont [4/16] 0.0, 128
      %1426 = vxpose.xlu0.b32.cont [5/16] 0.0, 128
      %1427 = vxpose.xlu0.b32.cont [6/16] 0.0, 128
      %1428 = vxpose.xlu0.b32.cont [7/16] 0.0, 128
      %1429 = vxpose.xlu0.b32.cont [8/16] 0.0, 128
      %1430 = vxpose.xlu0.b32.cont [9/16] 0.0, 128
      %1431 = vxpose.xlu0.b32.cont [10/16] 0.0, 128
      %1432 = vxpose.xlu0.b32.cont [11/16] 0.0, 128
      %1433 = vxpose.xlu0.b32.cont [12/16] 0.0, 128
      %1434 = vxpose.xlu0.b32.cont [13/16] 0.0, 128
      %1435 = vxpose.xlu0.b32.cont [14/16] 0.0, 128
      %1436 = vxpose.xlu0.b32.cont [15/16] 0.0, 128
      %1437 = vxpose.xlu0.b32.end [16/16] 0.0, 128
      %v1438 = vpop.trf.xlu0
      %v1439 = vpop.trf.xlu0
      %v1440 = vpop.trf.xlu0
      %v1441 = vpop.trf.xlu0
      %v1442 = vpop.trf.xlu0
      %v1443 = vpop.trf.xlu0
      %v1444 = vpop.trf.xlu0
      %v1445 = vpop.trf.xlu0
      %v1446 = vpop.trf.xlu0
      %v1447 = vpop.trf.xlu0
      %v1448 = vpop.trf.xlu0
      %v1449 = vpop.trf.xlu0
      %v1450 = vpop.trf.xlu0
      %v1451 = vpop.trf.xlu0
      %v1452 = vpop.trf.xlu0
      %v1453 = vpop.trf.xlu0
      %1454 = vxpose.xlu0.b32.start [1/16] %v1408, 128
      %1455 = vxpose.xlu0.b32.cont [2/16] %v1409, 128
      %1456 = vxpose.xlu0.b32.cont [3/16] 0.0, 128
      %1457 = vxpose.xlu0.b32.cont [4/16] 0.0, 128
      %1458 = vxpose.xlu0.b32.cont [5/16] 0.0, 128
      %1459 = vxpose.xlu0.b32.cont [6/16] 0.0, 128
      %1460 = vxpose.xlu0.b32.cont [7/16] 0.0, 128
      %1461 = vxpose.xlu0.b32.cont [8/16] 0.0, 128
      %1462 = vxpose.xlu0.b32.cont [9/16] 0.0, 128
      %1463 = vxpose.xlu0.b32.cont [10/16] 0.0, 128
      %1464 = vxpose.xlu0.b32.cont [11/16] 0.0, 128
      %1465 = vxpose.xlu0.b32.cont [12/16] 0.0, 128
      %1466 = vxpose.xlu0.b32.cont [13/16] 0.0, 128
      %1467 = vxpose.xlu0.b32.cont [14/16] 0.0, 128
      %1468 = vxpose.xlu0.b32.cont [15/16] 0.0, 128
      %1469 = vxpose.xlu0.b32.end [16/16] 0.0, 128
      %v1470 = vpop.trf.xlu0
      %v1471 = vpop.trf.xlu0
      %v1472 = vpop.trf.xlu0
      %v1473 = vpop.trf.xlu0
      %v1474 = vpop.trf.xlu0
      %v1475 = vpop.trf.xlu0
      %v1476 = vpop.trf.xlu0
      %v1477 = vpop.trf.xlu0
      %v1478 = vpop.trf.xlu0
      %v1479 = vpop.trf.xlu0
      %v1480 = vpop.trf.xlu0
      %v1481 = vpop.trf.xlu0
      %v1482 = vpop.trf.xlu0
      %v1483 = vpop.trf.xlu0
      %v1484 = vpop.trf.xlu0
      %v1485 = vpop.trf.xlu0
      %1486 = vxpose.xlu0.b32.start [1/16] %v1410, 128
      %1487 = vxpose.xlu0.b32.cont [2/16] %v1411, 128
      %1488 = vxpose.xlu0.b32.cont [3/16] 0.0, 128
      %1489 = vxpose.xlu0.b32.cont [4/16] 0.0, 128
      %1490 = vxpose.xlu0.b32.cont [5/16] 0.0, 128
      %1491 = vxpose.xlu0.b32.cont [6/16] 0.0, 128
      %1492 = vxpose.xlu0.b32.cont [7/16] 0.0, 128
      %1493 = vxpose.xlu0.b32.cont [8/16] 0.0, 128
      %1494 = vxpose.xlu0.b32.cont [9/16] 0.0, 128
      %1495 = vxpose.xlu0.b32.cont [10/16] 0.0, 128
      %1496 = vxpose.xlu0.b32.cont [11/16] 0.0, 128
      %1497 = vxpose.xlu0.b32.cont [12/16] 0.0, 128
      %1498 = vxpose.xlu0.b32.cont [13/16] 0.0, 128
      %1499 = vxpose.xlu0.b32.cont [14/16] 0.0, 128
      %1500 = vxpose.xlu0.b32.cont [15/16] 0.0, 128
      %1501 = vxpose.xlu0.b32.end [16/16] 0.0, 128
      %v1502 = vpop.trf.xlu0
      %v1503 = vpop.trf.xlu0
      %v1504 = vpop.trf.xlu0
      %v1505 = vpop.trf.xlu0
      %v1506 = vpop.trf.xlu0
      %v1507 = vpop.trf.xlu0
      %v1508 = vpop.trf.xlu0
      %v1509 = vpop.trf.xlu0
      %v1510 = vpop.trf.xlu0
      %v1511 = vpop.trf.xlu0
      %v1512 = vpop.trf.xlu0
      %v1513 = vpop.trf.xlu0
      %v1514 = vpop.trf.xlu0
      %v1515 = vpop.trf.xlu0
      %v1516 = vpop.trf.xlu0
      %v1517 = vpop.trf.xlu0
      %1518 = vxpose.xlu0.b32.start [1/16] %v1412, 128
      %1519 = vxpose.xlu0.b32.cont [2/16] %v1413, 128
      %1520 = vxpose.xlu0.b32.cont [3/16] 0.0, 128
      %1521 = vxpose.xlu0.b32.cont [4/16] 0.0, 128
      %1522 = vxpose.xlu0.b32.cont [5/16] 0.0, 128
      %1523 = vxpose.xlu0.b32.cont [6/16] 0.0, 128
      %1524 = vxpose.xlu0.b32.cont [7/16] 0.0, 128
      %1525 = vxpose.xlu0.b32.cont [8/16] 0.0, 128
      %1526 = vxpose.xlu0.b32.cont [9/16] 0.0, 128
      %1527 = vxpose.xlu0.b32.cont [10/16] 0.0, 128
      %1528 = vxpose.xlu0.b32.cont [11/16] 0.0, 128
      %1529 = vxpose.xlu0.b32.cont [12/16] 0.0, 128
      %1530 = vxpose.xlu0.b32.cont [13/16] 0.0, 128
      %1531 = vxpose.xlu0.b32.cont [14/16] 0.0, 128
      %1532 = vxpose.xlu0.b32.cont [15/16] 0.0, 128
      %1533 = vxpose.xlu0.b32.end [16/16] 0.0, 128
      %v1534 = vpop.trf.xlu0
      %v1535 = vpop.trf.xlu0
      %v1536 = vpop.trf.xlu0
      %v1537 = vpop.trf.xlu0
      %v1538 = vpop.trf.xlu0
      %v1539 = vpop.trf.xlu0
      %v1540 = vpop.trf.xlu0
      %v1541 = vpop.trf.xlu0
      %v1542 = vpop.trf.xlu0
      %v1543 = vpop.trf.xlu0
      %v1544 = vpop.trf.xlu0
      %v1545 = vpop.trf.xlu0
      %v1546 = vpop.trf.xlu0
      %v1547 = vpop.trf.xlu0
      %v1548 = vpop.trf.xlu0
      %v1549 = vpop.trf.xlu0
      %1550 = vxpose.xlu0.b32.start [1/16] %v1414, 128
      %1551 = vxpose.xlu0.b32.cont [2/16] %v1415, 128
      %1552 = vxpose.xlu0.b32.cont [3/16] 0.0, 128
      %1553 = vxpose.xlu0.b32.cont [4/16] 0.0, 128
      %1554 = vxpose.xlu0.b32.cont [5/16] 0.0, 128
      %1555 = vxpose.xlu0.b32.cont [6/16] 0.0, 128
      %1556 = vxpose.xlu0.b32.cont [7/16] 0.0, 128
      %1557 = vxpose.xlu0.b32.cont [8/16] 0.0, 128
      %1558 = vxpose.xlu0.b32.cont [9/16] 0.0, 128
      %1559 = vxpose.xlu0.b32.cont [10/16] 0.0, 128
      %1560 = vxpose.xlu0.b32.cont [11/16] 0.0, 128
      %1561 = vxpose.xlu0.b32.cont [12/16] 0.0, 128
      %1562 = vxpose.xlu0.b32.cont [13/16] 0.0, 128
      %1563 = vxpose.xlu0.b32.cont [14/16] 0.0, 128
      %1564 = vxpose.xlu0.b32.cont [15/16] 0.0, 128
      %1565 = vxpose.xlu0.b32.end [16/16] 0.0, 128
      %v1566 = vpop.trf.xlu0
      %v1567 = vpop.trf.xlu0
      %v1568 = vpop.trf.xlu0
      %v1569 = vpop.trf.xlu0
      %v1570 = vpop.trf.xlu0
      %v1571 = vpop.trf.xlu0
      %v1572 = vpop.trf.xlu0
      %v1573 = vpop.trf.xlu0
      %v1574 = vpop.trf.xlu0
      %v1575 = vpop.trf.xlu0
      %v1576 = vpop.trf.xlu0
      %v1577 = vpop.trf.xlu0
      %v1578 = vpop.trf.xlu0
      %v1579 = vpop.trf.xlu0
      %v1580 = vpop.trf.xlu0
      %v1581 = vpop.trf.xlu0
      %1582 = vxpose.xlu0.b32.start [1/16] %v1416, 128
      %1583 = vxpose.xlu0.b32.cont [2/16] %v1417, 128
      %1584 = vxpose.xlu0.b32.cont [3/16] 0.0, 128
      %1585 = vxpose.xlu0.b32.cont [4/16] 0.0, 128
      %1586 = vxpose.xlu0.b32.cont [5/16] 0.0, 128
      %1587 = vxpose.xlu0.b32.cont [6/16] 0.0, 128
      %1588 = vxpose.xlu0.b32.cont [7/16] 0.0, 128
      %1589 = vxpose.xlu0.b32.cont [8/16] 0.0, 128
      %1590 = vxpose.xlu0.b32.cont [9/16] 0.0, 128
      %1591 = vxpose.xlu0.b32.cont [10/16] 0.0, 128
      %1592 = vxpose.xlu0.b32.cont [11/16] 0.0, 128
      %1593 = vxpose.xlu0.b32.cont [12/16] 0.0, 128
      %1594 = vxpose.xlu0.b32.cont [13/16] 0.0, 128
      %1595 = vxpose.xlu0.b32.cont [14/16] 0.0, 128
      %1596 = vxpose.xlu0.b32.cont [15/16] 0.0, 128
      %1597 = vxpose.xlu0.b32.end [16/16] 0.0, 128
      %v1598 = vpop.trf.xlu0
      %v1599 = vpop.trf.xlu0
      %v1600 = vpop.trf.xlu0
      %v1601 = vpop.trf.xlu0
      %v1602 = vpop.trf.xlu0
      %v1603 = vpop.trf.xlu0
      %v1604 = vpop.trf.xlu0
      %v1605 = vpop.trf.xlu0
      %v1606 = vpop.trf.xlu0
      %v1607 = vpop.trf.xlu0
      %v1608 = vpop.trf.xlu0
      %v1609 = vpop.trf.xlu0
      %v1610 = vpop.trf.xlu0
      %v1611 = vpop.trf.xlu0
      %v1612 = vpop.trf.xlu0
      %v1613 = vpop.trf.xlu0
      %1614 = vxpose.xlu0.b32.start [1/16] %v1418, 128
      %1615 = vxpose.xlu0.b32.cont [2/16] %v1419, 128
      %1616 = vxpose.xlu0.b32.cont [3/16] 0.0, 128
      %1617 = vxpose.xlu0.b32.cont [4/16] 0.0, 128
      %1618 = vxpose.xlu0.b32.cont [5/16] 0.0, 128
      %1619 = vxpose.xlu0.b32.cont [6/16] 0.0, 128
      %1620 = vxpose.xlu0.b32.cont [7/16] 0.0, 128
      %1621 = vxpose.xlu0.b32.cont [8/16] 0.0, 128
      %1622 = vxpose.xlu0.b32.cont [9/16] 0.0, 128
      %1623 = vxpose.xlu0.b32.cont [10/16] 0.0, 128
      %1624 = vxpose.xlu0.b32.cont [11/16] 0.0, 128
      %1625 = vxpose.xlu0.b32.cont [12/16] 0.0, 128
      %1626 = vxpose.xlu0.b32.cont [13/16] 0.0, 128
      %1627 = vxpose.xlu0.b32.cont [14/16] 0.0, 128
      %1628 = vxpose.xlu0.b32.cont [15/16] 0.0, 128
      %1629 = vxpose.xlu0.b32.end [16/16] 0.0, 128
      %v1630 = vpop.trf.xlu0
      %v1631 = vpop.trf.xlu0
      %v1632 = vpop.trf.xlu0
      %v1633 = vpop.trf.xlu0
      %v1634 = vpop.trf.xlu0
      %v1635 = vpop.trf.xlu0
      %v1636 = vpop.trf.xlu0
      %v1637 = vpop.trf.xlu0
      %v1638 = vpop.trf.xlu0
      %v1639 = vpop.trf.xlu0
      %v1640 = vpop.trf.xlu0
      %v1641 = vpop.trf.xlu0
      %v1642 = vpop.trf.xlu0
      %v1643 = vpop.trf.xlu0
      %v1644 = vpop.trf.xlu0
      %v1645 = vpop.trf.xlu0
      %1646 = vxpose.xlu0.b32.start [1/16] %v1420, 128
      %1647 = vxpose.xlu0.b32.cont [2/16] %v1421, 128
      %1648 = vxpose.xlu0.b32.cont [3/16] 0.0, 128
      %1649 = vxpose.xlu0.b32.cont [4/16] 0.0, 128
      %1650 = vxpose.xlu0.b32.cont [5/16] 0.0, 128
      %1651 = vxpose.xlu0.b32.cont [6/16] 0.0, 128
      %1652 = vxpose.xlu0.b32.cont [7/16] 0.0, 128
      %1653 = vxpose.xlu0.b32.cont [8/16] 0.0, 128
      %1654 = vxpose.xlu0.b32.cont [9/16] 0.0, 128
      %1655 = vxpose.xlu0.b32.cont [10/16] 0.0, 128
      %1656 = vxpose.xlu0.b32.cont [11/16] 0.0, 128
      %1657 = vxpose.xlu0.b32.cont [12/16] 0.0, 128
      %1658 = vxpose.xlu0.b32.cont [13/16] 0.0, 128
      %1659 = vxpose.xlu0.b32.cont [14/16] 0.0, 128
      %1660 = vxpose.xlu0.b32.cont [15/16] 0.0, 128
      %1661 = vxpose.xlu0.b32.end [16/16] 0.0, 128
      %v1662 = vpop.trf.xlu0
      %v1663 = vpop.trf.xlu0
      %v1664 = vpop.trf.xlu0
      %v1665 = vpop.trf.xlu0
      %v1666 = vpop.trf.xlu0
      %v1667 = vpop.trf.xlu0
      %v1668 = vpop.trf.xlu0
      %v1669 = vpop.trf.xlu0
      %v1670 = vpop.trf.xlu0
      %v1671 = vpop.trf.xlu0
      %v1672 = vpop.trf.xlu0
      %v1673 = vpop.trf.xlu0
      %v1674 = vpop.trf.xlu0
      %v1675 = vpop.trf.xlu0
      %v1676 = vpop.trf.xlu0
      %v1677 = vpop.trf.xlu0
      %v1678 = vpack.c.bf16 %v1470, %v1438
      %v1679 = vpack.c.bf16 %v1534, %v1502
      %v1680 = vpack.c.bf16 %v1598, %v1566
      %v1681 = vpack.c.bf16 %v1662, %v1630
      %s1682 = scalar_lea.vmem %s4, 8
      %v1683 = vld [vmem:[%s1682] sm:$0xf]
      %v1684 = vld [vmem:[%s1682 + $0x4] sm:$0xf]
      %s1685 = scalar_lea.vmem %s5, 1
      %v1686 = vld [vmem:[%s1685] sm:$0x1]
      %v1688 = vlaneseq
      %v1689 = vshrl.u32 %v1688, 7
      %v1690 = vsub.s32 0, %v1689
      %v1691 = vrot.slane %v1686, %v1690
      %v1695 = vunpack.c.l.b16 %v1683
      %v1696 = vunpack.c.l.b16 %v1684
      %v1697 = vpack.c.b16 %v1696, %v1695
      %v1700 = vsel %vm480, %v1678, 0
      %v1703 = vsel %vm480, %v1679, 0
      %v1706 = vsel %vm480, %v1680, 0
      %v1709 = vsel %vm480, %v1681, 0
      %1711 = vmatprep.subr.bf16.mxu0 0
      %1712 = vmatpush1.bf16.msra.mxu0 0
      %1713 = vmatprep.subr.bf16.mxu0 0
      %1714 = vmatpush1.bf16.msra.mxu0 0
      %1715 = vmatprep.subr.bf16.mxu0 0
      %1716 = vmatpush1.bf16.msra.mxu0 0
      %1717 = vmatprep.subr.bf16.mxu0 0
      %1718 = vmatpush1.bf16.msra.mxu0 0
      %1719 = vmatprep.subr.bf16.mxu0 0
      %1720 = vmatpush1.bf16.msra.mxu0 0
      %1721 = vmatprep.subr.bf16.mxu0 0
      %1722 = vmatpush1.bf16.msra.mxu0 0
      %1723 = vmatprep.subr.bf16.mxu0 0
      %1724 = vmatpush1.bf16.msra.mxu0 0
      %1725 = vmatprep.subr.bf16.mxu0 0
      %1726 = vmatpush1.bf16.msra.mxu0 %v1697
      %1727 = vmatprep.subr.bf16.mxu0 0
      %1728 = vmatpush2.bf16.msra.mxu0 0
      %1729 = vmatprep.subr.bf16.mxu0 0
      %1730 = vmatpush2.bf16.msra.mxu0 0
      %1731 = vmatprep.subr.bf16.mxu0 0
      %1732 = vmatpush2.bf16.msra.mxu0 0
      %1733 = vmatprep.subr.bf16.mxu0 0
      %1734 = vmatpush2.bf16.msra.mxu0 0
      %1735 = vmatprep.subr.bf16.mxu0 0
      %1736 = vmatpush2.bf16.msra.mxu0 0
      %1737 = vmatprep.subr.bf16.mxu0 0
      %1738 = vmatpush2.bf16.msra.mxu0 0
      %1739 = vmatprep.subr.bf16.mxu0 0
      %1740 = vmatpush2.bf16.msra.mxu0 0
      %1741 = vmatprep.subr.bf16.mxu0 0
      %1742 = vmatpush2.bf16.msra.mxu0 0
      %1743 = vmatprep.mubr.bf16.mxu0 0
      %1744 = vmatmul.mubr.bf16.gmra.mxu0 %v1700
      %v1745 = vpop.f32.mrf.mxu0
      %v1746 = vadd.f32 %v1691, %v1745
      %v1747 = vpop.f32.mrf.mxu0
      %v1748 = vpop.f32.mrf.mxu0
      %v1749 = vadd.f32 %v1691, %v1748
      %v1750 = vpop.f32.mrf.mxu0
      %1751 = vmatprep.mubr.bf16.mxu0 0
      %1752 = vmatmul.mubr.bf16.gmra.mxu0 %v1703
      %v1753 = vpop.f32.mrf.mxu0
      %v1754 = vadd.f32 %v1691, %v1753
      %v1755 = vpop.f32.mrf.mxu0
      %v1756 = vpop.f32.mrf.mxu0
      %v1757 = vadd.f32 %v1691, %v1756
      %v1758 = vpop.f32.mrf.mxu0
      %1759 = vmatprep.mubr.bf16.mxu0 0
      %1760 = vmatmul.mubr.bf16.gmra.mxu0 %v1706
      %v1761 = vpop.f32.mrf.mxu0
      %v1762 = vadd.f32 %v1691, %v1761
      %v1763 = vpop.f32.mrf.mxu0
      %v1764 = vpop.f32.mrf.mxu0
      %v1765 = vadd.f32 %v1691, %v1764
      %v1766 = vpop.f32.mrf.mxu0
      %1767 = vmatprep.mubr.bf16.mxu0 0
      %1768 = vmatmul.mubr.bf16.gmra.mxu0 %v1709
      %v1769 = vpop.f32.mrf.mxu0
      %v1770 = vadd.f32 %v1691, %v1769
      %v1771 = vpop.f32.mrf.mxu0
      %v1772 = vpop.f32.mrf.mxu0
      %v1773 = vadd.f32 %v1691, %v1772
      %v1774 = vpop.f32.mrf.mxu0
      %1775 = vdwg.mxu0
      %v1776 = vmax.f32 %v1746, 0.0
      %v1777 = vmax.f32 %v1749, 0.0
      %v1778 = vmax.f32 %v1754, 0.0
      %v1779 = vmax.f32 %v1757, 0.0
      %v1780 = vmax.f32 %v1762, 0.0
      %v1781 = vmax.f32 %v1765, 0.0
      %v1782 = vmax.f32 %v1770, 0.0
      %v1783 = vmax.f32 %v1773, 0.0
      %v1784 = vpack.c.bf16 %v1777, %v1776
      %v1785 = vpack.c.bf16 %v1779, %v1778
      %v1786 = vpack.c.bf16 %v1781, %v1780
      %v1787 = vpack.c.bf16 %v1783, %v1782
      %s1788 = scalar_lea.vmem %s6, 16
      %v1789 = vld [vmem:[%s1788] sm:$0xf]
      %v1790 = vld [vmem:[%s1788 + $0x4] sm:$0xf]
      %v1791 = vld [vmem:[%s1788 + $0x8] sm:$0xf]
      %v1792 = vld [vmem:[%s1788 + $0xc] sm:$0xf]
      %s1793 = scalar_lea.vmem %s7, 1
      %v1794 = vld [vmem:[%s1793] sm:$0x1]
      %v1796 = vlaneseq
      %v1797 = vshrl.u32 %v1796, 7
      %v1798 = vsub.s32 0, %v1797
      %v1799 = vrot.slane %v1794, %v1798
      %v1805 = vunpack.c.l.b16 %v1789
      %v1806 = vunpack.c.l.b16 %v1790
      %v1807 = vunpack.c.l.b16 %v1791
      %v1808 = vunpack.c.l.b16 %v1792
      %v1809 = vpack.c.b16 %v1806, %v1805
      %v1810 = vpack.c.b16 %v1808, %v1807
      %v1814 = vsel %vm754, %v1784, 0
      %v1817 = vsel %vm754, %v1785, 0
      %v1820 = vsel %vm754, %v1786, 0
      %v1823 = vsel %vm754, %v1787, 0
      %1825 = vmatprep.subr.bf16.mxu0 0
      %1826 = vmatpush1.bf16.msra.mxu0 0
      %1827 = vmatprep.subr.bf16.mxu0 0
      %1828 = vmatpush1.bf16.msra.mxu0 0
      %1829 = vmatprep.subr.bf16.mxu0 0
      %1830 = vmatpush1.bf16.msra.mxu0 0
      %1831 = vmatprep.subr.bf16.mxu0 0
      %1832 = vmatpush1.bf16.msra.mxu0 0
      %1833 = vmatprep.subr.bf16.mxu0 0
      %1834 = vmatpush1.bf16.msra.mxu0 0
      %1835 = vmatprep.subr.bf16.mxu0 0
      %1836 = vmatpush1.bf16.msra.mxu0 0
      %1837 = vmatprep.subr.bf16.mxu0 0
      %1838 = vmatpush1.bf16.msra.mxu0 %v1810
      %1839 = vmatprep.subr.bf16.mxu0 0
      %1840 = vmatpush1.bf16.msra.mxu0 %v1809
      %1841 = vmatprep.subr.bf16.mxu0 0
      %1842 = vmatpush2.bf16.msra.mxu0 0
      %1843 = vmatprep.subr.bf16.mxu0 0
      %1844 = vmatpush2.bf16.msra.mxu0 0
      %1845 = vmatprep.subr.bf16.mxu0 0
      %1846 = vmatpush2.bf16.msra.mxu0 0
      %1847 = vmatprep.subr.bf16.mxu0 0
      %1848 = vmatpush2.bf16.msra.mxu0 0
      %1849 = vmatprep.subr.bf16.mxu0 0
      %1850 = vmatpush2.bf16.msra.mxu0 0
      %1851 = vmatprep.subr.bf16.mxu0 0
      %1852 = vmatpush2.bf16.msra.mxu0 0
      %1853 = vmatprep.subr.bf16.mxu0 0
      %1854 = vmatpush2.bf16.msra.mxu0 0
      %1855 = vmatprep.subr.bf16.mxu0 0
      %1856 = vmatpush2.bf16.msra.mxu0 0
      %1857 = vmatprep.mubr.bf16.mxu0 0
      %1858 = vmatmul.mubr.bf16.gmra.mxu0 %v1814
      %v1859 = vpop.f32.mrf.mxu0
      %v1860 = vadd.f32 %v1799, %v1859
      %v1861 = vpop.f32.mrf.mxu0
      %v1862 = vpop.f32.mrf.mxu0
      %v1863 = vadd.f32 %v1799, %v1862
      %v1864 = vpop.f32.mrf.mxu0
      %1865 = vmatprep.mubr.bf16.mxu0 0
      %1866 = vmatmul.mubr.bf16.gmra.mxu0 %v1817
      %v1867 = vpop.f32.mrf.mxu0
      %v1868 = vadd.f32 %v1799, %v1867
      %v1869 = vpop.f32.mrf.mxu0
      %v1870 = vpop.f32.mrf.mxu0
      %v1871 = vadd.f32 %v1799, %v1870
      %v1872 = vpop.f32.mrf.mxu0
      %1873 = vmatprep.mubr.bf16.mxu0 0
      %1874 = vmatmul.mubr.bf16.gmra.mxu0 %v1820
      %v1875 = vpop.f32.mrf.mxu0
      %v1876 = vadd.f32 %v1799, %v1875
      %v1877 = vpop.f32.mrf.mxu0
      %v1878 = vpop.f32.mrf.mxu0
      %v1879 = vadd.f32 %v1799, %v1878
      %v1880 = vpop.f32.mrf.mxu0
      %1881 = vmatprep.mubr.bf16.mxu0 0
      %1882 = vmatmul.mubr.bf16.gmra.mxu0 %v1823
      %v1883 = vpop.f32.mrf.mxu0
      %v1884 = vadd.f32 %v1799, %v1883
      %v1885 = vpop.f32.mrf.mxu0
      %v1886 = vpop.f32.mrf.mxu0
      %v1887 = vadd.f32 %v1799, %v1886
      %v1888 = vpop.f32.mrf.mxu0
      %1889 = vdwg.mxu0
      %v1890 = vadd.f32 %v1438, %v1860
      %v1891 = vadd.f32 %v1470, %v1863
      %v1892 = vadd.f32 %v1502, %v1868
      %v1893 = vadd.f32 %v1534, %v1871
      %v1894 = vadd.f32 %v1566, %v1876
      %v1895 = vadd.f32 %v1598, %v1879
      %v1896 = vadd.f32 %v1630, %v1884
      %v1897 = vadd.f32 %v1662, %v1887
      %1898 = vxpose.xlu0.b32.start [1/16] %v1890, 128
      %1899 = vxpose.xlu0.b32.cont [2/16] 0.0, 128
      %1900 = vxpose.xlu0.b32.cont [3/16] 0.0, 128
      %1901 = vxpose.xlu0.b32.cont [4/16] 0.0, 128
      %1902 = vxpose.xlu0.b32.cont [5/16] 0.0, 128
      %1903 = vxpose.xlu0.b32.cont [6/16] 0.0, 128
      %1904 = vxpose.xlu0.b32.cont [7/16] 0.0, 128
      %1905 = vxpose.xlu0.b32.cont [8/16] 0.0, 128
      %1906 = vxpose.xlu0.b32.cont [9/16] 0.0, 128
      %1907 = vxpose.xlu0.b32.cont [10/16] 0.0, 128
      %1908 = vxpose.xlu0.b32.cont [11/16] 0.0, 128
      %1909 = vxpose.xlu0.b32.cont [12/16] 0.0, 128
      %1910 = vxpose.xlu0.b32.cont [13/16] 0.0, 128
      %1911 = vxpose.xlu0.b32.cont [14/16] 0.0, 128
      %1912 = vxpose.xlu0.b32.cont [15/16] 0.0, 128
      %1913 = vxpose.xlu0.b32.end [16/16] 0.0, 128
      %v1914 = vpop.trf.xlu0
      %v1915 = vpop.trf.xlu0
      %v1916 = vpop.trf.xlu0
      %v1917 = vpop.trf.xlu0
      %v1918 = vpop.trf.xlu0
      %v1919 = vpop.trf.xlu0
      %v1920 = vpop.trf.xlu0
      %v1921 = vpop.trf.xlu0
      %v1922 = vpop.trf.xlu0
      %v1923 = vpop.trf.xlu0
      %v1924 = vpop.trf.xlu0
      %v1925 = vpop.trf.xlu0
      %v1926 = vpop.trf.xlu0
      %v1927 = vpop.trf.xlu0
      %v1928 = vpop.trf.xlu0
      %v1929 = vpop.trf.xlu0
      %1930 = vxpose.xlu0.b32.start [1/16] %v1891, 128
      %1931 = vxpose.xlu0.b32.cont [2/16] 0.0, 128
      %1932 = vxpose.xlu0.b32.cont [3/16] 0.0, 128
      %1933 = vxpose.xlu0.b32.cont [4/16] 0.0, 128
      %1934 = vxpose.xlu0.b32.cont [5/16] 0.0, 128
      %1935 = vxpose.xlu0.b32.cont [6/16] 0.0, 128
      %1936 = vxpose.xlu0.b32.cont [7/16] 0.0, 128
      %1937 = vxpose.xlu0.b32.cont [8/16] 0.0, 128
      %1938 = vxpose.xlu0.b32.cont [9/16] 0.0, 128
      %1939 = vxpose.xlu0.b32.cont [10/16] 0.0, 128
      %1940 = vxpose.xlu0.b32.cont [11/16] 0.0, 128
      %1941 = vxpose.xlu0.b32.cont [12/16] 0.0, 128
      %1942 = vxpose.xlu0.b32.cont [13/16] 0.0, 128
      %1943 = vxpose.xlu0.b32.cont [14/16] 0.0, 128
      %1944 = vxpose.xlu0.b32.cont [15/16] 0.0, 128
      %1945 = vxpose.xlu0.b32.end [16/16] 0.0, 128
      %v1946 = vpop.trf.xlu0
      %v1947 = vpop.trf.xlu0
      %v1948 = vpop.trf.xlu0
      %v1949 = vpop.trf.xlu0
      %v1950 = vpop.trf.xlu0
      %v1951 = vpop.trf.xlu0
      %v1952 = vpop.trf.xlu0
      %v1953 = vpop.trf.xlu0
      %v1954 = vpop.trf.xlu0
      %v1955 = vpop.trf.xlu0
      %v1956 = vpop.trf.xlu0
      %v1957 = vpop.trf.xlu0
      %v1958 = vpop.trf.xlu0
      %v1959 = vpop.trf.xlu0
      %v1960 = vpop.trf.xlu0
      %v1961 = vpop.trf.xlu0
      %1962 = vxpose.xlu0.b32.start [1/16] %v1892, 128
      %1963 = vxpose.xlu0.b32.cont [2/16] 0.0, 128
      %1964 = vxpose.xlu0.b32.cont [3/16] 0.0, 128
      %1965 = vxpose.xlu0.b32.cont [4/16] 0.0, 128
      %1966 = vxpose.xlu0.b32.cont [5/16] 0.0, 128
      %1967 = vxpose.xlu0.b32.cont [6/16] 0.0, 128
      %1968 = vxpose.xlu0.b32.cont [7/16] 0.0, 128
      %1969 = vxpose.xlu0.b32.cont [8/16] 0.0, 128
      %1970 = vxpose.xlu0.b32.cont [9/16] 0.0, 128
      %1971 = vxpose.xlu0.b32.cont [10/16] 0.0, 128
      %1972 = vxpose.xlu0.b32.cont [11/16] 0.0, 128
      %1973 = vxpose.xlu0.b32.cont [12/16] 0.0, 128
      %1974 = vxpose.xlu0.b32.cont [13/16] 0.0, 128
      %1975 = vxpose.xlu0.b32.cont [14/16] 0.0, 128
      %1976 = vxpose.xlu0.b32.cont [15/16] 0.0, 128
      %1977 = vxpose.xlu0.b32.end [16/16] 0.0, 128
      %v1978 = vpop.trf.xlu0
      %v1979 = vpop.trf.xlu0
      %v1980 = vpop.trf.xlu0
      %v1981 = vpop.trf.xlu0
      %v1982 = vpop.trf.xlu0
      %v1983 = vpop.trf.xlu0
      %v1984 = vpop.trf.xlu0
      %v1985 = vpop.trf.xlu0
      %v1986 = vpop.trf.xlu0
      %v1987 = vpop.trf.xlu0
      %v1988 = vpop.trf.xlu0
      %v1989 = vpop.trf.xlu0
      %v1990 = vpop.trf.xlu0
      %v1991 = vpop.trf.xlu0
      %v1992 = vpop.trf.xlu0
      %v1993 = vpop.trf.xlu0
      %1994 = vxpose.xlu0.b32.start [1/16] %v1893, 128
      %1995 = vxpose.xlu0.b32.cont [2/16] 0.0, 128
      %1996 = vxpose.xlu0.b32.cont [3/16] 0.0, 128
      %1997 = vxpose.xlu0.b32.cont [4/16] 0.0, 128
      %1998 = vxpose.xlu0.b32.cont [5/16] 0.0, 128
      %1999 = vxpose.xlu0.b32.cont [6/16] 0.0, 128
      %2000 = vxpose.xlu0.b32.cont [7/16] 0.0, 128
      %2001 = vxpose.xlu0.b32.cont [8/16] 0.0, 128
      %2002 = vxpose.xlu0.b32.cont [9/16] 0.0, 128
      %2003 = vxpose.xlu0.b32.cont [10/16] 0.0, 128
      %2004 = vxpose.xlu0.b32.cont [11/16] 0.0, 128
      %2005 = vxpose.xlu0.b32.cont [12/16] 0.0, 128
      %2006 = vxpose.xlu0.b32.cont [13/16] 0.0, 128
      %2007 = vxpose.xlu0.b32.cont [14/16] 0.0, 128
      %2008 = vxpose.xlu0.b32.cont [15/16] 0.0, 128
      %2009 = vxpose.xlu0.b32.end [16/16] 0.0, 128
      %v2010 = vpop.trf.xlu0
      %v2011 = vpop.trf.xlu0
      %v2012 = vpop.trf.xlu0
      %v2013 = vpop.trf.xlu0
      %v2014 = vpop.trf.xlu0
      %v2015 = vpop.trf.xlu0
      %v2016 = vpop.trf.xlu0
      %v2017 = vpop.trf.xlu0
      %v2018 = vpop.trf.xlu0
      %v2019 = vpop.trf.xlu0
      %v2020 = vpop.trf.xlu0
      %v2021 = vpop.trf.xlu0
      %v2022 = vpop.trf.xlu0
      %v2023 = vpop.trf.xlu0
      %v2024 = vpop.trf.xlu0
      %v2025 = vpop.trf.xlu0
      %2026 = vxpose.xlu0.b32.start [1/16] %v1894, 128
      %2027 = vxpose.xlu0.b32.cont [2/16] 0.0, 128
      %2028 = vxpose.xlu0.b32.cont [3/16] 0.0, 128
      %2029 = vxpose.xlu0.b32.cont [4/16] 0.0, 128
      %2030 = vxpose.xlu0.b32.cont [5/16] 0.0, 128
      %2031 = vxpose.xlu0.b32.cont [6/16] 0.0, 128
      %2032 = vxpose.xlu0.b32.cont [7/16] 0.0, 128
      %2033 = vxpose.xlu0.b32.cont [8/16] 0.0, 128
      %2034 = vxpose.xlu0.b32.cont [9/16] 0.0, 128
      %2035 = vxpose.xlu0.b32.cont [10/16] 0.0, 128
      %2036 = vxpose.xlu0.b32.cont [11/16] 0.0, 128
      %2037 = vxpose.xlu0.b32.cont [12/16] 0.0, 128
      %2038 = vxpose.xlu0.b32.cont [13/16] 0.0, 128
      %2039 = vxpose.xlu0.b32.cont [14/16] 0.0, 128
      %2040 = vxpose.xlu0.b32.cont [15/16] 0.0, 128
      %2041 = vxpose.xlu0.b32.end [16/16] 0.0, 128
      %v2042 = vpop.trf.xlu0
      %v2043 = vpop.trf.xlu0
      %v2044 = vpop.trf.xlu0
      %v2045 = vpop.trf.xlu0
      %v2046 = vpop.trf.xlu0
      %v2047 = vpop.trf.xlu0
      %v2048 = vpop.trf.xlu0
      %v2049 = vpop.trf.xlu0
      %v2050 = vpop.trf.xlu0
      %v2051 = vpop.trf.xlu0
      %v2052 = vpop.trf.xlu0
      %v2053 = vpop.trf.xlu0
      %v2054 = vpop.trf.xlu0
      %v2055 = vpop.trf.xlu0
      %v2056 = vpop.trf.xlu0
      %v2057 = vpop.trf.xlu0
      %2058 = vxpose.xlu0.b32.start [1/16] %v1895, 128
      %2059 = vxpose.xlu0.b32.cont [2/16] 0.0, 128
      %2060 = vxpose.xlu0.b32.cont [3/16] 0.0, 128
      %2061 = vxpose.xlu0.b32.cont [4/16] 0.0, 128
      %2062 = vxpose.xlu0.b32.cont [5/16] 0.0, 128
      %2063 = vxpose.xlu0.b32.cont [6/16] 0.0, 128
      %2064 = vxpose.xlu0.b32.cont [7/16] 0.0, 128
      %2065 = vxpose.xlu0.b32.cont [8/16] 0.0, 128
      %2066 = vxpose.xlu0.b32.cont [9/16] 0.0, 128
      %2067 = vxpose.xlu0.b32.cont [10/16] 0.0, 128
      %2068 = vxpose.xlu0.b32.cont [11/16] 0.0, 128
      %2069 = vxpose.xlu0.b32.cont [12/16] 0.0, 128
      %2070 = vxpose.xlu0.b32.cont [13/16] 0.0, 128
      %2071 = vxpose.xlu0.b32.cont [14/16] 0.0, 128
      %2072 = vxpose.xlu0.b32.cont [15/16] 0.0, 128
      %2073 = vxpose.xlu0.b32.end [16/16] 0.0, 128
      %v2074 = vpop.trf.xlu0
      %v2075 = vpop.trf.xlu0
      %v2076 = vpop.trf.xlu0
      %v2077 = vpop.trf.xlu0
      %v2078 = vpop.trf.xlu0
      %v2079 = vpop.trf.xlu0
      %v2080 = vpop.trf.xlu0
      %v2081 = vpop.trf.xlu0
      %v2082 = vpop.trf.xlu0
      %v2083 = vpop.trf.xlu0
      %v2084 = vpop.trf.xlu0
      %v2085 = vpop.trf.xlu0
      %v2086 = vpop.trf.xlu0
      %v2087 = vpop.trf.xlu0
      %v2088 = vpop.trf.xlu0
      %v2089 = vpop.trf.xlu0
      %2090 = vxpose.xlu0.b32.start [1/16] %v1896, 128
      %2091 = vxpose.xlu0.b32.cont [2/16] 0.0, 128
      %2092 = vxpose.xlu0.b32.cont [3/16] 0.0, 128
      %2093 = vxpose.xlu0.b32.cont [4/16] 0.0, 128
      %2094 = vxpose.xlu0.b32.cont [5/16] 0.0, 128
      %2095 = vxpose.xlu0.b32.cont [6/16] 0.0, 128
      %2096 = vxpose.xlu0.b32.cont [7/16] 0.0, 128
      %2097 = vxpose.xlu0.b32.cont [8/16] 0.0, 128
      %2098 = vxpose.xlu0.b32.cont [9/16] 0.0, 128
      %2099 = vxpose.xlu0.b32.cont [10/16] 0.0, 128
      %2100 = vxpose.xlu0.b32.cont [11/16] 0.0, 128
      %2101 = vxpose.xlu0.b32.cont [12/16] 0.0, 128
      %2102 = vxpose.xlu0.b32.cont [13/16] 0.0, 128
      %2103 = vxpose.xlu0.b32.cont [14/16] 0.0, 128
      %2104 = vxpose.xlu0.b32.cont [15/16] 0.0, 128
      %2105 = vxpose.xlu0.b32.end [16/16] 0.0, 128
      %v2106 = vpop.trf.xlu0
      %v2107 = vpop.trf.xlu0
      %v2108 = vpop.trf.xlu0
      %v2109 = vpop.trf.xlu0
      %v2110 = vpop.trf.xlu0
      %v2111 = vpop.trf.xlu0
      %v2112 = vpop.trf.xlu0
      %v2113 = vpop.trf.xlu0
      %v2114 = vpop.trf.xlu0
      %v2115 = vpop.trf.xlu0
      %v2116 = vpop.trf.xlu0
      %v2117 = vpop.trf.xlu0
      %v2118 = vpop.trf.xlu0
      %v2119 = vpop.trf.xlu0
      %v2120 = vpop.trf.xlu0
      %v2121 = vpop.trf.xlu0
      %2122 = vxpose.xlu0.b32.start [1/16] %v1897, 128
      %2123 = vxpose.xlu0.b32.cont [2/16] 0.0, 128
      %2124 = vxpose.xlu0.b32.cont [3/16] 0.0, 128
      %2125 = vxpose.xlu0.b32.cont [4/16] 0.0, 128
      %2126 = vxpose.xlu0.b32.cont [5/16] 0.0, 128
      %2127 = vxpose.xlu0.b32.cont [6/16] 0.0, 128
      %2128 = vxpose.xlu0.b32.cont [7/16] 0.0, 128
      %2129 = vxpose.xlu0.b32.cont [8/16] 0.0, 128
      %2130 = vxpose.xlu0.b32.cont [9/16] 0.0, 128
      %2131 = vxpose.xlu0.b32.cont [10/16] 0.0, 128
      %2132 = vxpose.xlu0.b32.cont [11/16] 0.0, 128
      %2133 = vxpose.xlu0.b32.cont [12/16] 0.0, 128
      %2134 = vxpose.xlu0.b32.cont [13/16] 0.0, 128
      %2135 = vxpose.xlu0.b32.cont [14/16] 0.0, 128
      %2136 = vxpose.xlu0.b32.cont [15/16] 0.0, 128
      %2137 = vxpose.xlu0.b32.end [16/16] 0.0, 128
      %v2138 = vpop.trf.xlu0
      %v2139 = vpop.trf.xlu0
      %v2140 = vpop.trf.xlu0
      %v2141 = vpop.trf.xlu0
      %v2142 = vpop.trf.xlu0
      %v2143 = vpop.trf.xlu0
      %v2144 = vpop.trf.xlu0
      %v2145 = vpop.trf.xlu0
      %v2146 = vpop.trf.xlu0
      %v2147 = vpop.trf.xlu0
      %v2148 = vpop.trf.xlu0
      %v2149 = vpop.trf.xlu0
      %v2150 = vpop.trf.xlu0
      %v2151 = vpop.trf.xlu0
      %v2152 = vpop.trf.xlu0
      %v2153 = vpop.trf.xlu0
      %v2154 = vpack.c.bf16 %v1915, %v1914
      %v2155 = vpack.c.bf16 %v1947, %v1946
      %v2156 = vpack.c.bf16 %v1979, %v1978
      %v2157 = vpack.c.bf16 %v2011, %v2010
      %v2158 = vpack.c.bf16 %v2043, %v2042
      %v2159 = vpack.c.bf16 %v2075, %v2074
      %v2160 = vpack.c.bf16 %v2107, %v2106
      %v2161 = vpack.c.bf16 %v2139, %v2138
      %s2162 = scalar_lea.vmem %s8, 4
      %v2163 = vld [vmem:[%s2162] sm:$0xf]
      %s2164 = scalar_lea.vmem %s9, 1
      %v2165 = vld [vmem:[%s2164] sm:$0x1]
      %v2167 = vlaneseq
      %v2168 = vshrl.u32 %v2167, 7
      %v2169 = vsub.s32 0, %v2168
      %v2170 = vrot.slane %v2165, %v2169
      %v2173 = vsel %vm1112, %v2154, 0
      %v2176 = vsel %vm1112, %v2155, 0
      %v2179 = vsel %vm1112, %v2156, 0
      %v2182 = vsel %vm1112, %v2157, 0
      %v2185 = vsel %vm1112, %v2158, 0
      %v2188 = vsel %vm1112, %v2159, 0
      %v2191 = vsel %vm1112, %v2160, 0
      %v2194 = vsel %vm1112, %v2161, 0
      %v2197 = vsel %vm1137, %v2163, 0
      %2199 = vmatprep.subr.bf16.mxu0 0
      %2200 = vmatpush1.bf16.msra.mxu0 0
      %2201 = vmatprep.subr.bf16.mxu0 0
      %2202 = vmatpush1.bf16.msra.mxu0 0
      %2203 = vmatprep.subr.bf16.mxu0 0
      %2204 = vmatpush1.bf16.msra.mxu0 0
      %2205 = vmatprep.subr.bf16.mxu0 0
      %2206 = vmatpush1.bf16.msra.mxu0 0
      %2207 = vmatprep.subr.bf16.mxu0 0
      %2208 = vmatpush1.bf16.msra.mxu0 0
      %2209 = vmatprep.subr.bf16.mxu0 0
      %2210 = vmatpush1.bf16.msra.mxu0 0
      %2211 = vmatprep.subr.bf16.mxu0 0
      %2212 = vmatpush1.bf16.msra.mxu0 0
      %2213 = vmatprep.subr.bf16.mxu0 0
      %2214 = vmatpush1.bf16.msra.mxu0 %v2197
      %2215 = vmatprep.subr.bf16.mxu0 0
      %2216 = vmatpush2.bf16.msra.mxu0 0
      %2217 = vmatprep.subr.bf16.mxu0 0
      %2218 = vmatpush2.bf16.msra.mxu0 0
      %2219 = vmatprep.subr.bf16.mxu0 0
      %2220 = vmatpush2.bf16.msra.mxu0 0
      %2221 = vmatprep.subr.bf16.mxu0 0
      %2222 = vmatpush2.bf16.msra.mxu0 0
      %2223 = vmatprep.subr.bf16.mxu0 0
      %2224 = vmatpush2.bf16.msra.mxu0 0
      %2225 = vmatprep.subr.bf16.mxu0 0
      %2226 = vmatpush2.bf16.msra.mxu0 0
      %2227 = vmatprep.subr.bf16.mxu0 0
      %2228 = vmatpush2.bf16.msra.mxu0 0
      %2229 = vmatprep.subr.bf16.mxu0 0
      %2230 = vmatpush2.bf16.msra.mxu0 0
      %2231 = vmatprep.mubr.bf16.mxu0 0
      %2232 = vmatmul.mubr.bf16.gmra.mxu0 %v2173
      %v2233 = vpop.f32.mrf.mxu0
      %v2234 = vadd.f32 %v2170, %v2233
      %v2235 = vpop.f32.mrf.mxu0
      %v2236 = vpop.f32.mrf.mxu0
      %v2237 = vadd.f32 %v2170, %v2236
      %v2238 = vpop.f32.mrf.mxu0
      %2239 = vmatprep.mubr.bf16.mxu0 0
      %2240 = vmatmul.mubr.bf16.gmra.mxu0 %v2176
      %v2241 = vpop.f32.mrf.mxu0
      %v2242 = vadd.f32 %v2170, %v2241
      %v2243 = vpop.f32.mrf.mxu0
      %v2244 = vpop.f32.mrf.mxu0
      %v2245 = vadd.f32 %v2170, %v2244
      %v2246 = vpop.f32.mrf.mxu0
      %2247 = vmatprep.mubr.bf16.mxu0 0
      %2248 = vmatmul.mubr.bf16.gmra.mxu0 %v2179
      %v2249 = vpop.f32.mrf.mxu0
      %v2250 = vadd.f32 %v2170, %v2249
      %v2251 = vpop.f32.mrf.mxu0
      %v2252 = vpop.f32.mrf.mxu0
      %v2253 = vadd.f32 %v2170, %v2252
      %v2254 = vpop.f32.mrf.mxu0
      %2255 = vmatprep.mubr.bf16.mxu0 0
      %2256 = vmatmul.mubr.bf16.gmra.mxu0 %v2182
      %v2257 = vpop.f32.mrf.mxu0
      %v2258 = vadd.f32 %v2170, %v2257
      %v2259 = vpop.f32.mrf.mxu0
      %v2260 = vpop.f32.mrf.mxu0
      %v2261 = vadd.f32 %v2170, %v2260
      %v2262 = vpop.f32.mrf.mxu0
      %2263 = vmatprep.mubr.bf16.mxu0 0
      %2264 = vmatmul.mubr.bf16.gmra.mxu0 %v2185
      %v2265 = vpop.f32.mrf.mxu0
      %v2266 = vadd.f32 %v2170, %v2265
      %v2267 = vpop.f32.mrf.mxu0
      %v2268 = vpop.f32.mrf.mxu0
      %v2269 = vadd.f32 %v2170, %v2268
      %v2270 = vpop.f32.mrf.mxu0
      %2271 = vmatprep.mubr.bf16.mxu0 0
      %2272 = vmatmul.mubr.bf16.gmra.mxu0 %v2188
      %v2273 = vpop.f32.mrf.mxu0
      %v2274 = vadd.f32 %v2170, %v2273
      %v2275 = vpop.f32.mrf.mxu0
      %v2276 = vpop.f32.mrf.mxu0
      %v2277 = vadd.f32 %v2170, %v2276
      %v2278 = vpop.f32.mrf.mxu0
      %2279 = vmatprep.mubr.bf16.mxu0 0
      %2280 = vmatmul.mubr.bf16.gmra.mxu0 %v2191
      %v2281 = vpop.f32.mrf.mxu0
      %v2282 = vadd.f32 %v2170, %v2281
      %v2283 = vpop.f32.mrf.mxu0
      %v2284 = vpop.f32.mrf.mxu0
      %v2285 = vadd.f32 %v2170, %v2284
      %v2286 = vpop.f32.mrf.mxu0
      %2287 = vmatprep.mubr.bf16.mxu0 0
      %2288 = vmatmul.mubr.bf16.gmra.mxu0 %v2194
      %v2289 = vpop.f32.mrf.mxu0
      %v2290 = vadd.f32 %v2170, %v2289
      %v2291 = vpop.f32.mrf.mxu0
      %v2292 = vpop.f32.mrf.mxu0
      %v2293 = vadd.f32 %v2170, %v2292
      %v2294 = vpop.f32.mrf.mxu0
      %2295 = vdwg.mxu0
      %v2296 = vmax.f32 %v2234, 0.0
      %v2297 = vmax.f32 %v2237, 0.0
      %v2298 = vmax.f32 %v2242, 0.0
      %v2299 = vmax.f32 %v2245, 0.0
      %v2300 = vmax.f32 %v2250, 0.0
      %v2301 = vmax.f32 %v2253, 0.0
      %v2302 = vmax.f32 %v2258, 0.0
      %v2303 = vmax.f32 %v2261, 0.0
      %v2304 = vmax.f32 %v2266, 0.0
      %v2305 = vmax.f32 %v2269, 0.0
      %v2306 = vmax.f32 %v2274, 0.0
      %v2307 = vmax.f32 %v2277, 0.0
      %v2308 = vmax.f32 %v2282, 0.0
      %v2309 = vmax.f32 %v2285, 0.0
      %v2310 = vmax.f32 %v2290, 0.0
      %v2311 = vmax.f32 %v2293, 0.0
      %v2312 = vpack.c.bf16 %v2297, %v2296
      %v2313 = vpack.c.bf16 %v2299, %v2298
      %v2314 = vpack.c.bf16 %v2301, %v2300
      %v2315 = vpack.c.bf16 %v2303, %v2302
      %v2316 = vpack.c.bf16 %v2305, %v2304
      %v2317 = vpack.c.bf16 %v2307, %v2306
      %v2318 = vpack.c.bf16 %v2309, %v2308
      %v2319 = vpack.c.bf16 %v2311, %v2310
      %s2320 = scalar_lea.vmem %s10, 16
      %v2321 = vld [vmem:[%s2320] sm:$0xf]
      %v2322 = vld [vmem:[%s2320 + $0x4] sm:$0xf]
      %v2323 = vld [vmem:[%s2320 + $0x8] sm:$0xf]
      %v2324 = vld [vmem:[%s2320 + $0xc] sm:$0xf]
      %s2325 = scalar_lea.vmem %s11, 1
      %v2326 = vld [vmem:[%s2325] sm:$0x1]
      %v2328 = vlaneseq
      %v2329 = vshrl.u32 %v2328, 7
      %v2330 = vsub.s32 0, %v2329
      %v2331 = vrot.slane %v2326, %v2330
      %v2337 = vunpack.c.l.b16 %v2321
      %v2338 = vunpack.c.l.b16 %v2322
      %v2339 = vunpack.c.l.b16 %v2323
      %v2340 = vunpack.c.l.b16 %v2324
      %v2341 = vpack.c.b16 %v2338, %v2337
      %v2342 = vpack.c.b16 %v2340, %v2339
      %v2346 = vsel %vm754, %v2312, 0
      %v2349 = vsel %vm754, %v2313, 0
      %v2352 = vsel %vm754, %v2314, 0
      %v2355 = vsel %vm754, %v2315, 0
      %v2358 = vsel %vm754, %v2316, 0
      %v2361 = vsel %vm754, %v2317, 0
      %v2364 = vsel %vm754, %v2318, 0
      %v2367 = vsel %vm754, %v2319, 0
      %2369 = vmatprep.subr.bf16.mxu0 0
      %2370 = vmatpush1.bf16.msra.mxu0 0
      %2371 = vmatprep.subr.bf16.mxu0 0
      %2372 = vmatpush1.bf16.msra.mxu0 0
      %2373 = vmatprep.subr.bf16.mxu0 0
      %2374 = vmatpush1.bf16.msra.mxu0 0
      %2375 = vmatprep.subr.bf16.mxu0 0
      %2376 = vmatpush1.bf16.msra.mxu0 0
      %2377 = vmatprep.subr.bf16.mxu0 0
      %2378 = vmatpush1.bf16.msra.mxu0 0
      %2379 = vmatprep.subr.bf16.mxu0 0
      %2380 = vmatpush1.bf16.msra.mxu0 0
      %2381 = vmatprep.subr.bf16.mxu0 0
      %2382 = vmatpush1.bf16.msra.mxu0 %v2342
      %2383 = vmatprep.subr.bf16.mxu0 0
      %2384 = vmatpush1.bf16.msra.mxu0 %v2341
      %2385 = vmatprep.subr.bf16.mxu0 0
      %2386 = vmatpush2.bf16.msra.mxu0 0
      %2387 = vmatprep.subr.bf16.mxu0 0
      %2388 = vmatpush2.bf16.msra.mxu0 0
      %2389 = vmatprep.subr.bf16.mxu0 0
      %2390 = vmatpush2.bf16.msra.mxu0 0
      %2391 = vmatprep.subr.bf16.mxu0 0
      %2392 = vmatpush2.bf16.msra.mxu0 0
      %2393 = vmatprep.subr.bf16.mxu0 0
      %2394 = vmatpush2.bf16.msra.mxu0 0
      %2395 = vmatprep.subr.bf16.mxu0 0
      %2396 = vmatpush2.bf16.msra.mxu0 0
      %2397 = vmatprep.subr.bf16.mxu0 0
      %2398 = vmatpush2.bf16.msra.mxu0 0
      %2399 = vmatprep.subr.bf16.mxu0 0
      %2400 = vmatpush2.bf16.msra.mxu0 0
      %2401 = vmatprep.mubr.bf16.mxu0 0
      %2402 = vmatmul.mubr.bf16.gmra.mxu0 %v2346
      %v2403 = vpop.f32.mrf.mxu0
      %v2404 = vadd.f32 %v2331, %v2403
      %v2405 = vpop.f32.mrf.mxu0
      %v2406 = vpop.f32.mrf.mxu0
      %v2407 = vadd.f32 %v2331, %v2406
      %v2408 = vpop.f32.mrf.mxu0
      %2409 = vmatprep.mubr.bf16.mxu0 0
      %2410 = vmatmul.mubr.bf16.gmra.mxu0 %v2349
      %v2411 = vpop.f32.mrf.mxu0
      %v2412 = vadd.f32 %v2331, %v2411
      %v2413 = vpop.f32.mrf.mxu0
      %v2414 = vpop.f32.mrf.mxu0
      %v2415 = vadd.f32 %v2331, %v2414
      %v2416 = vpop.f32.mrf.mxu0
      %2417 = vmatprep.mubr.bf16.mxu0 0
      %2418 = vmatmul.mubr.bf16.gmra.mxu0 %v2352
      %v2419 = vpop.f32.mrf.mxu0
      %v2420 = vadd.f32 %v2331, %v2419
      %v2421 = vpop.f32.mrf.mxu0
      %v2422 = vpop.f32.mrf.mxu0
      %v2423 = vadd.f32 %v2331, %v2422
      %v2424 = vpop.f32.mrf.mxu0
      %2425 = vmatprep.mubr.bf16.mxu0 0
      %2426 = vmatmul.mubr.bf16.gmra.mxu0 %v2355
      %v2427 = vpop.f32.mrf.mxu0
      %v2428 = vadd.f32 %v2331, %v2427
      %v2429 = vpop.f32.mrf.mxu0
      %v2430 = vpop.f32.mrf.mxu0
      %v2431 = vadd.f32 %v2331, %v2430
      %v2432 = vpop.f32.mrf.mxu0
      %2433 = vmatprep.mubr.bf16.mxu0 0
      %2434 = vmatmul.mubr.bf16.gmra.mxu0 %v2358
      %v2435 = vpop.f32.mrf.mxu0
      %v2436 = vadd.f32 %v2331, %v2435
      %v2437 = vpop.f32.mrf.mxu0
      %v2438 = vpop.f32.mrf.mxu0
      %v2439 = vadd.f32 %v2331, %v2438
      %v2440 = vpop.f32.mrf.mxu0
      %2441 = vmatprep.mubr.bf16.mxu0 0
      %2442 = vmatmul.mubr.bf16.gmra.mxu0 %v2361
      %v2443 = vpop.f32.mrf.mxu0
      %v2444 = vadd.f32 %v2331, %v2443
      %v2445 = vpop.f32.mrf.mxu0
      %v2446 = vpop.f32.mrf.mxu0
      %v2447 = vadd.f32 %v2331, %v2446
      %v2448 = vpop.f32.mrf.mxu0
      %2449 = vmatprep.mubr.bf16.mxu0 0
      %2450 = vmatmul.mubr.bf16.gmra.mxu0 %v2364
      %v2451 = vpop.f32.mrf.mxu0
      %v2452 = vadd.f32 %v2331, %v2451
      %v2453 = vpop.f32.mrf.mxu0
      %v2454 = vpop.f32.mrf.mxu0
      %v2455 = vadd.f32 %v2331, %v2454
      %v2456 = vpop.f32.mrf.mxu0
      %2457 = vmatprep.mubr.bf16.mxu0 0
      %2458 = vmatmul.mubr.bf16.gmra.mxu0 %v2367
      %v2459 = vpop.f32.mrf.mxu0
      %v2460 = vadd.f32 %v2331, %v2459
      %v2461 = vpop.f32.mrf.mxu0
      %v2462 = vpop.f32.mrf.mxu0
      %v2463 = vadd.f32 %v2331, %v2462
      %v2464 = vpop.f32.mrf.mxu0
      %2465 = vdwg.mxu0
      %v2466 = vadd.f32 %v1914, %v2404
      %v2467 = vadd.f32 %v1915, %v2407
      %v2468 = vadd.f32 %v1946, %v2412
      %v2469 = vadd.f32 %v1947, %v2415
      %v2470 = vadd.f32 %v1978, %v2420
      %v2471 = vadd.f32 %v1979, %v2423
      %v2472 = vadd.f32 %v2010, %v2428
      %v2473 = vadd.f32 %v2011, %v2431
      %v2474 = vadd.f32 %v2042, %v2436
      %v2475 = vadd.f32 %v2043, %v2439
      %v2476 = vadd.f32 %v2074, %v2444
      %v2477 = vadd.f32 %v2075, %v2447
      %v2478 = vadd.f32 %v2106, %v2452
      %v2479 = vadd.f32 %v2107, %v2455
      %v2480 = vadd.f32 %v2138, %v2460
      %v2481 = vadd.f32 %v2139, %v2463
      %2482 = vxpose.xlu0.b32.start [1/16] %v2466, 128
      %2483 = vxpose.xlu0.b32.cont [2/16] %v2467, 128
      %2484 = vxpose.xlu0.b32.cont [3/16] 0.0, 128
      %2485 = vxpose.xlu0.b32.cont [4/16] 0.0, 128
      %2486 = vxpose.xlu0.b32.cont [5/16] 0.0, 128
      %2487 = vxpose.xlu0.b32.cont [6/16] 0.0, 128
      %2488 = vxpose.xlu0.b32.cont [7/16] 0.0, 128
      %2489 = vxpose.xlu0.b32.cont [8/16] 0.0, 128
      %2490 = vxpose.xlu0.b32.cont [9/16] 0.0, 128
      %2491 = vxpose.xlu0.b32.cont [10/16] 0.0, 128
      %2492 = vxpose.xlu0.b32.cont [11/16] 0.0, 128
      %2493 = vxpose.xlu0.b32.cont [12/16] 0.0, 128
      %2494 = vxpose.xlu0.b32.cont [13/16] 0.0, 128
      %2495 = vxpose.xlu0.b32.cont [14/16] 0.0, 128
      %2496 = vxpose.xlu0.b32.cont [15/16] 0.0, 128
      %2497 = vxpose.xlu0.b32.end [16/16] 0.0, 128
      %v2498 = vpop.trf.xlu0
      %v2499 = vpop.trf.xlu0
      %v2500 = vpop.trf.xlu0
      %v2501 = vpop.trf.xlu0
      %v2502 = vpop.trf.xlu0
      %v2503 = vpop.trf.xlu0
      %v2504 = vpop.trf.xlu0
      %v2505 = vpop.trf.xlu0
      %v2506 = vpop.trf.xlu0
      %v2507 = vpop.trf.xlu0
      %v2508 = vpop.trf.xlu0
      %v2509 = vpop.trf.xlu0
      %v2510 = vpop.trf.xlu0
      %v2511 = vpop.trf.xlu0
      %v2512 = vpop.trf.xlu0
      %v2513 = vpop.trf.xlu0
      %2514 = vxpose.xlu0.b32.start [1/16] %v2468, 128
      %2515 = vxpose.xlu0.b32.cont [2/16] %v2469, 128
      %2516 = vxpose.xlu0.b32.cont [3/16] 0.0, 128
      %2517 = vxpose.xlu0.b32.cont [4/16] 0.0, 128
      %2518 = vxpose.xlu0.b32.cont [5/16] 0.0, 128
      %2519 = vxpose.xlu0.b32.cont [6/16] 0.0, 128
      %2520 = vxpose.xlu0.b32.cont [7/16] 0.0, 128
      %2521 = vxpose.xlu0.b32.cont [8/16] 0.0, 128
      %2522 = vxpose.xlu0.b32.cont [9/16] 0.0, 128
      %2523 = vxpose.xlu0.b32.cont [10/16] 0.0, 128
      %2524 = vxpose.xlu0.b32.cont [11/16] 0.0, 128
      %2525 = vxpose.xlu0.b32.cont [12/16] 0.0, 128
      %2526 = vxpose.xlu0.b32.cont [13/16] 0.0, 128
      %2527 = vxpose.xlu0.b32.cont [14/16] 0.0, 128
      %2528 = vxpose.xlu0.b32.cont [15/16] 0.0, 128
      %2529 = vxpose.xlu0.b32.end [16/16] 0.0, 128
      %v2530 = vpop.trf.xlu0
      %v2531 = vpop.trf.xlu0
      %v2532 = vpop.trf.xlu0
      %v2533 = vpop.trf.xlu0
      %v2534 = vpop.trf.xlu0
      %v2535 = vpop.trf.xlu0
      %v2536 = vpop.trf.xlu0
      %v2537 = vpop.trf.xlu0
      %v2538 = vpop.trf.xlu0
      %v2539 = vpop.trf.xlu0
      %v2540 = vpop.trf.xlu0
      %v2541 = vpop.trf.xlu0
      %v2542 = vpop.trf.xlu0
      %v2543 = vpop.trf.xlu0
      %v2544 = vpop.trf.xlu0
      %v2545 = vpop.trf.xlu0
      %2546 = vxpose.xlu0.b32.start [1/16] %v2470, 128
      %2547 = vxpose.xlu0.b32.cont [2/16] %v2471, 128
      %2548 = vxpose.xlu0.b32.cont [3/16] 0.0, 128
      %2549 = vxpose.xlu0.b32.cont [4/16] 0.0, 128
      %2550 = vxpose.xlu0.b32.cont [5/16] 0.0, 128
      %2551 = vxpose.xlu0.b32.cont [6/16] 0.0, 128
      %2552 = vxpose.xlu0.b32.cont [7/16] 0.0, 128
      %2553 = vxpose.xlu0.b32.cont [8/16] 0.0, 128
      %2554 = vxpose.xlu0.b32.cont [9/16] 0.0, 128
      %2555 = vxpose.xlu0.b32.cont [10/16] 0.0, 128
      %2556 = vxpose.xlu0.b32.cont [11/16] 0.0, 128
      %2557 = vxpose.xlu0.b32.cont [12/16] 0.0, 128
      %2558 = vxpose.xlu0.b32.cont [13/16] 0.0, 128
      %2559 = vxpose.xlu0.b32.cont [14/16] 0.0, 128
      %2560 = vxpose.xlu0.b32.cont [15/16] 0.0, 128
      %2561 = vxpose.xlu0.b32.end [16/16] 0.0, 128
      %v2562 = vpop.trf.xlu0
      %v2563 = vpop.trf.xlu0
      %v2564 = vpop.trf.xlu0
      %v2565 = vpop.trf.xlu0
      %v2566 = vpop.trf.xlu0
      %v2567 = vpop.trf.xlu0
      %v2568 = vpop.trf.xlu0
      %v2569 = vpop.trf.xlu0
      %v2570 = vpop.trf.xlu0
      %v2571 = vpop.trf.xlu0
      %v2572 = vpop.trf.xlu0
      %v2573 = vpop.trf.xlu0
      %v2574 = vpop.trf.xlu0
      %v2575 = vpop.trf.xlu0
      %v2576 = vpop.trf.xlu0
      %v2577 = vpop.trf.xlu0
      %2578 = vxpose.xlu0.b32.start [1/16] %v2472, 128
      %2579 = vxpose.xlu0.b32.cont [2/16] %v2473, 128
      %2580 = vxpose.xlu0.b32.cont [3/16] 0.0, 128
      %2581 = vxpose.xlu0.b32.cont [4/16] 0.0, 128
      %2582 = vxpose.xlu0.b32.cont [5/16] 0.0, 128
      %2583 = vxpose.xlu0.b32.cont [6/16] 0.0, 128
      %2584 = vxpose.xlu0.b32.cont [7/16] 0.0, 128
      %2585 = vxpose.xlu0.b32.cont [8/16] 0.0, 128
      %2586 = vxpose.xlu0.b32.cont [9/16] 0.0, 128
      %2587 = vxpose.xlu0.b32.cont [10/16] 0.0, 128
      %2588 = vxpose.xlu0.b32.cont [11/16] 0.0, 128
      %2589 = vxpose.xlu0.b32.cont [12/16] 0.0, 128
      %2590 = vxpose.xlu0.b32.cont [13/16] 0.0, 128
      %2591 = vxpose.xlu0.b32.cont [14/16] 0.0, 128
      %2592 = vxpose.xlu0.b32.cont [15/16] 0.0, 128
      %2593 = vxpose.xlu0.b32.end [16/16] 0.0, 128
      %v2594 = vpop.trf.xlu0
      %v2595 = vpop.trf.xlu0
      %v2596 = vpop.trf.xlu0
      %v2597 = vpop.trf.xlu0
      %v2598 = vpop.trf.xlu0
      %v2599 = vpop.trf.xlu0
      %v2600 = vpop.trf.xlu0
      %v2601 = vpop.trf.xlu0
      %v2602 = vpop.trf.xlu0
      %v2603 = vpop.trf.xlu0
      %v2604 = vpop.trf.xlu0
      %v2605 = vpop.trf.xlu0
      %v2606 = vpop.trf.xlu0
      %v2607 = vpop.trf.xlu0
      %v2608 = vpop.trf.xlu0
      %v2609 = vpop.trf.xlu0
      %2610 = vxpose.xlu0.b32.start [1/16] %v2474, 128
      %2611 = vxpose.xlu0.b32.cont [2/16] %v2475, 128
      %2612 = vxpose.xlu0.b32.cont [3/16] 0.0, 128
      %2613 = vxpose.xlu0.b32.cont [4/16] 0.0, 128
      %2614 = vxpose.xlu0.b32.cont [5/16] 0.0, 128
      %2615 = vxpose.xlu0.b32.cont [6/16] 0.0, 128
      %2616 = vxpose.xlu0.b32.cont [7/16] 0.0, 128
      %2617 = vxpose.xlu0.b32.cont [8/16] 0.0, 128
      %2618 = vxpose.xlu0.b32.cont [9/16] 0.0, 128
      %2619 = vxpose.xlu0.b32.cont [10/16] 0.0, 128
      %2620 = vxpose.xlu0.b32.cont [11/16] 0.0, 128
      %2621 = vxpose.xlu0.b32.cont [12/16] 0.0, 128
      %2622 = vxpose.xlu0.b32.cont [13/16] 0.0, 128
      %2623 = vxpose.xlu0.b32.cont [14/16] 0.0, 128
      %2624 = vxpose.xlu0.b32.cont [15/16] 0.0, 128
      %2625 = vxpose.xlu0.b32.end [16/16] 0.0, 128
      %v2626 = vpop.trf.xlu0
      %v2627 = vpop.trf.xlu0
      %v2628 = vpop.trf.xlu0
      %v2629 = vpop.trf.xlu0
      %v2630 = vpop.trf.xlu0
      %v2631 = vpop.trf.xlu0
      %v2632 = vpop.trf.xlu0
      %v2633 = vpop.trf.xlu0
      %v2634 = vpop.trf.xlu0
      %v2635 = vpop.trf.xlu0
      %v2636 = vpop.trf.xlu0
      %v2637 = vpop.trf.xlu0
      %v2638 = vpop.trf.xlu0
      %v2639 = vpop.trf.xlu0
      %v2640 = vpop.trf.xlu0
      %v2641 = vpop.trf.xlu0
      %2642 = vxpose.xlu0.b32.start [1/16] %v2476, 128
      %2643 = vxpose.xlu0.b32.cont [2/16] %v2477, 128
      %2644 = vxpose.xlu0.b32.cont [3/16] 0.0, 128
      %2645 = vxpose.xlu0.b32.cont [4/16] 0.0, 128
      %2646 = vxpose.xlu0.b32.cont [5/16] 0.0, 128
      %2647 = vxpose.xlu0.b32.cont [6/16] 0.0, 128
      %2648 = vxpose.xlu0.b32.cont [7/16] 0.0, 128
      %2649 = vxpose.xlu0.b32.cont [8/16] 0.0, 128
      %2650 = vxpose.xlu0.b32.cont [9/16] 0.0, 128
      %2651 = vxpose.xlu0.b32.cont [10/16] 0.0, 128
      %2652 = vxpose.xlu0.b32.cont [11/16] 0.0, 128
      %2653 = vxpose.xlu0.b32.cont [12/16] 0.0, 128
      %2654 = vxpose.xlu0.b32.cont [13/16] 0.0, 128
      %2655 = vxpose.xlu0.b32.cont [14/16] 0.0, 128
      %2656 = vxpose.xlu0.b32.cont [15/16] 0.0, 128
      %2657 = vxpose.xlu0.b32.end [16/16] 0.0, 128
      %v2658 = vpop.trf.xlu0
      %v2659 = vpop.trf.xlu0
      %v2660 = vpop.trf.xlu0
      %v2661 = vpop.trf.xlu0
      %v2662 = vpop.trf.xlu0
      %v2663 = vpop.trf.xlu0
      %v2664 = vpop.trf.xlu0
      %v2665 = vpop.trf.xlu0
      %v2666 = vpop.trf.xlu0
      %v2667 = vpop.trf.xlu0
      %v2668 = vpop.trf.xlu0
      %v2669 = vpop.trf.xlu0
      %v2670 = vpop.trf.xlu0
      %v2671 = vpop.trf.xlu0
      %v2672 = vpop.trf.xlu0
      %v2673 = vpop.trf.xlu0
      %2674 = vxpose.xlu0.b32.start [1/16] %v2478, 128
      %2675 = vxpose.xlu0.b32.cont [2/16] %v2479, 128
      %2676 = vxpose.xlu0.b32.cont [3/16] 0.0, 128
      %2677 = vxpose.xlu0.b32.cont [4/16] 0.0, 128
      %2678 = vxpose.xlu0.b32.cont [5/16] 0.0, 128
      %2679 = vxpose.xlu0.b32.cont [6/16] 0.0, 128
      %2680 = vxpose.xlu0.b32.cont [7/16] 0.0, 128
      %2681 = vxpose.xlu0.b32.cont [8/16] 0.0, 128
      %2682 = vxpose.xlu0.b32.cont [9/16] 0.0, 128
      %2683 = vxpose.xlu0.b32.cont [10/16] 0.0, 128
      %2684 = vxpose.xlu0.b32.cont [11/16] 0.0, 128
      %2685 = vxpose.xlu0.b32.cont [12/16] 0.0, 128
      %2686 = vxpose.xlu0.b32.cont [13/16] 0.0, 128
      %2687 = vxpose.xlu0.b32.cont [14/16] 0.0, 128
      %2688 = vxpose.xlu0.b32.cont [15/16] 0.0, 128
      %2689 = vxpose.xlu0.b32.end [16/16] 0.0, 128
      %v2690 = vpop.trf.xlu0
      %v2691 = vpop.trf.xlu0
      %v2692 = vpop.trf.xlu0
      %v2693 = vpop.trf.xlu0
      %v2694 = vpop.trf.xlu0
      %v2695 = vpop.trf.xlu0
      %v2696 = vpop.trf.xlu0
      %v2697 = vpop.trf.xlu0
      %v2698 = vpop.trf.xlu0
      %v2699 = vpop.trf.xlu0
      %v2700 = vpop.trf.xlu0
      %v2701 = vpop.trf.xlu0
      %v2702 = vpop.trf.xlu0
      %v2703 = vpop.trf.xlu0
      %v2704 = vpop.trf.xlu0
      %v2705 = vpop.trf.xlu0
      %2706 = vxpose.xlu0.b32.start [1/16] %v2480, 128
      %2707 = vxpose.xlu0.b32.cont [2/16] %v2481, 128
      %2708 = vxpose.xlu0.b32.cont [3/16] 0.0, 128
      %2709 = vxpose.xlu0.b32.cont [4/16] 0.0, 128
      %2710 = vxpose.xlu0.b32.cont [5/16] 0.0, 128
      %2711 = vxpose.xlu0.b32.cont [6/16] 0.0, 128
      %2712 = vxpose.xlu0.b32.cont [7/16] 0.0, 128
      %2713 = vxpose.xlu0.b32.cont [8/16] 0.0, 128
      %2714 = vxpose.xlu0.b32.cont [9/16] 0.0, 128
      %2715 = vxpose.xlu0.b32.cont [10/16] 0.0, 128
      %2716 = vxpose.xlu0.b32.cont [11/16] 0.0, 128
      %2717 = vxpose.xlu0.b32.cont [12/16] 0.0, 128
      %2718 = vxpose.xlu0.b32.cont [13/16] 0.0, 128
      %2719 = vxpose.xlu0.b32.cont [14/16] 0.0, 128
      %2720 = vxpose.xlu0.b32.cont [15/16] 0.0, 128
      %2721 = vxpose.xlu0.b32.end [16/16] 0.0, 128
      %v2722 = vpop.trf.xlu0
      %v2723 = vpop.trf.xlu0
      %v2724 = vpop.trf.xlu0
      %v2725 = vpop.trf.xlu0
      %v2726 = vpop.trf.xlu0
      %v2727 = vpop.trf.xlu0
      %v2728 = vpop.trf.xlu0
      %v2729 = vpop.trf.xlu0
      %v2730 = vpop.trf.xlu0
      %v2731 = vpop.trf.xlu0
      %v2732 = vpop.trf.xlu0
      %v2733 = vpop.trf.xlu0
      %v2734 = vpop.trf.xlu0
      %v2735 = vpop.trf.xlu0
      %v2736 = vpop.trf.xlu0
      %v2737 = vpop.trf.xlu0
      %v2738 = vpack.c.bf16 %v2530, %v2498
      %v2739 = vpack.c.bf16 %v2594, %v2562
      %v2740 = vpack.c.bf16 %v2658, %v2626
      %v2741 = vpack.c.bf16 %v2722, %v2690
      %v2742 = vld [vmem:[%s12] sm:$0xf]
      %v2743 = vld [vmem:[%s12 + $0x4] sm:$0xf]
      %v2744 = vld [vmem:[%s13] sm:$0x1]
      %v2746 = vlaneseq
      %v2747 = vshrl.u32 %v2746, 7
      %v2748 = vsub.s32 0, %v2747
      %v2749 = vrot.slane %v2744, %v2748
      %v2753 = vunpack.c.l.b16 %v2742
      %v2754 = vunpack.c.l.b16 %v2743
      %v2755 = vpack.c.b16 %v2754, %v2753
      %v2758 = vsel %vm480, %v2738, 0
      %v2761 = vsel %vm480, %v2739, 0
      %v2764 = vsel %vm480, %v2740, 0
      %v2767 = vsel %vm480, %v2741, 0
      %2769 = vmatprep.subr.bf16.mxu0 0
      %2770 = vmatpush1.bf16.msra.mxu0 0
      %2771 = vmatprep.subr.bf16.mxu0 0
      %2772 = vmatpush1.bf16.msra.mxu0 0
      %2773 = vmatprep.subr.bf16.mxu0 0
      %2774 = vmatpush1.bf16.msra.mxu0 0
      %2775 = vmatprep.subr.bf16.mxu0 0
      %2776 = vmatpush1.bf16.msra.mxu0 0
      %2777 = vmatprep.subr.bf16.mxu0 0
      %2778 = vmatpush1.bf16.msra.mxu0 0
      %2779 = vmatprep.subr.bf16.mxu0 0
      %2780 = vmatpush1.bf16.msra.mxu0 0
      %2781 = vmatprep.subr.bf16.mxu0 0
      %2782 = vmatpush1.bf16.msra.mxu0 0
      %2783 = vmatprep.subr.bf16.mxu0 0
      %2784 = vmatpush1.bf16.msra.mxu0 %v2755
      %2785 = vmatprep.subr.bf16.mxu0 0
      %2786 = vmatpush2.bf16.msra.mxu0 0
      %2787 = vmatprep.subr.bf16.mxu0 0
      %2788 = vmatpush2.bf16.msra.mxu0 0
      %2789 = vmatprep.subr.bf16.mxu0 0
      %2790 = vmatpush2.bf16.msra.mxu0 0
      %2791 = vmatprep.subr.bf16.mxu0 0
      %2792 = vmatpush2.bf16.msra.mxu0 0
      %2793 = vmatprep.subr.bf16.mxu0 0
      %2794 = vmatpush2.bf16.msra.mxu0 0
      %2795 = vmatprep.subr.bf16.mxu0 0
      %2796 = vmatpush2.bf16.msra.mxu0 0
      %2797 = vmatprep.subr.bf16.mxu0 0
      %2798 = vmatpush2.bf16.msra.mxu0 0
      %2799 = vmatprep.subr.bf16.mxu0 0
      %2800 = vmatpush2.bf16.msra.mxu0 0
      %2801 = vmatprep.mubr.bf16.mxu0 0
      %2802 = vmatmul.mubr.bf16.gmra.mxu0 %v2758
      %v2803 = vpop.f32.mrf.mxu0
      %v2804 = vadd.f32 %v2749, %v2803
      %v2805 = vpop.f32.mrf.mxu0
      %v2806 = vpop.f32.mrf.mxu0
      %v2807 = vadd.f32 %v2749, %v2806
      %v2808 = vpop.f32.mrf.mxu0
      %2809 = vmatprep.mubr.bf16.mxu0 0
      %2810 = vmatmul.mubr.bf16.gmra.mxu0 %v2761
      %v2811 = vpop.f32.mrf.mxu0
      %v2812 = vadd.f32 %v2749, %v2811
      %v2813 = vpop.f32.mrf.mxu0
      %v2814 = vpop.f32.mrf.mxu0
      %v2815 = vadd.f32 %v2749, %v2814
      %v2816 = vpop.f32.mrf.mxu0
      %2817 = vmatprep.mubr.bf16.mxu0 0
      %2818 = vmatmul.mubr.bf16.gmra.mxu0 %v2764
      %v2819 = vpop.f32.mrf.mxu0
      %v2820 = vadd.f32 %v2749, %v2819
      %v2821 = vpop.f32.mrf.mxu0
      %v2822 = vpop.f32.mrf.mxu0
      %v2823 = vadd.f32 %v2749, %v2822
      %v2824 = vpop.f32.mrf.mxu0
      %2825 = vmatprep.mubr.bf16.mxu0 0
      %2826 = vmatmul.mubr.bf16.gmra.mxu0 %v2767
      %v2827 = vpop.f32.mrf.mxu0
      %v2828 = vadd.f32 %v2749, %v2827
      %v2829 = vpop.f32.mrf.mxu0
      %v2830 = vpop.f32.mrf.mxu0
      %v2831 = vadd.f32 %v2749, %v2830
      %v2832 = vpop.f32.mrf.mxu0
      %2833 = vdwg.mxu0
      %v2834 = vmul.f32 %v588, %v578
      %v2835 = vmul.f32 %v588, %v579
      %v2836 = vmul.f32 %v588, %v580
      %v2837 = vmul.f32 %v588, %v581
      %v2838 = vmul.f32 %v588, %v582
      %v2839 = vmul.f32 %v588, %v583
      %v2840 = vmul.f32 %v588, %v584
      %v2841 = vmul.f32 %v588, %v585
      %v2842 = vmul.f32 %v587, %v2834
      %v2843 = vmul.f32 %v587, %v2835
      %v2844 = vmul.f32 %v587, %v2836
      %v2845 = vmul.f32 %v587, %v2837
      %v2846 = vmul.f32 %v587, %v2838
      %v2847 = vmul.f32 %v587, %v2839
      %v2848 = vmul.f32 %v587, %v2840
      %v2849 = vmul.f32 %v587, %v2841
      %v2850 = vsub.f32 %v506, %v2842
      %v2851 = vsub.f32 %v507, %v2843
      %v2852 = vsub.f32 %v508, %v2844
      %v2853 = vsub.f32 %v509, %v2845
      %v2854 = vsub.f32 %v510, %v2846
      %v2855 = vsub.f32 %v511, %v2847
      %v2856 = vsub.f32 %v512, %v2848
      %v2857 = vsub.f32 %v513, %v2849
      %2859 = vset.pattern.permute.xlu0 0
      %2860 = vperm.xlu0 %2859, %v2834
      %v2861 = vpop.permute.xlu0 %2860
      %2864 = vset.pattern.permute.xlu0 0
      %2865 = vperm.xlu0 %2864, %v2835
      %v2866 = vpop.permute.xlu0 %2865
      %2869 = vset.pattern.permute.xlu0 0
      %2870 = vperm.xlu0 %2869, %v2836
      %v2871 = vpop.permute.xlu0 %2870
      %2874 = vset.pattern.permute.xlu0 0
      %2875 = vperm.xlu0 %2874, %v2837
      %v2876 = vpop.permute.xlu0 %2875
      %2879 = vset.pattern.permute.xlu0 0
      %2880 = vperm.xlu0 %2879, %v2838
      %v2881 = vpop.permute.xlu0 %2880
      %2884 = vset.pattern.permute.xlu0 0
      %2885 = vperm.xlu0 %2884, %v2839
      %v2886 = vpop.permute.xlu0 %2885
      %2889 = vset.pattern.permute.xlu0 0
      %2890 = vperm.xlu0 %2889, %v2840
      %v2891 = vpop.permute.xlu0 %2890
      %2894 = vset.pattern.permute.xlu0 0
      %2895 = vperm.xlu0 %2894, %v2841
      %v2896 = vpop.permute.xlu0 %2895
      %v2898 = vmul.f32 %v2804, %v2861
      %v2899 = vmul.f32 %v2807, %v2866
      %v2900 = vmul.f32 %v2812, %v2871
      %v2901 = vmul.f32 %v2815, %v2876
      %v2902 = vmul.f32 %v2820, %v2881
      %v2903 = vmul.f32 %v2823, %v2886
      %v2904 = vmul.f32 %v2828, %v2891
      %v2905 = vmul.f32 %v2831, %v2896
      %2907 = vset.pattern.permute.xlu0 0
      %2908 = vperm.xlu0 %2907, %v2850
      %v2909 = vpop.permute.xlu0 %2908
      %2912 = vset.pattern.permute.xlu0 0
      %2913 = vperm.xlu0 %2912, %v2851
      %v2914 = vpop.permute.xlu0 %2913
      %2917 = vset.pattern.permute.xlu0 0
      %2918 = vperm.xlu0 %2917, %v2852
      %v2919 = vpop.permute.xlu0 %2918
      %2922 = vset.pattern.permute.xlu0 0
      %2923 = vperm.xlu0 %2922, %v2853
      %v2924 = vpop.permute.xlu0 %2923
      %2927 = vset.pattern.permute.xlu0 0
      %2928 = vperm.xlu0 %2927, %v2854
      %v2929 = vpop.permute.xlu0 %2928
      %2932 = vset.pattern.permute.xlu0 0
      %2933 = vperm.xlu0 %2932, %v2855
      %v2934 = vpop.permute.xlu0 %2933
      %2937 = vset.pattern.permute.xlu0 0
      %2938 = vperm.xlu0 %2937, %v2856
      %v2939 = vpop.permute.xlu0 %2938
      %2942 = vset.pattern.permute.xlu0 0
      %2943 = vperm.xlu0 %2942, %v2857
      %v2944 = vpop.permute.xlu0 %2943
      %v2946 = vadd.f32 %v2898, %v2909
      %v2947 = vadd.f32 %v2899, %v2914
      %v2948 = vadd.f32 %v2900, %v2919
      %v2949 = vadd.f32 %v2901, %v2924
      %v2950 = vadd.f32 %v2902, %v2929
      %v2951 = vadd.f32 %v2903, %v2934
      %v2952 = vadd.f32 %v2904, %v2939
      %v2953 = vadd.f32 %v2905, %v2944
      %vm2954 = vcmask 97280
      %2955 = vst.msk [vmem:[%s469] sm:$0xff] %vm2954, %v2946
      %2956 = vst.msk [vmem:[%s469 + $0x8] sm:$0xff] %vm2954, %v2947
      %2957 = vst.msk [vmem:[%s469 + $0x10] sm:$0xff] %vm2954, %v2948
      %2958 = vst.msk [vmem:[%s469 + $0x18] sm:$0xff] %vm2954, %v2949
      %2959 = vst.msk [vmem:[%s469 + $0x20] sm:$0xff] %vm2954, %v2950
      %2960 = vst.msk [vmem:[%s469 + $0x28] sm:$0xff] %vm2954, %v2951
      %2961 = vst.msk [vmem:[%s469 + $0x30] sm:$0xff] %vm2954, %v2952
      %2962 = vst.msk [vmem:[%s469 + $0x38] sm:$0xff] %vm2954, %v2953
      %s2963 = smul.u32 8, %s25
      %p2964 = scmp.lt.s32.totalorder %s2963, 15
      %s2965 = scalar_select %p2964, %s2963, 15
      %s2966 = smul.addr %s2965, 8
      %s2967 = scalar_lea.vmem %s14, %s2966
      // Predicated region
      $region77: #{tsmixer_forward.1} parent=75 // pred_check
        %p2968 = pneg %p342
      $region78: #{tsmixer_forward.1} parent=75 // pred_check_branch
        %2970 = sbr.rel (%p2968) target = $region80
      $region79: #{tsmixer_forward.1} parent=75 // pred_region
        %s2971 = smul.u32 8, %s25
      $region80: #{tsmixer_forward.1} parent=75 // pred_fallthru
        _
    $region76: #{tsmixer_forward.1} parent=5 // pred_fallthru
      _
    %p2972 = scmp.le.s32.totalorder 2, %s20
    // Predicated region
    $region81: #{tsmixer_forward.1} parent=5 // pred_check
      %p2973 = pneg %p2972
    $region82: #{tsmixer_forward.1} parent=5 // pred_check_branch
      %2975 = sbr.rel (%p2973) target = $region84
    $region83: #{tsmixer_forward.1} parent=5 // pred_region
      %s2976 = ssub.s32 %s20, 2
      // Predicated region
      $region85: #{tsmixer_forward.1} parent=83 // pred_check
        %p2977 = pneg %p348
      $region86: #{tsmixer_forward.1} parent=83 // pred_check_branch
        %2979 = sbr.rel (%p2977) target = $region88
      $region87: #{tsmixer_forward.1} parent=83 // pred_region
        %s2980 = smul.u32 8, %s26
        %p2981 = scmp.lt.s32.totalorder %s2980, 15
        %s2982 = scalar_select %p2981, %s2980, 15
        %s2983 = smul.addr %s2982, 8
        %s2984 = scalar_lea.vmem %s14, %s2983
      $region88: #{tsmixer_forward.1} parent=83 // pred_fallthru
        _
    $region84: #{tsmixer_forward.1} parent=5 // pred_fallthru
      _
  $region6: #{tsmixer_forward.1} parent=0 // loop_footer
    %s24 = sadd.s32 1, %s20
  $region7: #{tsmixer_forward.1} parent=0 // loop_footer_branch
    %19 = sbr.rel target = $region3
  $region8: #{tsmixer_forward.1} parent=0 // loop_exit
    _

</llo_original>
